<compile_context>
chip_gen: v6e
topology: v6e:2x2x1
jax: 0.10.0
libtpu: 0.0.40
codegen_flags: <defaults>
</compile_context>

<pallas_src>
import numpy as np
import jax
import jax.numpy as jnp
from jax.experimental import pallas as pl
from jax.experimental.pallas import tpu as pltpu

# ----------------------------- model sizes (small) ---------------------------
B = 2            # batch
N_TASK = 4       # num_tasks
WIN_LEN = 8      # win_len (reconstruction window)
LATENT = 16      # latent_dim
D_MODEL = 64     # d_model (module default)
N_HEADS = 8      # n_heads (module default)
HEAD_DIM = D_MODEL // N_HEADS
D_FF = 64        # d_ff (module default)
C_OUT = 1        # c_out (module default)
LN_EPS = 1e-5
ATTN_SCALE = 1.0 / float(np.sqrt(HEAD_DIM))
NEG_INF = -1e30


def _normalize(x):
    mu = jnp.mean(x, axis=-1, keepdims=True)
    var = jnp.mean(jnp.square(x - mu), axis=-1, keepdims=True)
    return (x - mu) * jax.lax.rsqrt(var + LN_EPS)


def _layer_norm(x, g, b):
    return _normalize(x) * g + b


def _gelu(x):
    # TODO(synk): PyTorch F.gelu is erf-exact; the tanh approximation is used for
    # guaranteed Mosaic lowering (difference is negligible at these magnitudes).
    return 0.5 * x * (1.0 + jnp.tanh(0.7978845608028654 * (x + 0.044715 * x * x * x)))


# ================================ Pallas kernel ===============================

def decoder_rec_kernel(z_ref, w_in_ref, w2t_ref, inb_ref,
                       wqt_ref, bq_ref, wkt_ref, bk_ref, wvt_ref, bv_ref,
                       wot_ref, bo_ref, wc1t_ref, bc1_ref, wc2t_ref, bc2_ref,
                       ln1g_ref, ln1b_ref, ln2g_ref, ln2b_ref,
                       wout_ref, bout_ref, out_ref):
    """Whole Decoder_Rec.forward for one task in a single grid step (all VMEM)."""
    f32 = jnp.float32

    # ---- fc_in (Linear(1, win_len)) + permutes + fc_in2 (Linear(latent, d_model))
    # folded:  h[b,w,d] = w_in[w] * (z @ W2^T)[b,d] + inb[w,d]
    # where inb[w,d] = b_in[w]*sum_l W2[d,l] + b2[d]  is precomputed in the glue.
    z = z_ref[...].reshape(B, LATENT)                          # (B, L)
    t = jnp.dot(z, w2t_ref[...], preferred_element_type=f32)   # (B, D)
    h0 = (w_in_ref[...][None, :, :] * t[:, None, :]
          + inb_ref[...][None, :, :])                          # (B, W, D)
    x = jnp.maximum(h0, 0.0)                                   # self.activation = relu

    # ---- DecoderRecLayer: causal multi-head self-attention -----------------
    # TODO(synk): AttentionLayer_Rec / DecoderRecLayer / DecoderR / FullAttention
    # are external classes not in the spec; Informer conventions are used, and the
    # mix=True head/position interleave is replaced by standard head concat.
    xf = x.reshape(B * WIN_LEN, D_MODEL)                       # (BW, D)
    # ATTN_SCALE is pre-folded into Wq / bq in the glue (no per-score multiply).
    q = jnp.dot(xf, wqt_ref[...], preferred_element_type=f32) + bq_ref[...]
    k = jnp.dot(xf, wkt_ref[...], preferred_element_type=f32) + bk_ref[...]
    v = jnp.dot(xf, wvt_ref[...], preferred_element_type=f32) + bv_ref[...]

    row = jax.lax.broadcasted_iota(jnp.int32, (WIN_LEN, WIN_LEN), 0)
    col = jax.lax.broadcasted_iota(jnp.int32, (WIN_LEN, WIN_LEN), 1)
    causal = (col <= row)[None, :, :]                          # TriangularCausalMask

    wot = wot_ref[...]                                         # (D, D) == Wo^T
    attn = jnp.zeros((B * WIN_LEN, D_MODEL), f32)
    for h in range(N_HEADS):                                   # unrolled in-kernel, no grid steps
        sl = slice(h * HEAD_DIM, (h + 1) * HEAD_DIM)
        qh = q[:, sl].reshape(B, WIN_LEN, HEAD_DIM)
        kh = k[:, sl].reshape(B, WIN_LEN, HEAD_DIM)
        vh = v[:, sl].reshape(B, WIN_LEN, HEAD_DIM)
        sc = jnp.einsum("bqe,bke->bqk", qh, kh, preferred_element_type=f32)
        sc = jnp.where(causal, sc, NEG_INF)
        m = jnp.max(sc, axis=-1, keepdims=True)
        p = jnp.exp(sc - m)
        a = p * pl.reciprocal(jnp.sum(p, axis=-1, keepdims=True), approx=True)
        oh = jnp.einsum("bqk,bke->bqe", a, vh, preferred_element_type=f32)
        # out_projection folded per head: concat_h(oh) @ Wo^T == sum_h oh @ Wo^T[hE:(h+1)E]
        attn = attn + jnp.dot(oh.reshape(B * WIN_LEN, HEAD_DIM), wot[sl, :],
                              preferred_element_type=f32)
    attn = attn + bo_ref[...]

    x1 = _layer_norm(xf + attn, ln1g_ref[...], ln1b_ref[...])  # norm1 (residual)

    # ---- conv-FFN (Conv1d kernel_size=1 == per-position Linear), gelu -------
    y = _gelu(jnp.dot(x1, wc1t_ref[...], preferred_element_type=f32) + bc1_ref[...])
    y = jnp.dot(y, wc2t_ref[...], preferred_element_type=f32) + bc2_ref[...]
    x2 = _layer_norm(x1 + y, ln2g_ref[...], ln2b_ref[...])     # norm2 (residual)

    # ---- DecoderR final LayerNorm + fc_out (Linear(d_model, c_out=1)) -------
    # The final LN's affine is folded into (wout_eff, bout_eff); only normalize here.
    x3 = _normalize(x2).reshape(B, WIN_LEN, D_MODEL)
    recon = jnp.sum(x3 * wout_ref[...][None, :, :], axis=-1) + bout_ref[...]
    out_ref[...] = recon                                       # (B, W) lane-dense slab


# ============================== pallas_call glue ==============================

def _full_spec(a):
    nd = a.ndim
    return pl.BlockSpec(a.shape, lambda i, _nd=nd: (0,) * _nd)


def run_fused(z, *packed):
    args = (z, *packed)
    return pl.pallas_call(
        decoder_rec_kernel,
        grid=(1,),
        in_specs=[_full_spec(a) for a in args],
        out_specs=pl.BlockSpec((B, WIN_LEN), lambda i: (0, 0)),
        out_shape=jax.ShapeDtypeStruct((B, WIN_LEN), jnp.float32),
        compiler_params=pltpu.CompilerParams(dimension_semantics=("arbitrary",)),
    )(*args)


def pack_task_params(p, t):
    """One-time (outside jit) packing of task-t weights into the layouts the fused
    kernel consumes (`x @ W` orientation, 2-D lane-friendly biases) with the
    algebraic folds described in the header."""
    f = jnp.float32
    # fc_in / fc_in2 fold: bias slab (W, D)
    w2 = p["fc_in2_w"][t]                                        # (D, L)
    in_bias = (p["fc_in_b"][t][:, None] * jnp.sum(w2, axis=1)[None, :]
               + p["fc_in2_b"][t][None, :]).astype(f)            # (W, D)
    # attention scale folded into the query projection
    wq_s = (p["wq"][t] * ATTN_SCALE).T.astype(f)
    bq_s = (p["bq"][t] * ATTN_SCALE).reshape(1, D_MODEL).astype(f)
    # final-LayerNorm affine folded into fc_out
    lnf_g, lnf_b = p["lnf_g"][t], p["lnf_b"][t]
    wout = p["fc_out_w"][t]                                      # (C_OUT, D)
    bout = p["fc_out_b"][t]                                      # (C_OUT,)
    wout_eff = (wout * lnf_g[None, :]).astype(f)                 # (C_OUT, D)
    bout_eff = (bout + wout @ lnf_b).reshape(1, 1).astype(f)     # (1, 1)
    return (
        p["fc_in_w"][t].reshape(WIN_LEN, 1).astype(f),           # (W, 1)
        w2.T.astype(f),                                          # (L, D) == W2^T
        in_bias,                                                 # (W, D)
        wq_s, bq_s,
        p["wk"][t].T.astype(f), p["bk"][t].reshape(1, D_MODEL).astype(f),
        p["wv"][t].T.astype(f), p["bv"][t].reshape(1, D_MODEL).astype(f),
        p["wo"][t].T.astype(f), p["bo"][t].reshape(1, D_MODEL).astype(f),
        p["conv1_w"][t].T.astype(f), p["conv1_b"][t].reshape(1, D_FF).astype(f),
        p["conv2_w"][t].T.astype(f), p["conv2_b"][t].reshape(1, D_MODEL).astype(f),
        p["ln1_g"][t].reshape(1, D_MODEL).astype(f), p["ln1_b"][t].reshape(1, D_MODEL).astype(f),
        p["ln2_g"][t].reshape(1, D_MODEL).astype(f), p["ln2_b"][t].reshape(1, D_MODEL).astype(f),
        wout_eff, bout_eff,
    )


# ============================ pure-JAX reference ==============================
# Uses the RAW per-task parameters (no folds), so it validates both the kernel
# and the packing glue.

def decoder_rec_reference(p, t, z):
    zp = jnp.transpose(z, (0, 2, 1))                                   # (B, L, 1)
    z1 = zp @ p["fc_in_w"][t].T + p["fc_in_b"][t]                      # fc_in -> (B, L, W)
    z1 = jnp.transpose(z1, (0, 2, 1))                                  # (B, W, L)
    x = jnp.maximum(z1 @ p["fc_in2_w"][t].T + p["fc_in2_b"][t], 0.0)   # fc_in2 + relu
    q = (x @ p["wq"][t].T + p["bq"][t]).reshape(B, WIN_LEN, N_HEADS, HEAD_DIM)
    k = (x @ p["wk"][t].T + p["bk"][t]).reshape(B, WIN_LEN, N_HEADS, HEAD_DIM)
    v = (x @ p["wv"][t].T + p["bv"][t]).reshape(B, WIN_LEN, N_HEADS, HEAD_DIM)
    sc = jnp.einsum("blhe,bshe->bhls", q, k) * ATTN_SCALE
    mask = jnp.tril(jnp.ones((WIN_LEN, WIN_LEN), bool))
    sc = jnp.where(mask[None, None], sc, -jnp.inf)
    a = jax.nn.softmax(sc, axis=-1)
    o = jnp.einsum("bhls,bshe->blhe", a, v).reshape(B, WIN_LEN, D_MODEL)
    attn = o @ p["wo"][t].T + p["bo"][t]
    x1 = _layer_norm(x + attn, p["ln1_g"][t], p["ln1_b"][t])
    y = _gelu(x1 @ p["conv1_w"][t].T + p["conv1_b"][t])
    y = y @ p["conv2_w"][t].T + p["conv2_b"][t]
    x2 = _layer_norm(x1 + y, p["ln2_g"][t], p["ln2_b"][t])
    x3 = _layer_norm(x2, p["lnf_g"][t], p["lnf_b"][t])
    recon = x3 @ p["fc_out_w"][t].T + p["fc_out_b"][t]
    return recon[..., 0]                                               # (B, W)


# ============================ deterministic params ============================

def _linear(key, out_f, in_f):
    kw, kb = jax.random.split(key)
    bound = 1.0 / float(np.sqrt(in_f))
    w = jax.random.uniform(kw, (N_TASK, out_f, in_f), minval=-bound, maxval=bound,
                           dtype=jnp.float32)
    b = jax.random.uniform(kb, (N_TASK, out_f), minval=-bound, maxval=bound,
                           dtype=jnp.float32)
    return w, b


def _ln_params(key):
    # PyTorch inits LayerNorm to gamma=1, beta=0; small deterministic perturbations
    # are used here so the LN-affine folds are actually exercised by the check.
    kg, kb = jax.random.split(key)
    g = 1.0 + 0.05 * jax.random.normal(kg, (N_TASK, D_MODEL), dtype=jnp.float32)
    b = 0.05 * jax.random.normal(kb, (N_TASK, D_MODEL), dtype=jnp.float32)
    return g, b


def init_params(key):
    ks = jax.random.split(key, 12)
    p = {}
    p["fc_in_w"], p["fc_in_b"] = _linear(ks[0], WIN_LEN, 1)      # Linear(1, win_len)
    p["fc_in2_w"], p["fc_in2_b"] = _linear(ks[1], D_MODEL, LATENT)
    p["wq"], p["bq"] = _linear(ks[2], D_MODEL, D_MODEL)          # AttentionLayer_Rec projs
    p["wk"], p["bk"] = _linear(ks[3], D_MODEL, D_MODEL)
    p["wv"], p["bv"] = _linear(ks[4], D_MODEL, D_MODEL)
    p["wo"], p["bo"] = _linear(ks[5], D_MODEL, D_MODEL)
    p["conv1_w"], p["conv1_b"] = _linear(ks[6], D_FF, D_MODEL)   # Conv1d(k=1) == Linear
    p["conv2_w"], p["conv2_b"] = _linear(ks[7], D_MODEL, D_FF)
    p["ln1_g"], p["ln1_b"] = _ln_params(ks[8])
    p["ln2_g"], p["ln2_b"] = _ln_params(ks[9])
    p["lnf_g"], p["lnf_b"] = _ln_params(ks[10])                  # DecoderR norm_layer
    p["fc_out_w"], p["fc_out_b"] = _linear(ks[11], C_OUT, D_MODEL)
    return p


# ================================== main ======================================

if __name__ == "__main__":
    root = jax.random.PRNGKey(0)
    k_param, k_z = jax.random.split(root)
    params = init_params(k_param)
    # z: (B, 1, latent_dim) — z.permute(0,2,1) in forward() requires middle dim == 1.
    z = jax.random.normal(k_z, (B, 1, LATENT), dtype=jnp.float32)
    num_of_task = 1                                       # static task selection

    packed = pack_task_params(params, num_of_task)        # one-time, outside jit
    recon2d = jax.block_until_ready(jax.jit(run_fused)(z, *packed))   # (B, W)
    recon_out = recon2d[..., None]                        # (B, win_len, c_out=1)

    ref2d = decoder_rec_reference(params, num_of_task, z)
    max_err = float(jnp.max(jnp.abs(recon2d - ref2d)))

    assert recon_out.shape == (B, WIN_LEN, C_OUT)
    assert bool(jnp.all(jnp.isfinite(recon_out)))
    assert max_err < 2e-2, f"mismatch vs reference: {max_err}"
    print("KERNEL_OK")
</pallas_src>

<mosaic_0001>
module attributes {stable_mosaic.version = 11 : i64} {
  func.func @decoder_rec_kernel(%arg0: i32, %arg1: memref<2x1x16xf32, #tpu.memory_space<vmem>>, %arg2: memref<8x1xf32, #tpu.memory_space<vmem>>, %arg3: memref<16x64xf32, #tpu.memory_space<vmem>>, %arg4: memref<8x64xf32, #tpu.memory_space<vmem>>, %arg5: memref<64x64xf32, #tpu.memory_space<vmem>>, %arg6: memref<1x64xf32, #tpu.memory_space<vmem>>, %arg7: memref<64x64xf32, #tpu.memory_space<vmem>>, %arg8: memref<1x64xf32, #tpu.memory_space<vmem>>, %arg9: memref<64x64xf32, #tpu.memory_space<vmem>>, %arg10: memref<1x64xf32, #tpu.memory_space<vmem>>, %arg11: memref<64x64xf32, #tpu.memory_space<vmem>>, %arg12: memref<1x64xf32, #tpu.memory_space<vmem>>, %arg13: memref<64x64xf32, #tpu.memory_space<vmem>>, %arg14: memref<1x64xf32, #tpu.memory_space<vmem>>, %arg15: memref<64x64xf32, #tpu.memory_space<vmem>>, %arg16: memref<1x64xf32, #tpu.memory_space<vmem>>, %arg17: memref<1x64xf32, #tpu.memory_space<vmem>>, %arg18: memref<1x64xf32, #tpu.memory_space<vmem>>, %arg19: memref<1x64xf32, #tpu.memory_space<vmem>>, %arg20: memref<1x64xf32, #tpu.memory_space<vmem>>, %arg21: memref<1x64xf32, #tpu.memory_space<vmem>>, %arg22: memref<1x1xf32, #tpu.memory_space<vmem>>, %arg23: memref<2x8xf32, #tpu.memory_space<vmem>>) attributes {dimension_semantics = [#tpu.dimension_semantics<arbitrary>], iteration_bounds = array<i64: 1>, scalar_prefetch = 0 : i64, scratch_operands = 0 : i64, tpu.core_type = #tpu.core_type<tc>, window_params = [{pipeline_mode = #tpu.pipeline_mode<synchronous>, transform_indices = @transform_0, window_bounds = array<i64: 2, 1, 16>}, {pipeline_mode = #tpu.pipeline_mode<synchronous>, transform_indices = @transform_1, window_bounds = array<i64: 8, 1>}, {pipeline_mode = #tpu.pipeline_mode<synchronous>, transform_indices = @transform_2, window_bounds = array<i64: 16, 64>}, {pipeline_mode = #tpu.pipeline_mode<synchronous>, transform_indices = @transform_3, window_bounds = array<i64: 8, 64>}, {pipeline_mode = #tpu.pipeline_mode<synchronous>, transform_indices = @transform_4, window_bounds = array<i64: 64, 64>}, {pipeline_mode = #tpu.pipeline_mode<synchronous>, transform_indices = @transform_5, window_bounds = array<i64: 1, 64>}, {pipeline_mode = #tpu.pipeline_mode<synchronous>, transform_indices = @transform_6, window_bounds = array<i64: 64, 64>}, {pipeline_mode = #tpu.pipeline_mode<synchronous>, transform_indices = @transform_7, window_bounds = array<i64: 1, 64>}, {pipeline_mode = #tpu.pipeline_mode<synchronous>, transform_indices = @transform_8, window_bounds = array<i64: 64, 64>}, {pipeline_mode = #tpu.pipeline_mode<synchronous>, transform_indices = @transform_9, window_bounds = array<i64: 1, 64>}, {pipeline_mode = #tpu.pipeline_mode<synchronous>, transform_indices = @transform_10, window_bounds = array<i64: 64, 64>}, {pipeline_mode = #tpu.pipeline_mode<synchronous>, transform_indices = @transform_11, window_bounds = array<i64: 1, 64>}, {pipeline_mode = #tpu.pipeline_mode<synchronous>, transform_indices = @transform_12, window_bounds = array<i64: 64, 64>}, {pipeline_mode = #tpu.pipeline_mode<synchronous>, transform_indices = @transform_13, window_bounds = array<i64: 1, 64>}, {pipeline_mode = #tpu.pipeline_mode<synchronous>, transform_indices = @transform_14, window_bounds = array<i64: 64, 64>}, {pipeline_mode = #tpu.pipeline_mode<synchronous>, transform_indices = @transform_15, window_bounds = array<i64: 1, 64>}, {pipeline_mode = #tpu.pipeline_mode<synchronous>, transform_indices = @transform_16, window_bounds = array<i64: 1, 64>}, {pipeline_mode = #tpu.pipeline_mode<synchronous>, transform_indices = @transform_17, window_bounds = array<i64: 1, 64>}, {pipeline_mode = #tpu.pipeline_mode<synchronous>, transform_indices = @transform_18, window_bounds = array<i64: 1, 64>}, {pipeline_mode = #tpu.pipeline_mode<synchronous>, transform_indices = @transform_19, window_bounds = array<i64: 1, 64>}, {pipeline_mode = #tpu.pipeline_mode<synchronous>, transform_indices = @transform_20, window_bounds = array<i64: 1, 64>}, {pipeline_mode = #tpu.pipeline_mode<synchronous>, transform_indices = @transform_21, window_bounds = array<i64: 1, 1>}, {pipeline_mode = #tpu.pipeline_mode<synchronous>, transform_indices = @transform_22, window_bounds = array<i64: 2, 8>}]} {
    %c0 = arith.constant 0 : index
    %c0_0 = arith.constant 0 : index
    %c0_1 = arith.constant 0 : index
    %0 = vector.load %arg1[%c0, %c0_0, %c0_1] : memref<2x1x16xf32, #tpu.memory_space<vmem>>, vector<2x1x16xf32>
    %1 = vector.shape_cast %0 : vector<2x1x16xf32> to vector<2x16xf32>
    %c0_2 = arith.constant 0 : index
    %c0_3 = arith.constant 0 : index
    %2 = vector.load %arg3[%c0_2, %c0_3] : memref<16x64xf32, #tpu.memory_space<vmem>>, vector<16x64xf32>
    %cst = arith.constant dense<0.000000e+00> : vector<2x64xf32>
    %3 = tpu.matmul %1, %2, %cst {dimension_numbers = #tpu.dot_dimension_numbers<[1], [0], [0], [1], [0, 0, 1, 1], [], []>} : vector<2x16xf32>, vector<16x64xf32>, vector<2x64xf32> -> vector<2x64xf32>
    %c0_4 = arith.constant 0 : index
    %c0_5 = arith.constant 0 : index
    %4 = vector.load %arg2[%c0_4, %c0_5] : memref<8x1xf32, #tpu.memory_space<vmem>>, vector<8x1xf32>
    %5 = vector.shape_cast %4 : vector<8x1xf32> to vector<1x8x1xf32>
    %6 = vector.shape_cast %3 : vector<2x64xf32> to vector<2x1x64xf32>
    %7 = vector.broadcast %5 : vector<1x8x1xf32> to vector<2x8x64xf32>
    %8 = vector.broadcast %6 : vector<2x1x64xf32> to vector<2x8x64xf32>
    %9 = arith.mulf %7, %8 : vector<2x8x64xf32>
    %c0_6 = arith.constant 0 : index
    %c0_7 = arith.constant 0 : index
    %10 = vector.load %arg4[%c0_6, %c0_7] : memref<8x64xf32, #tpu.memory_space<vmem>>, vector<8x64xf32>
    %11 = vector.shape_cast %10 : vector<8x64xf32> to vector<1x8x64xf32>
    %12 = vector.broadcast %11 : vector<1x8x64xf32> to vector<2x8x64xf32>
    %13 = arith.addf %9, %12 : vector<2x8x64xf32>
    %cst_8 = arith.constant 0.000000e+00 : f32
    %14 = vector.broadcast %cst_8 : f32 to vector<2x8x64xf32>
    %15 = arith.maximumf %13, %14 : vector<2x8x64xf32>
    %16 = vector.shape_cast %15 : vector<2x8x64xf32> to vector<16x64xf32>
    %c0_9 = arith.constant 0 : index
    %c0_10 = arith.constant 0 : index
    %17 = vector.load %arg5[%c0_9, %c0_10] : memref<64x64xf32, #tpu.memory_space<vmem>>, vector<64x64xf32>
    %cst_11 = arith.constant dense<0.000000e+00> : vector<16x64xf32>
    %18 = tpu.matmul %16, %17, %cst_11 {dimension_numbers = #tpu.dot_dimension_numbers<[1], [0], [0], [1], [0, 0, 1, 1], [], []>} : vector<16x64xf32>, vector<64x64xf32>, vector<16x64xf32> -> vector<16x64xf32>
    %c0_12 = arith.constant 0 : index
    %c0_13 = arith.constant 0 : index
    %19 = vector.load %arg6[%c0_12, %c0_13] : memref<1x64xf32, #tpu.memory_space<vmem>>, vector<1x64xf32>
    %20 = vector.broadcast %19 : vector<1x64xf32> to vector<16x64xf32>
    %21 = arith.addf %18, %20 : vector<16x64xf32>
    %c0_14 = arith.constant 0 : index
    %c0_15 = arith.constant 0 : index
    %22 = vector.load %arg7[%c0_14, %c0_15] : memref<64x64xf32, #tpu.memory_space<vmem>>, vector<64x64xf32>
    %cst_16 = arith.constant dense<0.000000e+00> : vector<16x64xf32>
    %23 = tpu.matmul %16, %22, %cst_16 {dimension_numbers = #tpu.dot_dimension_numbers<[1], [0], [0], [1], [0, 0, 1, 1], [], []>} : vector<16x64xf32>, vector<64x64xf32>, vector<16x64xf32> -> vector<16x64xf32>
    %c0_17 = arith.constant 0 : index
    %c0_18 = arith.constant 0 : index
    %24 = vector.load %arg8[%c0_17, %c0_18] : memref<1x64xf32, #tpu.memory_space<vmem>>, vector<1x64xf32>
    %25 = vector.broadcast %24 : vector<1x64xf32> to vector<16x64xf32>
    %26 = arith.addf %23, %25 : vector<16x64xf32>
    %c0_19 = arith.constant 0 : index
    %c0_20 = arith.constant 0 : index
    %27 = vector.load %arg9[%c0_19, %c0_20] : memref<64x64xf32, #tpu.memory_space<vmem>>, vector<64x64xf32>
    %cst_21 = arith.constant dense<0.000000e+00> : vector<16x64xf32>
    %28 = tpu.matmul %16, %27, %cst_21 {dimension_numbers = #tpu.dot_dimension_numbers<[1], [0], [0], [1], [0, 0, 1, 1], [], []>} : vector<16x64xf32>, vector<64x64xf32>, vector<16x64xf32> -> vector<16x64xf32>
    %c0_22 = arith.constant 0 : index
    %c0_23 = arith.constant 0 : index
    %29 = vector.load %arg10[%c0_22, %c0_23] : memref<1x64xf32, #tpu.memory_space<vmem>>, vector<1x64xf32>
    %30 = vector.broadcast %29 : vector<1x64xf32> to vector<16x64xf32>
    %31 = arith.addf %28, %30 : vector<16x64xf32>
    %32 = tpu.iota {dimensions = array<i32: 0>} : vector<8x8xi32>
    %33 = tpu.iota {dimensions = array<i32: 1>} : vector<8x8xi32>
    %34 = arith.cmpi sle, %33, %32 : vector<8x8xi32>
    %35 = vector.shape_cast %34 : vector<8x8xi1> to vector<1x8x8xi1>
    %c0_24 = arith.constant 0 : index
    %c0_25 = arith.constant 0 : index
    %36 = vector.load %arg11[%c0_24, %c0_25] : memref<64x64xf32, #tpu.memory_space<vmem>>, vector<64x64xf32>
    %cst_26 = arith.constant 0.000000e+00 : f32
    %37 = vector.broadcast %cst_26 : f32 to vector<16x64xf32>
    %38 = vector.extract_strided_slice %21 {offsets = [0, 0], sizes = [16, 8], strides = [1, 1]} : vector<16x64xf32> to vector<16x8xf32>
    %39 = vector.shape_cast %38 : vector<16x8xf32> to vector<2x8x8xf32>
    %40 = vector.extract_strided_slice %26 {offsets = [0, 0], sizes = [16, 8], strides = [1, 1]} : vector<16x64xf32> to vector<16x8xf32>
    %41 = vector.shape_cast %40 : vector<16x8xf32> to vector<2x8x8xf32>
    %42 = vector.extract_strided_slice %31 {offsets = [0, 0], sizes = [16, 8], strides = [1, 1]} : vector<16x64xf32> to vector<16x8xf32>
    %43 = vector.shape_cast %42 : vector<16x8xf32> to vector<2x8x8xf32>
    "tpu.trace_start"() <{level = 10 : i32, message = "bqe,bke->bqk"}> : () -> ()
    %cst_27 = arith.constant dense<0.000000e+00> : vector<2x8x8xf32>
    %44 = tpu.matmul %39, %41, %cst_27 {dimension_numbers = #tpu.dot_dimension_numbers<[2], [2], [1], [1], [0, 0, 0, 1, 1, 1], [0], [0]>} : vector<2x8x8xf32>, vector<2x8x8xf32>, vector<2x8x8xf32> -> vector<2x8x8xf32>
    %cst_28 = arith.constant -1.000000e+30 : f32
    "tpu.trace_stop"() : () -> ()
    %45 = vector.shape_cast %35 : vector<1x8x8xi1> to vector<1x8x8xi1>
    %46 = vector.broadcast %45 : vector<1x8x8xi1> to vector<2x8x8xi1>
    %47 = vector.broadcast %cst_28 : f32 to vector<2x8x8xf32>
    %48 = arith.select %46, %44, %47 : vector<2x8x8xi1>, vector<2x8x8xf32>
    %cst_29 = arith.constant dense<0xFF800000> : vector<2x8xf32>
    %49 = vector.multi_reduction <maximumf>, %48, %cst_29 [2] : vector<2x8x8xf32> to vector<2x8xf32>
    %50 = vector.shape_cast %49 : vector<2x8xf32> to vector<2x8x1xf32>
    %51 = vector.broadcast %50 : vector<2x8x1xf32> to vector<2x8x8xf32>
    %52 = arith.subf %48, %51 : vector<2x8x8xf32>
    %53 = math.exp %52 : vector<2x8x8xf32>
    %cst_30 = arith.constant dense<0.000000e+00> : vector<2x8xf32>
    %54 = vector.multi_reduction <add>, %53, %cst_30 [2] : vector<2x8x8xf32> to vector<2x8xf32>
    %55 = vector.shape_cast %54 : vector<2x8xf32> to vector<2x8x1xf32>
    %56 = tpu.reciprocal %55 {approx = true} : vector<2x8x1xf32> -> vector<2x8x1xf32>
    %57 = vector.broadcast %56 : vector<2x8x1xf32> to vector<2x8x8xf32>
    %58 = arith.mulf %53, %57 : vector<2x8x8xf32>
    "tpu.trace_start"() <{level = 10 : i32, message = "bqk,bke->bqe"}> : () -> ()
    %cst_31 = arith.constant dense<0.000000e+00> : vector<2x8x8xf32>
    %59 = tpu.matmul %58, %43, %cst_31 {dimension_numbers = #tpu.dot_dimension_numbers<[2], [1], [1], [2], [0, 0, 0, 1, 1, 2], [0], [0]>} : vector<2x8x8xf32>, vector<2x8x8xf32>, vector<2x8x8xf32> -> vector<2x8x8xf32>
    "tpu.trace_stop"() : () -> ()
    %60 = vector.shape_cast %59 : vector<2x8x8xf32> to vector<16x8xf32>
    %61 = vector.extract_strided_slice %36 {offsets = [0, 0], sizes = [8, 64], strides = [1, 1]} : vector<64x64xf32> to vector<8x64xf32>
    %cst_32 = arith.constant dense<0.000000e+00> : vector<16x64xf32>
    %62 = tpu.matmul %60, %61, %cst_32 {dimension_numbers = #tpu.dot_dimension_numbers<[1], [0], [0], [1], [0, 0, 1, 1], [], []>} : vector<16x8xf32>, vector<8x64xf32>, vector<16x64xf32> -> vector<16x64xf32>
    %63 = arith.addf %37, %62 : vector<16x64xf32>
    %64 = vector.extract_strided_slice %21 {offsets = [0, 8], sizes = [16, 8], strides = [1, 1]} : vector<16x64xf32> to vector<16x8xf32>
    %65 = vector.shape_cast %64 : vector<16x8xf32> to vector<2x8x8xf32>
    %66 = vector.extract_strided_slice %26 {offsets = [0, 8], sizes = [16, 8], strides = [1, 1]} : vector<16x64xf32> to vector<16x8xf32>
    %67 = vector.shape_cast %66 : vector<16x8xf32> to vector<2x8x8xf32>
    %68 = vector.extract_strided_slice %31 {offsets = [0, 8], sizes = [16, 8], strides = [1, 1]} : vector<16x64xf32> to vector<16x8xf32>
    %69 = vector.shape_cast %68 : vector<16x8xf32> to vector<2x8x8xf32>
    "tpu.trace_start"() <{level = 10 : i32, message = "bqe,bke->bqk"}> : () -> ()
    %cst_33 = arith.constant dense<0.000000e+00> : vector<2x8x8xf32>
    %70 = tpu.matmul %65, %67, %cst_33 {dimension_numbers = #tpu.dot_dimension_numbers<[2], [2], [1], [1], [0, 0, 0, 1, 1, 1], [0], [0]>} : vector<2x8x8xf32>, vector<2x8x8xf32>, vector<2x8x8xf32> -> vector<2x8x8xf32>
    %cst_34 = arith.constant -1.000000e+30 : f32
    "tpu.trace_stop"() : () -> ()
    %71 = vector.shape_cast %35 : vector<1x8x8xi1> to vector<1x8x8xi1>
    %72 = vector.broadcast %71 : vector<1x8x8xi1> to vector<2x8x8xi1>
    %73 = vector.broadcast %cst_34 : f32 to vector<2x8x8xf32>
    %74 = arith.select %72, %70, %73 : vector<2x8x8xi1>, vector<2x8x8xf32>
    %cst_35 = arith.constant dense<0xFF800000> : vector<2x8xf32>
    %75 = vector.multi_reduction <maximumf>, %74, %cst_35 [2] : vector<2x8x8xf32> to vector<2x8xf32>
    %76 = vector.shape_cast %75 : vector<2x8xf32> to vector<2x8x1xf32>
    %77 = vector.broadcast %76 : vector<2x8x1xf32> to vector<2x8x8xf32>
    %78 = arith.subf %74, %77 : vector<2x8x8xf32>
    %79 = math.exp %78 : vector<2x8x8xf32>
    %cst_36 = arith.constant dense<0.000000e+00> : vector<2x8xf32>
    %80 = vector.multi_reduction <add>, %79, %cst_36 [2] : vector<2x8x8xf32> to vector<2x8xf32>
    %81 = vector.shape_cast %80 : vector<2x8xf32> to vector<2x8x1xf32>
    %82 = tpu.reciprocal %81 {approx = true} : vector<2x8x1xf32> -> vector<2x8x1xf32>
    %83 = vector.broadcast %82 : vector<2x8x1xf32> to vector<2x8x8xf32>
    %84 = arith.mulf %79, %83 : vector<2x8x8xf32>
    "tpu.trace_start"() <{level = 10 : i32, message = "bqk,bke->bqe"}> : () -> ()
    %cst_37 = arith.constant dense<0.000000e+00> : vector<2x8x8xf32>
    %85 = tpu.matmul %84, %69, %cst_37 {dimension_numbers = #tpu.dot_dimension_numbers<[2], [1], [1], [2], [0, 0, 0, 1, 1, 2], [0], [0]>} : vector<2x8x8xf32>, vector<2x8x8xf32>, vector<2x8x8xf32> -> vector<2x8x8xf32>
    "tpu.trace_stop"() : () -> ()
    %86 = vector.shape_cast %85 : vector<2x8x8xf32> to vector<16x8xf32>
    %87 = vector.extract_strided_slice %36 {offsets = [8, 0], sizes = [8, 64], strides = [1, 1]} : vector<64x64xf32> to vector<8x64xf32>
    %cst_38 = arith.constant dense<0.000000e+00> : vector<16x64xf32>
    %88 = tpu.matmul %86, %87, %cst_38 {dimension_numbers = #tpu.dot_dimension_numbers<[1], [0], [0], [1], [0, 0, 1, 1], [], []>} : vector<16x8xf32>, vector<8x64xf32>, vector<16x64xf32> -> vector<16x64xf32>
    %89 = arith.addf %63, %88 : vector<16x64xf32>
    %90 = vector.extract_strided_slice %21 {offsets = [0, 16], sizes = [16, 8], strides = [1, 1]} : vector<16x64xf32> to vector<16x8xf32>
    %91 = vector.shape_cast %90 : vector<16x8xf32> to vector<2x8x8xf32>
    %92 = vector.extract_strided_slice %26 {offsets = [0, 16], sizes = [16, 8], strides = [1, 1]} : vector<16x64xf32> to vector<16x8xf32>
    %93 = vector.shape_cast %92 : vector<16x8xf32> to vector<2x8x8xf32>
    %94 = vector.extract_strided_slice %31 {offsets = [0, 16], sizes = [16, 8], strides = [1, 1]} : vector<16x64xf32> to vector<16x8xf32>
    %95 = vector.shape_cast %94 : vector<16x8xf32> to vector<2x8x8xf32>
    "tpu.trace_start"() <{level = 10 : i32, message = "bqe,bke->bqk"}> : () -> ()
    %cst_39 = arith.constant dense<0.000000e+00> : vector<2x8x8xf32>
    %96 = tpu.matmul %91, %93, %cst_39 {dimension_numbers = #tpu.dot_dimension_numbers<[2], [2], [1], [1], [0, 0, 0, 1, 1, 1], [0], [0]>} : vector<2x8x8xf32>, vector<2x8x8xf32>, vector<2x8x8xf32> -> vector<2x8x8xf32>
    %cst_40 = arith.constant -1.000000e+30 : f32
    "tpu.trace_stop"() : () -> ()
    %97 = vector.shape_cast %35 : vector<1x8x8xi1> to vector<1x8x8xi1>
    %98 = vector.broadcast %97 : vector<1x8x8xi1> to vector<2x8x8xi1>
    %99 = vector.broadcast %cst_40 : f32 to vector<2x8x8xf32>
    %100 = arith.select %98, %96, %99 : vector<2x8x8xi1>, vector<2x8x8xf32>
    %cst_41 = arith.constant dense<0xFF800000> : vector<2x8xf32>
    %101 = vector.multi_reduction <maximumf>, %100, %cst_41 [2] : vector<2x8x8xf32> to vector<2x8xf32>
    %102 = vector.shape_cast %101 : vector<2x8xf32> to vector<2x8x1xf32>
    %103 = vector.broadcast %102 : vector<2x8x1xf32> to vector<2x8x8xf32>
    %104 = arith.subf %100, %103 : vector<2x8x8xf32>
    %105 = math.exp %104 : vector<2x8x8xf32>
    %cst_42 = arith.constant dense<0.000000e+00> : vector<2x8xf32>
    %106 = vector.multi_reduction <add>, %105, %cst_42 [2] : vector<2x8x8xf32> to vector<2x8xf32>
    %107 = vector.shape_cast %106 : vector<2x8xf32> to vector<2x8x1xf32>
    %108 = tpu.reciprocal %107 {approx = true} : vector<2x8x1xf32> -> vector<2x8x1xf32>
    %109 = vector.broadcast %108 : vector<2x8x1xf32> to vector<2x8x8xf32>
    %110 = arith.mulf %105, %109 : vector<2x8x8xf32>
    "tpu.trace_start"() <{level = 10 : i32, message = "bqk,bke->bqe"}> : () -> ()
    %cst_43 = arith.constant dense<0.000000e+00> : vector<2x8x8xf32>
    %111 = tpu.matmul %110, %95, %cst_43 {dimension_numbers = #tpu.dot_dimension_numbers<[2], [1], [1], [2], [0, 0, 0, 1, 1, 2], [0], [0]>} : vector<2x8x8xf32>, vector<2x8x8xf32>, vector<2x8x8xf32> -> vector<2x8x8xf32>
    "tpu.trace_stop"() : () -> ()
    %112 = vector.shape_cast %111 : vector<2x8x8xf32> to vector<16x8xf32>
    %113 = vector.extract_strided_slice %36 {offsets = [16, 0], sizes = [8, 64], strides = [1, 1]} : vector<64x64xf32> to vector<8x64xf32>
    %cst_44 = arith.constant dense<0.000000e+00> : vector<16x64xf32>
    %114 = tpu.matmul %112, %113, %cst_44 {dimension_numbers = #tpu.dot_dimension_numbers<[1], [0], [0], [1], [0, 0, 1, 1], [], []>} : vector<16x8xf32>, vector<8x64xf32>, vector<16x64xf32> -> vector<16x64xf32>
    %115 = arith.addf %89, %114 : vector<16x64xf32>
    %116 = vector.extract_strided_slice %21 {offsets = [0, 24], sizes = [16, 8], strides = [1, 1]} : vector<16x64xf32> to vector<16x8xf32>
    %117 = vector.shape_cast %116 : vector<16x8xf32> to vector<2x8x8xf32>
    %118 = vector.extract_strided_slice %26 {offsets = [0, 24], sizes = [16, 8], strides = [1, 1]} : vector<16x64xf32> to vector<16x8xf32>
    %119 = vector.shape_cast %118 : vector<16x8xf32> to vector<2x8x8xf32>
    %120 = vector.extract_strided_slice %31 {offsets = [0, 24], sizes = [16, 8], strides = [1, 1]} : vector<16x64xf32> to vector<16x8xf32>
    %121 = vector.shape_cast %120 : vector<16x8xf32> to vector<2x8x8xf32>
    "tpu.trace_start"() <{level = 10 : i32, message = "bqe,bke->bqk"}> : () -> ()
    %cst_45 = arith.constant dense<0.000000e+00> : vector<2x8x8xf32>
    %122 = tpu.matmul %117, %119, %cst_45 {dimension_numbers = #tpu.dot_dimension_numbers<[2], [2], [1], [1], [0, 0, 0, 1, 1, 1], [0], [0]>} : vector<2x8x8xf32>, vector<2x8x8xf32>, vector<2x8x8xf32> -> vector<2x8x8xf32>
    %cst_46 = arith.constant -1.000000e+30 : f32
    "tpu.trace_stop"() : () -> ()
    %123 = vector.shape_cast %35 : vector<1x8x8xi1> to vector<1x8x8xi1>
    %124 = vector.broadcast %123 : vector<1x8x8xi1> to vector<2x8x8xi1>
    %125 = vector.broadcast %cst_46 : f32 to vector<2x8x8xf32>
    %126 = arith.select %124, %122, %125 : vector<2x8x8xi1>, vector<2x8x8xf32>
    %cst_47 = arith.constant dense<0xFF800000> : vector<2x8xf32>
    %127 = vector.multi_reduction <maximumf>, %126, %cst_47 [2] : vector<2x8x8xf32> to vector<2x8xf32>
    %128 = vector.shape_cast %127 : vector<2x8xf32> to vector<2x8x1xf32>
    %129 = vector.broadcast %128 : vector<2x8x1xf32> to vector<2x8x8xf32>
    %130 = arith.subf %126, %129 : vector<2x8x8xf32>
    %131 = math.exp %130 : vector<2x8x8xf32>
    %cst_48 = arith.constant dense<0.000000e+00> : vector<2x8xf32>
    %132 = vector.multi_reduction <add>, %131, %cst_48 [2] : vector<2x8x8xf32> to vector<2x8xf32>
    %133 = vector.shape_cast %132 : vector<2x8xf32> to vector<2x8x1xf32>
    %134 = tpu.reciprocal %133 {approx = true} : vector<2x8x1xf32> -> vector<2x8x1xf32>
    %135 = vector.broadcast %134 : vector<2x8x1xf32> to vector<2x8x8xf32>
    %136 = arith.mulf %131, %135 : vector<2x8x8xf32>
    "tpu.trace_start"() <{level = 10 : i32, message = "bqk,bke->bqe"}> : () -> ()
    %cst_49 = arith.constant dense<0.000000e+00> : vector<2x8x8xf32>
    %137 = tpu.matmul %136, %121, %cst_49 {dimension_numbers = #tpu.dot_dimension_numbers<[2], [1], [1], [2], [0, 0, 0, 1, 1, 2], [0], [0]>} : vector<2x8x8xf32>, vector<2x8x8xf32>, vector<2x8x8xf32> -> vector<2x8x8xf32>
    "tpu.trace_stop"() : () -> ()
    %138 = vector.shape_cast %137 : vector<2x8x8xf32> to vector<16x8xf32>
    %139 = vector.extract_strided_slice %36 {offsets = [24, 0], sizes = [8, 64], strides = [1, 1]} : vector<64x64xf32> to vector<8x64xf32>
    %cst_50 = arith.constant dense<0.000000e+00> : vector<16x64xf32>
    %140 = tpu.matmul %138, %139, %cst_50 {dimension_numbers = #tpu.dot_dimension_numbers<[1], [0], [0], [1], [0, 0, 1, 1], [], []>} : vector<16x8xf32>, vector<8x64xf32>, vector<16x64xf32> -> vector<16x64xf32>
    %141 = arith.addf %115, %140 : vector<16x64xf32>
    %142 = vector.extract_strided_slice %21 {offsets = [0, 32], sizes = [16, 8], strides = [1, 1]} : vector<16x64xf32> to vector<16x8xf32>
    %143 = vector.shape_cast %142 : vector<16x8xf32> to vector<2x8x8xf32>
    %144 = vector.extract_strided_slice %26 {offsets = [0, 32], sizes = [16, 8], strides = [1, 1]} : vector<16x64xf32> to vector<16x8xf32>
    %145 = vector.shape_cast %144 : vector<16x8xf32> to vector<2x8x8xf32>
    %146 = vector.extract_strided_slice %31 {offsets = [0, 32], sizes = [16, 8], strides = [1, 1]} : vector<16x64xf32> to vector<16x8xf32>
    %147 = vector.shape_cast %146 : vector<16x8xf32> to vector<2x8x8xf32>
    "tpu.trace_start"() <{level = 10 : i32, message = "bqe,bke->bqk"}> : () -> ()
    %cst_51 = arith.constant dense<0.000000e+00> : vector<2x8x8xf32>
    %148 = tpu.matmul %143, %145, %cst_51 {dimension_numbers = #tpu.dot_dimension_numbers<[2], [2], [1], [1], [0, 0, 0, 1, 1, 1], [0], [0]>} : vector<2x8x8xf32>, vector<2x8x8xf32>, vector<2x8x8xf32> -> vector<2x8x8xf32>
    %cst_52 = arith.constant -1.000000e+30 : f32
    "tpu.trace_stop"() : () -> ()
    %149 = vector.shape_cast %35 : vector<1x8x8xi1> to vector<1x8x8xi1>
    %150 = vector.broadcast %149 : vector<1x8x8xi1> to vector<2x8x8xi1>
    %151 = vector.broadcast %cst_52 : f32 to vector<2x8x8xf32>
    %152 = arith.select %150, %148, %151 : vector<2x8x8xi1>, vector<2x8x8xf32>
    %cst_53 = arith.constant dense<0xFF800000> : vector<2x8xf32>
    %153 = vector.multi_reduction <maximumf>, %152, %cst_53 [2] : vector<2x8x8xf32> to vector<2x8xf32>
    %154 = vector.shape_cast %153 : vector<2x8xf32> to vector<2x8x1xf32>
    %155 = vector.broadcast %154 : vector<2x8x1xf32> to vector<2x8x8xf32>
    %156 = arith.subf %152, %155 : vector<2x8x8xf32>
    %157 = math.exp %156 : vector<2x8x8xf32>
    %cst_54 = arith.constant dense<0.000000e+00> : vector<2x8xf32>
    %158 = vector.multi_reduction <add>, %157, %cst_54 [2] : vector<2x8x8xf32> to vector<2x8xf32>
    %159 = vector.shape_cast %158 : vector<2x8xf32> to vector<2x8x1xf32>
    %160 = tpu.reciprocal %159 {approx = true} : vector<2x8x1xf32> -> vector<2x8x1xf32>
    %161 = vector.broadcast %160 : vector<2x8x1xf32> to vector<2x8x8xf32>
    %162 = arith.mulf %157, %161 : vector<2x8x8xf32>
    "tpu.trace_start"() <{level = 10 : i32, message = "bqk,bke->bqe"}> : () -> ()
    %cst_55 = arith.constant dense<0.000000e+00> : vector<2x8x8xf32>
    %163 = tpu.matmul %162, %147, %cst_55 {dimension_numbers = #tpu.dot_dimension_numbers<[2], [1], [1], [2], [0, 0, 0, 1, 1, 2], [0], [0]>} : vector<2x8x8xf32>, vector<2x8x8xf32>, vector<2x8x8xf32> -> vector<2x8x8xf32>
    "tpu.trace_stop"() : () -> ()
    %164 = vector.shape_cast %163 : vector<2x8x8xf32> to vector<16x8xf32>
    %165 = vector.extract_strided_slice %36 {offsets = [32, 0], sizes = [8, 64], strides = [1, 1]} : vector<64x64xf32> to vector<8x64xf32>
    %cst_56 = arith.constant dense<0.000000e+00> : vector<16x64xf32>
    %166 = tpu.matmul %164, %165, %cst_56 {dimension_numbers = #tpu.dot_dimension_numbers<[1], [0], [0], [1], [0, 0, 1, 1], [], []>} : vector<16x8xf32>, vector<8x64xf32>, vector<16x64xf32> -> vector<16x64xf32>
    %167 = arith.addf %141, %166 : vector<16x64xf32>
    %168 = vector.extract_strided_slice %21 {offsets = [0, 40], sizes = [16, 8], strides = [1, 1]} : vector<16x64xf32> to vector<16x8xf32>
    %169 = vector.shape_cast %168 : vector<16x8xf32> to vector<2x8x8xf32>
    %170 = vector.extract_strided_slice %26 {offsets = [0, 40], sizes = [16, 8], strides = [1, 1]} : vector<16x64xf32> to vector<16x8xf32>
    %171 = vector.shape_cast %170 : vector<16x8xf32> to vector<2x8x8xf32>
    %172 = vector.extract_strided_slice %31 {offsets = [0, 40], sizes = [16, 8], strides = [1, 1]} : vector<16x64xf32> to vector<16x8xf32>
    %173 = vector.shape_cast %172 : vector<16x8xf32> to vector<2x8x8xf32>
    "tpu.trace_start"() <{level = 10 : i32, message = "bqe,bke->bqk"}> : () -> ()
    %cst_57 = arith.constant dense<0.000000e+00> : vector<2x8x8xf32>
    %174 = tpu.matmul %169, %171, %cst_57 {dimension_numbers = #tpu.dot_dimension_numbers<[2], [2], [1], [1], [0, 0, 0, 1, 1, 1], [0], [0]>} : vector<2x8x8xf32>, vector<2x8x8xf32>, vector<2x8x8xf32> -> vector<2x8x8xf32>
    %cst_58 = arith.constant -1.000000e+30 : f32
    "tpu.trace_stop"() : () -> ()
    %175 = vector.shape_cast %35 : vector<1x8x8xi1> to vector<1x8x8xi1>
    %176 = vector.broadcast %175 : vector<1x8x8xi1> to vector<2x8x8xi1>
    %177 = vector.broadcast %cst_58 : f32 to vector<2x8x8xf32>
    %178 = arith.select %176, %174, %177 : vector<2x8x8xi1>, vector<2x8x8xf32>
    %cst_59 = arith.constant dense<0xFF800000> : vector<2x8xf32>
    %179 = vector.multi_reduction <maximumf>, %178, %cst_59 [2] : vector<2x8x8xf32> to vector<2x8xf32>
    %180 = vector.shape_cast %179 : vector<2x8xf32> to vector<2x8x1xf32>
    %181 = vector.broadcast %180 : vector<2x8x1xf32> to vector<2x8x8xf32>
    %182 = arith.subf %178, %181 : vector<2x8x8xf32>
    %183 = math.exp %182 : vector<2x8x8xf32>
    %cst_60 = arith.constant dense<0.000000e+00> : vector<2x8xf32>
    %184 = vector.multi_reduction <add>, %183, %cst_60 [2] : vector<2x8x8xf32> to vector<2x8xf32>
    %185 = vector.shape_cast %184 : vector<2x8xf32> to vector<2x8x1xf32>
    %186 = tpu.reciprocal %185 {approx = true} : vector<2x8x1xf32> -> vector<2x8x1xf32>
    %187 = vector.broadcast %186 : vector<2x8x1xf32> to vector<2x8x8xf32>
    %188 = arith.mulf %183, %187 : vector<2x8x8xf32>
    "tpu.trace_start"() <{level = 10 : i32, message = "bqk,bke->bqe"}> : () -> ()
    %cst_61 = arith.constant dense<0.000000e+00> : vector<2x8x8xf32>
    %189 = tpu.matmul %188, %173, %cst_61 {dimension_numbers = #tpu.dot_dimension_numbers<[2], [1], [1], [2], [0, 0, 0, 1, 1, 2], [0], [0]>} : vector<2x8x8xf32>, vector<2x8x8xf32>, vector<2x8x8xf32> -> vector<2x8x8xf32>
    "tpu.trace_stop"() : () -> ()
    %190 = vector.shape_cast %189 : vector<2x8x8xf32> to vector<16x8xf32>
    %191 = vector.extract_strided_slice %36 {offsets = [40, 0], sizes = [8, 64], strides = [1, 1]} : vector<64x64xf32> to vector<8x64xf32>
    %cst_62 = arith.constant dense<0.000000e+00> : vector<16x64xf32>
    %192 = tpu.matmul %190, %191, %cst_62 {dimension_numbers = #tpu.dot_dimension_numbers<[1], [0], [0], [1], [0, 0, 1, 1], [], []>} : vector<16x8xf32>, vector<8x64xf32>, vector<16x64xf32> -> vector<16x64xf32>
    %193 = arith.addf %167, %192 : vector<16x64xf32>
    %194 = vector.extract_strided_slice %21 {offsets = [0, 48], sizes = [16, 8], strides = [1, 1]} : vector<16x64xf32> to vector<16x8xf32>
    %195 = vector.shape_cast %194 : vector<16x8xf32> to vector<2x8x8xf32>
    %196 = vector.extract_strided_slice %26 {offsets = [0, 48], sizes = [16, 8], strides = [1, 1]} : vector<16x64xf32> to vector<16x8xf32>
    %197 = vector.shape_cast %196 : vector<16x8xf32> to vector<2x8x8xf32>
    %198 = vector.extract_strided_slice %31 {offsets = [0, 48], sizes = [16, 8], strides = [1, 1]} : vector<16x64xf32> to vector<16x8xf32>
    %199 = vector.shape_cast %198 : vector<16x8xf32> to vector<2x8x8xf32>
    "tpu.trace_start"() <{level = 10 : i32, message = "bqe,bke->bqk"}> : () -> ()
    %cst_63 = arith.constant dense<0.000000e+00> : vector<2x8x8xf32>
    %200 = tpu.matmul %195, %197, %cst_63 {dimension_numbers = #tpu.dot_dimension_numbers<[2], [2], [1], [1], [0, 0, 0, 1, 1, 1], [0], [0]>} : vector<2x8x8xf32>, vector<2x8x8xf32>, vector<2x8x8xf32> -> vector<2x8x8xf32>
    %cst_64 = arith.constant -1.000000e+30 : f32
    "tpu.trace_stop"() : () -> ()
    %201 = vector.shape_cast %35 : vector<1x8x8xi1> to vector<1x8x8xi1>
    %202 = vector.broadcast %201 : vector<1x8x8xi1> to vector<2x8x8xi1>
    %203 = vector.broadcast %cst_64 : f32 to vector<2x8x8xf32>
    %204 = arith.select %202, %200, %203 : vector<2x8x8xi1>, vector<2x8x8xf32>
    %cst_65 = arith.constant dense<0xFF800000> : vector<2x8xf32>
    %205 = vector.multi_reduction <maximumf>, %204, %cst_65 [2] : vector<2x8x8xf32> to vector<2x8xf32>
    %206 = vector.shape_cast %205 : vector<2x8xf32> to vector<2x8x1xf32>
    %207 = vector.broadcast %206 : vector<2x8x1xf32> to vector<2x8x8xf32>
    %208 = arith.subf %204, %207 : vector<2x8x8xf32>
    %209 = math.exp %208 : vector<2x8x8xf32>
    %cst_66 = arith.constant dense<0.000000e+00> : vector<2x8xf32>
    %210 = vector.multi_reduction <add>, %209, %cst_66 [2] : vector<2x8x8xf32> to vector<2x8xf32>
    %211 = vector.shape_cast %210 : vector<2x8xf32> to vector<2x8x1xf32>
    %212 = tpu.reciprocal %211 {approx = true} : vector<2x8x1xf32> -> vector<2x8x1xf32>
    %213 = vector.broadcast %212 : vector<2x8x1xf32> to vector<2x8x8xf32>
    %214 = arith.mulf %209, %213 : vector<2x8x8xf32>
    "tpu.trace_start"() <{level = 10 : i32, message = "bqk,bke->bqe"}> : () -> ()
    %cst_67 = arith.constant dense<0.000000e+00> : vector<2x8x8xf32>
    %215 = tpu.matmul %214, %199, %cst_67 {dimension_numbers = #tpu.dot_dimension_numbers<[2], [1], [1], [2], [0, 0, 0, 1, 1, 2], [0], [0]>} : vector<2x8x8xf32>, vector<2x8x8xf32>, vector<2x8x8xf32> -> vector<2x8x8xf32>
    "tpu.trace_stop"() : () -> ()
    %216 = vector.shape_cast %215 : vector<2x8x8xf32> to vector<16x8xf32>
    %217 = vector.extract_strided_slice %36 {offsets = [48, 0], sizes = [8, 64], strides = [1, 1]} : vector<64x64xf32> to vector<8x64xf32>
    %cst_68 = arith.constant dense<0.000000e+00> : vector<16x64xf32>
    %218 = tpu.matmul %216, %217, %cst_68 {dimension_numbers = #tpu.dot_dimension_numbers<[1], [0], [0], [1], [0, 0, 1, 1], [], []>} : vector<16x8xf32>, vector<8x64xf32>, vector<16x64xf32> -> vector<16x64xf32>
    %219 = arith.addf %193, %218 : vector<16x64xf32>
    %220 = vector.extract_strided_slice %21 {offsets = [0, 56], sizes = [16, 8], strides = [1, 1]} : vector<16x64xf32> to vector<16x8xf32>
    %221 = vector.shape_cast %220 : vector<16x8xf32> to vector<2x8x8xf32>
    %222 = vector.extract_strided_slice %26 {offsets = [0, 56], sizes = [16, 8], strides = [1, 1]} : vector<16x64xf32> to vector<16x8xf32>
    %223 = vector.shape_cast %222 : vector<16x8xf32> to vector<2x8x8xf32>
    %224 = vector.extract_strided_slice %31 {offsets = [0, 56], sizes = [16, 8], strides = [1, 1]} : vector<16x64xf32> to vector<16x8xf32>
    %225 = vector.shape_cast %224 : vector<16x8xf32> to vector<2x8x8xf32>
    "tpu.trace_start"() <{level = 10 : i32, message = "bqe,bke->bqk"}> : () -> ()
    %cst_69 = arith.constant dense<0.000000e+00> : vector<2x8x8xf32>
    %226 = tpu.matmul %221, %223, %cst_69 {dimension_numbers = #tpu.dot_dimension_numbers<[2], [2], [1], [1], [0, 0, 0, 1, 1, 1], [0], [0]>} : vector<2x8x8xf32>, vector<2x8x8xf32>, vector<2x8x8xf32> -> vector<2x8x8xf32>
    %cst_70 = arith.constant -1.000000e+30 : f32
    "tpu.trace_stop"() : () -> ()
    %227 = vector.shape_cast %35 : vector<1x8x8xi1> to vector<1x8x8xi1>
    %228 = vector.broadcast %227 : vector<1x8x8xi1> to vector<2x8x8xi1>
    %229 = vector.broadcast %cst_70 : f32 to vector<2x8x8xf32>
    %230 = arith.select %228, %226, %229 : vector<2x8x8xi1>, vector<2x8x8xf32>
    %cst_71 = arith.constant dense<0xFF800000> : vector<2x8xf32>
    %231 = vector.multi_reduction <maximumf>, %230, %cst_71 [2] : vector<2x8x8xf32> to vector<2x8xf32>
    %232 = vector.shape_cast %231 : vector<2x8xf32> to vector<2x8x1xf32>
    %233 = vector.broadcast %232 : vector<2x8x1xf32> to vector<2x8x8xf32>
    %234 = arith.subf %230, %233 : vector<2x8x8xf32>
    %235 = math.exp %234 : vector<2x8x8xf32>
    %cst_72 = arith.constant dense<0.000000e+00> : vector<2x8xf32>
    %236 = vector.multi_reduction <add>, %235, %cst_72 [2] : vector<2x8x8xf32> to vector<2x8xf32>
    %237 = vector.shape_cast %236 : vector<2x8xf32> to vector<2x8x1xf32>
    %238 = tpu.reciprocal %237 {approx = true} : vector<2x8x1xf32> -> vector<2x8x1xf32>
    %239 = vector.broadcast %238 : vector<2x8x1xf32> to vector<2x8x8xf32>
    %240 = arith.mulf %235, %239 : vector<2x8x8xf32>
    "tpu.trace_start"() <{level = 10 : i32, message = "bqk,bke->bqe"}> : () -> ()
    %cst_73 = arith.constant dense<0.000000e+00> : vector<2x8x8xf32>
    %241 = tpu.matmul %240, %225, %cst_73 {dimension_numbers = #tpu.dot_dimension_numbers<[2], [1], [1], [2], [0, 0, 0, 1, 1, 2], [0], [0]>} : vector<2x8x8xf32>, vector<2x8x8xf32>, vector<2x8x8xf32> -> vector<2x8x8xf32>
    "tpu.trace_stop"() : () -> ()
    %242 = vector.shape_cast %241 : vector<2x8x8xf32> to vector<16x8xf32>
    %243 = vector.extract_strided_slice %36 {offsets = [56, 0], sizes = [8, 64], strides = [1, 1]} : vector<64x64xf32> to vector<8x64xf32>
    %cst_74 = arith.constant dense<0.000000e+00> : vector<16x64xf32>
    %244 = tpu.matmul %242, %243, %cst_74 {dimension_numbers = #tpu.dot_dimension_numbers<[1], [0], [0], [1], [0, 0, 1, 1], [], []>} : vector<16x8xf32>, vector<8x64xf32>, vector<16x64xf32> -> vector<16x64xf32>
    %245 = arith.addf %219, %244 : vector<16x64xf32>
    %c0_75 = arith.constant 0 : index
    %c0_76 = arith.constant 0 : index
    %246 = vector.load %arg12[%c0_75, %c0_76] : memref<1x64xf32, #tpu.memory_space<vmem>>, vector<1x64xf32>
    %247 = vector.broadcast %246 : vector<1x64xf32> to vector<16x64xf32>
    %248 = arith.addf %245, %247 : vector<16x64xf32>
    %249 = arith.addf %16, %248 : vector<16x64xf32>
    %c0_77 = arith.constant 0 : index
    %c0_78 = arith.constant 0 : index
    %250 = vector.load %arg17[%c0_77, %c0_78] : memref<1x64xf32, #tpu.memory_space<vmem>>, vector<1x64xf32>
    %c0_79 = arith.constant 0 : index
    %c0_80 = arith.constant 0 : index
    %251 = vector.load %arg18[%c0_79, %c0_80] : memref<1x64xf32, #tpu.memory_space<vmem>>, vector<1x64xf32>
    %cst_81 = arith.constant dense<0.000000e+00> : vector<16xf32>
    %252 = vector.multi_reduction <add>, %249, %cst_81 [1] : vector<16x64xf32> to vector<16xf32>
    %253 = vector.shape_cast %252 : vector<16xf32> to vector<16x1xf32>
    %cst_82 = arith.constant 6.400000e+01 : f32
    %254 = vector.broadcast %cst_82 : f32 to vector<16x1xf32>
    %255 = arith.divf %253, %254 : vector<16x1xf32>
    %256 = vector.broadcast %255 : vector<16x1xf32> to vector<16x64xf32>
    %257 = arith.subf %249, %256 : vector<16x64xf32>
    %258 = arith.mulf %257, %257 : vector<16x64xf32>
    %cst_83 = arith.constant dense<0.000000e+00> : vector<16xf32>
    %259 = vector.multi_reduction <add>, %258, %cst_83 [1] : vector<16x64xf32> to vector<16xf32>
    %260 = vector.shape_cast %259 : vector<16xf32> to vector<16x1xf32>
    %cst_84 = arith.constant 6.400000e+01 : f32
    %261 = vector.broadcast %cst_84 : f32 to vector<16x1xf32>
    %262 = arith.divf %260, %261 : vector<16x1xf32>
    %263 = vector.broadcast %255 : vector<16x1xf32> to vector<16x64xf32>
    %264 = arith.subf %249, %263 : vector<16x64xf32>
    %cst_85 = arith.constant 9.99999974E-6 : f32
    %265 = vector.broadcast %cst_85 : f32 to vector<16x1xf32>
    %266 = arith.addf %262, %265 : vector<16x1xf32>
    %267 = math.rsqrt %266 : vector<16x1xf32>
    %268 = vector.broadcast %267 : vector<16x1xf32> to vector<16x64xf32>
    %269 = arith.mulf %264, %268 : vector<16x64xf32>
    %270 = vector.broadcast %250 : vector<1x64xf32> to vector<16x64xf32>
    %271 = arith.mulf %269, %270 : vector<16x64xf32>
    %272 = vector.broadcast %251 : vector<1x64xf32> to vector<16x64xf32>
    %273 = arith.addf %271, %272 : vector<16x64xf32>
    %c0_86 = arith.constant 0 : index
    %c0_87 = arith.constant 0 : index
    %274 = vector.load %arg13[%c0_86, %c0_87] : memref<64x64xf32, #tpu.memory_space<vmem>>, vector<64x64xf32>
    %cst_88 = arith.constant dense<0.000000e+00> : vector<16x64xf32>
    %275 = tpu.matmul %273, %274, %cst_88 {dimension_numbers = #tpu.dot_dimension_numbers<[1], [0], [0], [1], [0, 0, 1, 1], [], []>} : vector<16x64xf32>, vector<64x64xf32>, vector<16x64xf32> -> vector<16x64xf32>
    %c0_89 = arith.constant 0 : index
    %c0_90 = arith.constant 0 : index
    %276 = vector.load %arg14[%c0_89, %c0_90] : memref<1x64xf32, #tpu.memory_space<vmem>>, vector<1x64xf32>
    %277 = vector.broadcast %276 : vector<1x64xf32> to vector<16x64xf32>
    %278 = arith.addf %275, %277 : vector<16x64xf32>
    %cst_91 = arith.constant 5.000000e-01 : f32
    %279 = vector.broadcast %cst_91 : f32 to vector<16x64xf32>
    %280 = arith.mulf %279, %278 : vector<16x64xf32>
    %cst_92 = arith.constant 4.471500e-02 : f32
    %281 = vector.broadcast %cst_92 : f32 to vector<16x64xf32>
    %282 = arith.mulf %281, %278 : vector<16x64xf32>
    %283 = arith.mulf %282, %278 : vector<16x64xf32>
    %284 = arith.mulf %283, %278 : vector<16x64xf32>
    %285 = arith.addf %278, %284 : vector<16x64xf32>
    %cst_93 = arith.constant 0.797884583 : f32
    %286 = vector.broadcast %cst_93 : f32 to vector<16x64xf32>
    %287 = arith.mulf %286, %285 : vector<16x64xf32>
    %288 = math.tanh %287 : vector<16x64xf32>
    %cst_94 = arith.constant 1.000000e+00 : f32
    %289 = vector.broadcast %cst_94 : f32 to vector<16x64xf32>
    %290 = arith.addf %289, %288 : vector<16x64xf32>
    %291 = arith.mulf %280, %290 : vector<16x64xf32>
    %c0_95 = arith.constant 0 : index
    %c0_96 = arith.constant 0 : index
    %292 = vector.load %arg15[%c0_95, %c0_96] : memref<64x64xf32, #tpu.memory_space<vmem>>, vector<64x64xf32>
    %cst_97 = arith.constant dense<0.000000e+00> : vector<16x64xf32>
    %293 = tpu.matmul %291, %292, %cst_97 {dimension_numbers = #tpu.dot_dimension_numbers<[1], [0], [0], [1], [0, 0, 1, 1], [], []>} : vector<16x64xf32>, vector<64x64xf32>, vector<16x64xf32> -> vector<16x64xf32>
    %c0_98 = arith.constant 0 : index
    %c0_99 = arith.constant 0 : index
    %294 = vector.load %arg16[%c0_98, %c0_99] : memref<1x64xf32, #tpu.memory_space<vmem>>, vector<1x64xf32>
    %295 = vector.broadcast %294 : vector<1x64xf32> to vector<16x64xf32>
    %296 = arith.addf %293, %295 : vector<16x64xf32>
    %297 = arith.addf %273, %296 : vector<16x64xf32>
    %c0_100 = arith.constant 0 : index
    %c0_101 = arith.constant 0 : index
    %298 = vector.load %arg19[%c0_100, %c0_101] : memref<1x64xf32, #tpu.memory_space<vmem>>, vector<1x64xf32>
    %c0_102 = arith.constant 0 : index
    %c0_103 = arith.constant 0 : index
    %299 = vector.load %arg20[%c0_102, %c0_103] : memref<1x64xf32, #tpu.memory_space<vmem>>, vector<1x64xf32>
    %cst_104 = arith.constant dense<0.000000e+00> : vector<16xf32>
    %300 = vector.multi_reduction <add>, %297, %cst_104 [1] : vector<16x64xf32> to vector<16xf32>
    %301 = vector.shape_cast %300 : vector<16xf32> to vector<16x1xf32>
    %cst_105 = arith.constant 6.400000e+01 : f32
    %302 = vector.broadcast %cst_105 : f32 to vector<16x1xf32>
    %303 = arith.divf %301, %302 : vector<16x1xf32>
    %304 = vector.broadcast %303 : vector<16x1xf32> to vector<16x64xf32>
    %305 = arith.subf %297, %304 : vector<16x64xf32>
    %306 = arith.mulf %305, %305 : vector<16x64xf32>
    %cst_106 = arith.constant dense<0.000000e+00> : vector<16xf32>
    %307 = vector.multi_reduction <add>, %306, %cst_106 [1] : vector<16x64xf32> to vector<16xf32>
    %308 = vector.shape_cast %307 : vector<16xf32> to vector<16x1xf32>
    %cst_107 = arith.constant 6.400000e+01 : f32
    %309 = vector.broadcast %cst_107 : f32 to vector<16x1xf32>
    %310 = arith.divf %308, %309 : vector<16x1xf32>
    %311 = vector.broadcast %303 : vector<16x1xf32> to vector<16x64xf32>
    %312 = arith.subf %297, %311 : vector<16x64xf32>
    %cst_108 = arith.constant 9.99999974E-6 : f32
    %313 = vector.broadcast %cst_108 : f32 to vector<16x1xf32>
    %314 = arith.addf %310, %313 : vector<16x1xf32>
    %315 = math.rsqrt %314 : vector<16x1xf32>
    %316 = vector.broadcast %315 : vector<16x1xf32> to vector<16x64xf32>
    %317 = arith.mulf %312, %316 : vector<16x64xf32>
    %318 = vector.broadcast %298 : vector<1x64xf32> to vector<16x64xf32>
    %319 = arith.mulf %317, %318 : vector<16x64xf32>
    %320 = vector.broadcast %299 : vector<1x64xf32> to vector<16x64xf32>
    %321 = arith.addf %319, %320 : vector<16x64xf32>
    %cst_109 = arith.constant dense<0.000000e+00> : vector<16xf32>
    %322 = vector.multi_reduction <add>, %321, %cst_109 [1] : vector<16x64xf32> to vector<16xf32>
    %323 = vector.shape_cast %322 : vector<16xf32> to vector<16x1xf32>
    %cst_110 = arith.constant 6.400000e+01 : f32
    %324 = vector.broadcast %cst_110 : f32 to vector<16x1xf32>
    %325 = arith.divf %323, %324 : vector<16x1xf32>
    %326 = vector.broadcast %325 : vector<16x1xf32> to vector<16x64xf32>
    %327 = arith.subf %321, %326 : vector<16x64xf32>
    %328 = arith.mulf %327, %327 : vector<16x64xf32>
    %cst_111 = arith.constant dense<0.000000e+00> : vector<16xf32>
    %329 = vector.multi_reduction <add>, %328, %cst_111 [1] : vector<16x64xf32> to vector<16xf32>
    %330 = vector.shape_cast %329 : vector<16xf32> to vector<16x1xf32>
    %cst_112 = arith.constant 6.400000e+01 : f32
    %331 = vector.broadcast %cst_112 : f32 to vector<16x1xf32>
    %332 = arith.divf %330, %331 : vector<16x1xf32>
    %333 = vector.broadcast %325 : vector<16x1xf32> to vector<16x64xf32>
    %334 = arith.subf %321, %333 : vector<16x64xf32>
    %cst_113 = arith.constant 9.99999974E-6 : f32
    %335 = vector.broadcast %cst_113 : f32 to vector<16x1xf32>
    %336 = arith.addf %332, %335 : vector<16x1xf32>
    %337 = math.rsqrt %336 : vector<16x1xf32>
    %338 = vector.broadcast %337 : vector<16x1xf32> to vector<16x64xf32>
    %339 = arith.mulf %334, %338 : vector<16x64xf32>
    %340 = vector.shape_cast %339 : vector<16x64xf32> to vector<2x8x64xf32>
    %c0_114 = arith.constant 0 : index
    %c0_115 = arith.constant 0 : index
    %341 = vector.load %arg21[%c0_114, %c0_115] : memref<1x64xf32, #tpu.memory_space<vmem>>, vector<1x64xf32>
    %342 = vector.shape_cast %341 : vector<1x64xf32> to vector<1x1x64xf32>
    %343 = vector.broadcast %342 : vector<1x1x64xf32> to vector<2x8x64xf32>
    %344 = arith.mulf %340, %343 : vector<2x8x64xf32>
    %cst_116 = arith.constant dense<0.000000e+00> : vector<2x8xf32>
    %345 = vector.multi_reduction <add>, %344, %cst_116 [2] : vector<2x8x64xf32> to vector<2x8xf32>
    %c0_117 = arith.constant 0 : index
    %c0_118 = arith.constant 0 : index
    %346 = vector.load %arg22[%c0_117, %c0_118] : memref<1x1xf32, #tpu.memory_space<vmem>>, vector<1x1xf32>
    %347 = vector.broadcast %346 : vector<1x1xf32> to vector<2x8xf32>
    %348 = arith.addf %345, %347 : vector<2x8xf32>
    %c0_119 = arith.constant 0 : index
    %c0_120 = arith.constant 0 : index
    %349 = vector.load %arg23[%c0_119, %c0_120] : memref<2x8xf32, #tpu.memory_space<vmem>>, vector<2x8xf32>
    tpu.vector_store %arg23[%c0_119, %c0_120], %348 {strides = array<i32>} : memref<2x8xf32, #tpu.memory_space<vmem>>, vector<2x8xf32>,
    return
  }
  func.func @transform_0(%arg0: i32) -> (i32, i32, i32) {
    %c0_i32 = arith.constant 0 : i32
    %c0_i32_0 = arith.constant 0 : i32
    %c0_i32_1 = arith.constant 0 : i32
    %c0_i32_2 = arith.constant 0 : i32
    return %c0_i32, %c0_i32_0, %c0_i32_1 : i32, i32, i32
  }
  func.func @transform_1(%arg0: i32) -> (i32, i32) {
    %c0_i32 = arith.constant 0 : i32
    %c0_i32_0 = arith.constant 0 : i32
    %c0_i32_1 = arith.constant 0 : i32
    return %c0_i32, %c0_i32_0 : i32, i32
  }
  func.func @transform_2(%arg0: i32) -> (i32, i32) {
    %c0_i32 = arith.constant 0 : i32
    %c0_i32_0 = arith.constant 0 : i32
    %c0_i32_1 = arith.constant 0 : i32
    return %c0_i32, %c0_i32_0 : i32, i32
  }
  func.func @transform_3(%arg0: i32) -> (i32, i32) {
    %c0_i32 = arith.constant 0 : i32
    %c0_i32_0 = arith.constant 0 : i32
    %c0_i32_1 = arith.constant 0 : i32
    return %c0_i32, %c0_i32_0 : i32, i32
  }
  func.func @transform_4(%arg0: i32) -> (i32, i32) {
    %c0_i32 = arith.constant 0 : i32
    %c0_i32_0 = arith.constant 0 : i32
    %c0_i32_1 = arith.constant 0 : i32
    return %c0_i32, %c0_i32_0 : i32, i32
  }
  func.func @transform_5(%arg0: i32) -> (i32, i32) {
    %c0_i32 = arith.constant 0 : i32
    %c0_i32_0 = arith.constant 0 : i32
    %c0_i32_1 = arith.constant 0 : i32
    return %c0_i32, %c0_i32_0 : i32, i32
  }
  func.func @transform_6(%arg0: i32) -> (i32, i32) {
    %c0_i32 = arith.constant 0 : i32
    %c0_i32_0 = arith.constant 0 : i32
    %c0_i32_1 = arith.constant 0 : i32
    return %c0_i32, %c0_i32_0 : i32, i32
  }
  func.func @transform_7(%arg0: i32) -> (i32, i32) {
    %c0_i32 = arith.constant 0 : i32
    %c0_i32_0 = arith.constant 0 : i32
    %c0_i32_1 = arith.constant 0 : i32
    return %c0_i32, %c0_i32_0 : i32, i32
  }
  func.func @transform_8(%arg0: i32) -> (i32, i32) {
    %c0_i32 = arith.constant 0 : i32
    %c0_i32_0 = arith.constant 0 : i32
    %c0_i32_1 = arith.constant 0 : i32
    return %c0_i32, %c0_i32_0 : i32, i32
  }
  func.func @transform_9(%arg0: i32) -> (i32, i32) {
    %c0_i32 = arith.constant 0 : i32
    %c0_i32_0 = arith.constant 0 : i32
    %c0_i32_1 = arith.constant 0 : i32
    return %c0_i32, %c0_i32_0 : i32, i32
  }
  func.func @transform_10(%arg0: i32) -> (i32, i32) {
    %c0_i32 = arith.constant 0 : i32
    %c0_i32_0 = arith.constant 0 : i32
    %c0_i32_1 = arith.constant 0 : i32
    return %c0_i32, %c0_i32_0 : i32, i32
  }
  func.func @transform_11(%arg0: i32) -> (i32, i32) {
    %c0_i32 = arith.constant 0 : i32
    %c0_i32_0 = arith.constant 0 : i32
    %c0_i32_1 = arith.constant 0 : i32
    return %c0_i32, %c0_i32_0 : i32, i32
  }
  func.func @transform_12(%arg0: i32) -> (i32, i32) {
    %c0_i32 = arith.constant 0 : i32
    %c0_i32_0 = arith.constant 0 : i32
    %c0_i32_1 = arith.constant 0 : i32
    return %c0_i32, %c0_i32_0 : i32, i32
  }
  func.func @transform_13(%arg0: i32) -> (i32, i32) {
    %c0_i32 = arith.constant 0 : i32
    %c0_i32_0 = arith.constant 0 : i32
    %c0_i32_1 = arith.constant 0 : i32
    return %c0_i32, %c0_i32_0 : i32, i32
  }
  func.func @transform_14(%arg0: i32) -> (i32, i32) {
    %c0_i32 = arith.constant 0 : i32
    %c0_i32_0 = arith.constant 0 : i32
    %c0_i32_1 = arith.constant 0 : i32
    return %c0_i32, %c0_i32_0 : i32, i32
  }
  func.func @transform_15(%arg0: i32) -> (i32, i32) {
    %c0_i32 = arith.constant 0 : i32
    %c0_i32_0 = arith.constant 0 : i32
    %c0_i32_1 = arith.constant 0 : i32
    return %c0_i32, %c0_i32_0 : i32, i32
  }
  func.func @transform_16(%arg0: i32) -> (i32, i32) {
    %c0_i32 = arith.constant 0 : i32
    %c0_i32_0 = arith.constant 0 : i32
    %c0_i32_1 = arith.constant 0 : i32
    return %c0_i32, %c0_i32_0 : i32, i32
  }
  func.func @transform_17(%arg0: i32) -> (i32, i32) {
    %c0_i32 = arith.constant 0 : i32
    %c0_i32_0 = arith.constant 0 : i32
    %c0_i32_1 = arith.constant 0 : i32
    return %c0_i32, %c0_i32_0 : i32, i32
  }
  func.func @transform_18(%arg0: i32) -> (i32, i32) {
    %c0_i32 = arith.constant 0 : i32
    %c0_i32_0 = arith.constant 0 : i32
    %c0_i32_1 = arith.constant 0 : i32
    return %c0_i32, %c0_i32_0 : i32, i32
  }
  func.func @transform_19(%arg0: i32) -> (i32, i32) {
    %c0_i32 = arith.constant 0 : i32
    %c0_i32_0 = arith.constant 0 : i32
    %c0_i32_1 = arith.constant 0 : i32
    return %c0_i32, %c0_i32_0 : i32, i32
  }
  func.func @transform_20(%arg0: i32) -> (i32, i32) {
    %c0_i32 = arith.constant 0 : i32
    %c0_i32_0 = arith.constant 0 : i32
    %c0_i32_1 = arith.constant 0 : i32
    return %c0_i32, %c0_i32_0 : i32, i32
  }
  func.func @transform_21(%arg0: i32) -> (i32, i32) {
    %c0_i32 = arith.constant 0 : i32
    %c0_i32_0 = arith.constant 0 : i32
    %c0_i32_1 = arith.constant 0 : i32
    return %c0_i32, %c0_i32_0 : i32, i32
  }
  func.func @transform_22(%arg0: i32) -> (i32, i32) {
    %c0_i32 = arith.constant 0 : i32
    %c0_i32_0 = arith.constant 0 : i32
    %c0_i32_1 = arith.constant 0 : i32
    return %c0_i32, %c0_i32_0 : i32, i32
  }
}

</mosaic_0001>

<llo_original>
// kernel: run_fused.1
$region0: #{run_fused.1}
  #allocation0 [shape = 'u32[]', space=smem, size = 0x4, offset = 0x4, fixed_abs, tag = 'smem constant byte address 0x4 - core index']
  #allocation1 [shape = 'u32[144,128]{1,0:T(1,128)}', space=vmem, size = 0x12000, scoped, tag = 'internal scratch']
  #allocation2 [shape = 'f32[1,1]{1,0:T(1,128)S(1)}', space=vmem, size = 0x200, scoped, tag = 'scoped memory for run_fused.1']
  %s0 = inlined_call_operand.vmem [shape: f32[2,1,16], index: 0, kind: input, shape index: {}]
  %s1 = inlined_call_operand.vmem [shape: f32[8,1], index: 1, kind: input, shape index: {}]
  %s2 = inlined_call_operand.hbm [shape: f32[16,64], index: 2, kind: input, shape index: {}]
  %s3 = inlined_call_operand.vmem [shape: f32[8,64], index: 3, kind: input, shape index: {}]
  %s4 = inlined_call_operand.hbm [shape: f32[64,64], index: 4, kind: input, shape index: {}]
  %s5 = inlined_call_operand.vmem [shape: f32[1,64], index: 5, kind: input, shape index: {}]
  %s6 = inlined_call_operand.hbm [shape: f32[64,64], index: 6, kind: input, shape index: {}]
  %s7 = inlined_call_operand.vmem [shape: f32[1,64], index: 7, kind: input, shape index: {}]
  %s8 = inlined_call_operand.hbm [shape: f32[64,64], index: 8, kind: input, shape index: {}]
  %s9 = inlined_call_operand.vmem [shape: f32[1,64], index: 9, kind: input, shape index: {}]
  %s10 = inlined_call_operand.hbm [shape: f32[64,64], index: 10, kind: input, shape index: {}]
  %s11 = inlined_call_operand.vmem [shape: f32[1,64], index: 11, kind: input, shape index: {}]
  %s12 = inlined_call_operand.hbm [shape: f32[64,64], index: 12, kind: input, shape index: {}]
  %s13 = inlined_call_operand.vmem [shape: f32[1,64], index: 13, kind: input, shape index: {}]
  %s14 = inlined_call_operand.hbm [shape: f32[64,64], index: 14, kind: input, shape index: {}]
  %s15 = inlined_call_operand.vmem [shape: f32[1,64], index: 15, kind: input, shape index: {}]
  %s16 = inlined_call_operand.vmem [shape: f32[1,64], index: 16, kind: input, shape index: {}]
  %s17 = inlined_call_operand.vmem [shape: f32[1,64], index: 17, kind: input, shape index: {}]
  %s18 = inlined_call_operand.vmem [shape: f32[1,64], index: 18, kind: input, shape index: {}]
  %s19 = inlined_call_operand.vmem [shape: f32[1,64], index: 19, kind: input, shape index: {}]
  %s20 = inlined_call_operand.vmem [shape: f32[1,64], index: 20, kind: input, shape index: {}]
  %s21 = inlined_call_operand.<no memory space> [shape: f32[1,1], index: 21, kind: input, shape index: {}]
  %s22 = inlined_call_operand.hbm [shape: f32[2,8], index: 22, kind: output, shape index: {}]
  %s23 = sld [smem:[#allocation0]]
  $region126: #{run_fused.1} parent=0
    _
  %s25 = ssub.s32 1, %s23
  %s26 = scalar_select 0, %s25, %s23
  %v27 = vstv %s21
  %28 = vst [vmem:[#allocation2] sm:$0x1] %v27
  $region1: #{run_fused.1} parent=0
    #allocation3 [shape = 'u8[8192]{0}', space=vmem, size = 0x2000, scoped, tag = 'input window, operand 2, single buffered']
    #allocation4 [shape = 's32[1]{0}', space=sflag, size = 0x4, scoped, tag = 'scoped memory for run_fused.1']
    #allocation5 [shape = 's32[1]{0}', space=sflag, size = 0x4, scoped, tag = 'scoped memory for run_fused.1']
    #allocation6 [shape = 'u8[32768]{0}', space=vmem, size = 0x8000, scoped, tag = 'input window, operand 4, single buffered']
    #allocation7 [shape = 's32[1]{0}', space=sflag, size = 0x4, scoped, tag = 'scoped memory for run_fused.1']
    #allocation8 [shape = 'u8[32768]{0}', space=vmem, size = 0x8000, scoped, tag = 'input window, operand 6, single buffered']
    #allocation9 [shape = 'u8[32768]{0}', space=vmem, size = 0x8000, scoped, tag = 'input window, operand 8, single buffered']
    #allocation10 [shape = 's32[1]{0}', space=sflag, size = 0x4, scoped, tag = 'scoped memory for run_fused.1']
    #allocation11 [shape = 'u8[32768]{0}', space=vmem, size = 0x8000, scoped, tag = 'input window, operand 10, single buffered']
    #allocation12 [shape = 'u8[32768]{0}', space=vmem, size = 0x8000, scoped, tag = 'input window, operand 12, single buffered']
    #allocation13 [shape = 's32[1]{0}', space=sflag, size = 0x4, scoped, tag = 'scoped memory for run_fused.1']
    #allocation14 [shape = 'u8[32768]{0}', space=vmem, size = 0x8000, scoped, tag = 'input window, operand 14, single buffered']
    #allocation15 [shape = 'u8[1024]{0}', space=vmem, size = 0x400, scoped, tag = 'output window, operand 0, single buffered']
    %29 = vsyncpa [#allocation4], 0
    %30 = vsyncpa [#allocation7], 0
    %31 = vsyncpa [#allocation10], 0
    %32 = vsyncpa [#allocation13], 0
    %33 = vsyncpa [#allocation5], 0
    // Predicated region
    $region2: #{run_fused.1} parent=1 // pred_check
      _
    $region3: #{run_fused.1} parent=1 // pred_check_branch
      %35 = sbr.rel (0) target = $region5
    $region4: #{run_fused.1} parent=1 // pred_region
      _
    $region5: #{run_fused.1} parent=1 // pred_fallthru
      _
    // Predicated region
    $region6: #{run_fused.1} parent=1 // pred_check
      _
    $region7: #{run_fused.1} parent=1 // pred_check_branch
      %37 = sbr.rel (0) target = $region9
    $region8: #{run_fused.1} parent=1 // pred_region
      _
    $region9: #{run_fused.1} parent=1 // pred_fallthru
      _
    // Predicated region
    $region10: #{run_fused.1} parent=1 // pred_check
      _
    $region11: #{run_fused.1} parent=1 // pred_check_branch
      %39 = sbr.rel (0) target = $region13
    $region12: #{run_fused.1} parent=1 // pred_region
      %s41 = ssub.s32 256, 256
      %42 = vsyncadd [#allocation4], %s41
      %s43 = sshll.u32 [#allocation3], 4
      %s44 = int_to_ptr.vmem [resolvable:$true] %s43
      %49 = dma.hbm_to_vmem [thread:$0]  %s2, 256, %s44, [#allocation4], 128, 128, 8
    $region13: #{run_fused.1} parent=1 // pred_fallthru
      _
    // Predicated region
    $region14: #{run_fused.1} parent=1 // pred_check
      _
    $region15: #{run_fused.1} parent=1 // pred_check_branch
      %51 = sbr.rel (0) target = $region17
    $region16: #{run_fused.1} parent=1 // pred_region
      _
    $region17: #{run_fused.1} parent=1 // pred_fallthru
      _
    // Predicated region
    $region18: #{run_fused.1} parent=1 // pred_check
      _
    $region19: #{run_fused.1} parent=1 // pred_check_branch
      %53 = sbr.rel (0) target = $region21
    $region20: #{run_fused.1} parent=1 // pred_region
      %s55 = ssub.s32 1024, 1024
      %56 = vsyncadd [#allocation7], %s55
      %s57 = sshll.u32 [#allocation6], 4
      %s58 = int_to_ptr.vmem [resolvable:$true] %s57
      %63 = dma.hbm_to_vmem [thread:$0]  %s4, 1024, %s58, [#allocation7], 128, 128, 8
    $region21: #{run_fused.1} parent=1 // pred_fallthru
      _
    // Predicated region
    $region22: #{run_fused.1} parent=1 // pred_check
      _
    $region23: #{run_fused.1} parent=1 // pred_check_branch
      %65 = sbr.rel (0) target = $region25
    $region24: #{run_fused.1} parent=1 // pred_region
      _
    $region25: #{run_fused.1} parent=1 // pred_fallthru
      _
    // Predicated region
    $region26: #{run_fused.1} parent=1 // pred_check
      _
    $region27: #{run_fused.1} parent=1 // pred_check_branch
      %67 = sbr.rel (0) target = $region29
    $region28: #{run_fused.1} parent=1 // pred_region
      %s69 = ssub.s32 1024, 1024
      %70 = vsyncadd [#allocation7], %s69
      %s71 = sshll.u32 [#allocation8], 4
      %s72 = int_to_ptr.vmem [resolvable:$true] %s71
      %77 = dma.hbm_to_vmem [thread:$0]  %s6, 1024, %s72, [#allocation7], 128, 128, 8
    $region29: #{run_fused.1} parent=1 // pred_fallthru
      _
    // Predicated region
    $region30: #{run_fused.1} parent=1 // pred_check
      _
    $region31: #{run_fused.1} parent=1 // pred_check_branch
      %79 = sbr.rel (0) target = $region33
    $region32: #{run_fused.1} parent=1 // pred_region
      _
    $region33: #{run_fused.1} parent=1 // pred_fallthru
      _
    // Predicated region
    $region34: #{run_fused.1} parent=1 // pred_check
      _
    $region35: #{run_fused.1} parent=1 // pred_check_branch
      %81 = sbr.rel (0) target = $region37
    $region36: #{run_fused.1} parent=1 // pred_region
      %s83 = ssub.s32 1024, 1024
      %84 = vsyncadd [#allocation10], %s83
      %s85 = sshll.u32 [#allocation9], 4
      %s86 = int_to_ptr.vmem [resolvable:$true] %s85
      %91 = dma.hbm_to_vmem [thread:$0]  %s8, 1024, %s86, [#allocation10], 128, 128, 8
    $region37: #{run_fused.1} parent=1 // pred_fallthru
      _
    // Predicated region
    $region38: #{run_fused.1} parent=1 // pred_check
      _
    $region39: #{run_fused.1} parent=1 // pred_check_branch
      %93 = sbr.rel (0) target = $region41
    $region40: #{run_fused.1} parent=1 // pred_region
      _
    $region41: #{run_fused.1} parent=1 // pred_fallthru
      _
    // Predicated region
    $region42: #{run_fused.1} parent=1 // pred_check
      _
    $region43: #{run_fused.1} parent=1 // pred_check_branch
      %95 = sbr.rel (0) target = $region45
    $region44: #{run_fused.1} parent=1 // pred_region
      %s97 = ssub.s32 1024, 1024
      %98 = vsyncadd [#allocation10], %s97
      %s99 = sshll.u32 [#allocation11], 4
      %s100 = int_to_ptr.vmem [resolvable:$true] %s99
      %105 = dma.hbm_to_vmem [thread:$0]  %s10, 1024, %s100, [#allocation10], 128, 128, 8
    $region45: #{run_fused.1} parent=1 // pred_fallthru
      _
    // Predicated region
    $region46: #{run_fused.1} parent=1 // pred_check
      _
    $region47: #{run_fused.1} parent=1 // pred_check_branch
      %107 = sbr.rel (0) target = $region49
    $region48: #{run_fused.1} parent=1 // pred_region
      _
    $region49: #{run_fused.1} parent=1 // pred_fallthru
      _
    // Predicated region
    $region50: #{run_fused.1} parent=1 // pred_check
      _
    $region51: #{run_fused.1} parent=1 // pred_check_branch
      %109 = sbr.rel (0) target = $region53
    $region52: #{run_fused.1} parent=1 // pred_region
      %s111 = ssub.s32 1024, 1024
      %112 = vsyncadd [#allocation13], %s111
      %s113 = sshll.u32 [#allocation12], 4
      %s114 = int_to_ptr.vmem [resolvable:$true] %s113
      %119 = dma.hbm_to_vmem [thread:$0]  %s12, 1024, %s114, [#allocation13], 128, 128, 8
    $region53: #{run_fused.1} parent=1 // pred_fallthru
      _
    // Predicated region
    $region54: #{run_fused.1} parent=1 // pred_check
      _
    $region55: #{run_fused.1} parent=1 // pred_check_branch
      %121 = sbr.rel (0) target = $region57
    $region56: #{run_fused.1} parent=1 // pred_region
      _
    $region57: #{run_fused.1} parent=1 // pred_fallthru
      _
    // Predicated region
    $region58: #{run_fused.1} parent=1 // pred_check
      _
    $region59: #{run_fused.1} parent=1 // pred_check_branch
      %123 = sbr.rel (0) target = $region61
    $region60: #{run_fused.1} parent=1 // pred_region
      %s125 = ssub.s32 1024, 1024
      %126 = vsyncadd [#allocation13], %s125
      %s127 = sshll.u32 [#allocation14], 4
      %s128 = int_to_ptr.vmem [resolvable:$true] %s127
      %133 = dma.hbm_to_vmem [thread:$0]  %s14, 1024, %s128, [#allocation13], 128, 128, 8
    $region61: #{run_fused.1} parent=1 // pred_fallthru
      _
    // Predicated region
    $region62: #{run_fused.1} parent=1 // pred_check
      _
    $region63: #{run_fused.1} parent=1 // pred_check_branch
      %135 = sbr.rel (0) target = $region65
    $region64: #{run_fused.1} parent=1 // pred_region
      _
    $region65: #{run_fused.1} parent=1 // pred_fallthru
      _
    // Predicated region
    $region66: #{run_fused.1} parent=1 // pred_check
      _
    $region67: #{run_fused.1} parent=1 // pred_check_branch
      %137 = sbr.rel (0) target = $region69
    $region68: #{run_fused.1} parent=1 // pred_region
      _
    $region69: #{run_fused.1} parent=1 // pred_fallthru
      _
    // Predicated region
    $region70: #{run_fused.1} parent=1 // pred_check
      _
    $region71: #{run_fused.1} parent=1 // pred_check_branch
      %139 = sbr.rel (0) target = $region73
    $region72: #{run_fused.1} parent=1 // pred_region
      _
    $region73: #{run_fused.1} parent=1 // pred_fallthru
      _
    // Predicated region
    $region74: #{run_fused.1} parent=1 // pred_check
      _
    $region75: #{run_fused.1} parent=1 // pred_check_branch
      %141 = sbr.rel (0) target = $region77
    $region76: #{run_fused.1} parent=1 // pred_region
      _
    $region77: #{run_fused.1} parent=1 // pred_fallthru
      _
    // Predicated region
    $region78: #{run_fused.1} parent=1 // pred_check
      _
    $region79: #{run_fused.1} parent=1 // pred_check_branch
      %143 = sbr.rel (0) target = $region81
    $region80: #{run_fused.1} parent=1 // pred_region
      _
    $region81: #{run_fused.1} parent=1 // pred_fallthru
      _
    // Predicated region
    $region82: #{run_fused.1} parent=1 // pred_check
      _
    $region83: #{run_fused.1} parent=1 // pred_check_branch
      %145 = sbr.rel (0) target = $region85
    $region84: #{run_fused.1} parent=1 // pred_region
      _
    $region85: #{run_fused.1} parent=1 // pred_fallthru
      _
    // Predicated region
    $region86: #{run_fused.1} parent=1 // pred_check
      _
    $region87: #{run_fused.1} parent=1 // pred_check_branch
      %147 = sbr.rel (0) target = $region89
    $region88: #{run_fused.1} parent=1 // pred_region
      _
    $region89: #{run_fused.1} parent=1 // pred_fallthru
      _
    // Predicated region
    $region90: #{run_fused.1} parent=1 // pred_check
      _
    $region91: #{run_fused.1} parent=1 // pred_check_branch
      %149 = sbr.rel (0) target = $region93
    $region92: #{run_fused.1} parent=1 // pred_region
      %150 = dma.done [#allocation4], 256
    $region93: #{run_fused.1} parent=1 // pred_fallthru
      _
    // Predicated region
    $region94: #{run_fused.1} parent=1 // pred_check
      _
    $region95: #{run_fused.1} parent=1 // pred_check_branch
      %152 = sbr.rel (0) target = $region97
    $region96: #{run_fused.1} parent=1 // pred_region
      %153 = dma.done [#allocation7], 1024
    $region97: #{run_fused.1} parent=1 // pred_fallthru
      _
    // Predicated region
    $region98: #{run_fused.1} parent=1 // pred_check
      _
    $region99: #{run_fused.1} parent=1 // pred_check_branch
      %155 = sbr.rel (0) target = $region101
    $region100: #{run_fused.1} parent=1 // pred_region
      %156 = dma.done [#allocation7], 1024
    $region101: #{run_fused.1} parent=1 // pred_fallthru
      _
    // Predicated region
    $region102: #{run_fused.1} parent=1 // pred_check
      _
    $region103: #{run_fused.1} parent=1 // pred_check_branch
      %158 = sbr.rel (0) target = $region105
    $region104: #{run_fused.1} parent=1 // pred_region
      %159 = dma.done [#allocation10], 1024
    $region105: #{run_fused.1} parent=1 // pred_fallthru
      _
    // Predicated region
    $region106: #{run_fused.1} parent=1 // pred_check
      _
    $region107: #{run_fused.1} parent=1 // pred_check_branch
      %161 = sbr.rel (0) target = $region109
    $region108: #{run_fused.1} parent=1 // pred_region
      %162 = dma.done [#allocation10], 1024
    $region109: #{run_fused.1} parent=1 // pred_fallthru
      _
    // Predicated region
    $region110: #{run_fused.1} parent=1 // pred_check
      _
    $region111: #{run_fused.1} parent=1 // pred_check_branch
      %164 = sbr.rel (0) target = $region113
    $region112: #{run_fused.1} parent=1 // pred_region
      %165 = dma.done [#allocation13], 1024
    $region113: #{run_fused.1} parent=1 // pred_fallthru
      _
    // Predicated region
    $region114: #{run_fused.1} parent=1 // pred_check
      _
    $region115: #{run_fused.1} parent=1 // pred_check_branch
      %167 = sbr.rel (0) target = $region117
    $region116: #{run_fused.1} parent=1 // pred_region
      %168 = dma.done [#allocation13], 1024
    $region117: #{run_fused.1} parent=1 // pred_fallthru
      _
    %v169 = vld [vmem:[%s0] sm:$0x1]
    %v170 = vld [vmem:[%s0 + $0x1] sm:$0x1]
    %v171 = vld [vmem:[#allocation3] sm:$0xff]
    %v172 = vld [vmem:[#allocation3 + $0x8] sm:$0xff]
    %v175 = vcombine.low %v169, %v170
    %v177 = vunpack.c.l.s4 1966171168
    %v178 = vunpack.c.0.s8 %v177
    %v179 = vlaneseq
    %v180 = vshrl.u32 %v179, 7
    %v181 = vsub.s32 %v178, %v180
    %v182 = vrot.slane %v175, %v181
    %v184 = vunpack.c.l.s4 1966171168
    %v185 = vunpack.c.0.s8 %v184
    %v186 = vlaneseq
    %v187 = vshrl.u32 %v186, 7
    %v188 = vsub.s32 %v185, %v187
    %v189 = vrot.slane %v182, %v188
    %vm190 = vcmask 130048
    %v191 = vsel %vm190, %v189, 0
    %193 = vmatprep.subr.mxu0 0.0
    %194 = vmatpush1.msra.mxu0 0.0
    %195 = vmatprep.subr.mxu0 0.0
    %196 = vmatpush1.msra.mxu0 0.0
    %197 = vmatprep.subr.mxu0 0.0
    %198 = vmatpush1.msra.mxu0 0.0
    %199 = vmatprep.subr.mxu0 0.0
    %200 = vmatpush1.msra.mxu0 0.0
    %201 = vmatprep.subr.mxu0 0.0
    %202 = vmatpush1.msra.mxu0 0.0
    %203 = vmatprep.subr.mxu0 0.0
    %204 = vmatpush1.msra.mxu0 0.0
    %205 = vmatprep.subr.mxu0 0.0
    %206 = vmatpush1.msra.mxu0 0.0
    %207 = vmatprep.subr.mxu0 0.0
    %208 = vmatpush1.msra.mxu0 0.0
    %209 = vmatprep.subr.mxu0 0.0
    %210 = vmatpush1.msra.mxu0 0.0
    %211 = vmatprep.subr.mxu0 0.0
    %212 = vmatpush1.msra.mxu0 0.0
    %213 = vmatprep.subr.mxu0 0.0
    %214 = vmatpush1.msra.mxu0 0.0
    %215 = vmatprep.subr.mxu0 0.0
    %216 = vmatpush1.msra.mxu0 0.0
    %217 = vmatprep.subr.mxu0 0.0
    %218 = vmatpush1.msra.mxu0 0.0
    %219 = vmatprep.subr.mxu0 0.0
    %220 = vmatpush1.msra.mxu0 0.0
    %221 = vmatprep.subr.mxu0 0.0
    %222 = vmatpush1.msra.mxu0 %v172
    %223 = vmatprep.subr.mxu0 0.0
    %224 = vmatpush1.msra.mxu0 %v171
    %225 = vmatprep.subr.mxu0 0.0
    %226 = vmatpush2.msra.mxu0 0.0
    %227 = vmatprep.subr.mxu0 0.0
    %228 = vmatpush2.msra.mxu0 0.0
    %229 = vmatprep.subr.mxu0 0.0
    %230 = vmatpush2.msra.mxu0 0.0
    %231 = vmatprep.subr.mxu0 0.0
    %232 = vmatpush2.msra.mxu0 0.0
    %233 = vmatprep.subr.mxu0 0.0
    %234 = vmatpush2.msra.mxu0 0.0
    %235 = vmatprep.subr.mxu0 0.0
    %236 = vmatpush2.msra.mxu0 0.0
    %237 = vmatprep.subr.mxu0 0.0
    %238 = vmatpush2.msra.mxu0 0.0
    %239 = vmatprep.subr.mxu0 0.0
    %240 = vmatpush2.msra.mxu0 0.0
    %241 = vmatprep.subr.mxu0 0.0
    %242 = vmatpush2.msra.mxu0 0.0
    %243 = vmatprep.subr.mxu0 0.0
    %244 = vmatpush2.msra.mxu0 0.0
    %245 = vmatprep.subr.mxu0 0.0
    %246 = vmatpush2.msra.mxu0 0.0
    %247 = vmatprep.subr.mxu0 0.0
    %248 = vmatpush2.msra.mxu0 0.0
    %249 = vmatprep.subr.mxu0 0.0
    %250 = vmatpush2.msra.mxu0 0.0
    %251 = vmatprep.subr.mxu0 0.0
    %252 = vmatpush2.msra.mxu0 0.0
    %253 = vmatprep.subr.mxu0 0.0
    %254 = vmatpush2.msra.mxu0 0.0
    %255 = vmatprep.subr.mxu0 0.0
    %256 = vmatpush2.msra.mxu0 0.0
    %257 = vmatprep.mubr.f32.mxu0 0.0
    %258 = vmatmul.mubr.f32.gmra.mxu0 %v191
    %v259 = vpop.f32.mrf.mxu0
    %v260 = vadd.f32 0.0, %v259
    %v261 = vpop.f32.mrf.mxu0
    %262 = vdwg.mxu0
    %v263 = vld [vmem:[%s1] sm:$0xff]
    %v266 = vunpack.c.l.s4 1966171168
    %v267 = vunpack.c.0.s8 %v266
    %v268 = vlaneseq
    %v269 = vshrl.u32 %v268, 7
    %v270 = vsub.s32 %v267, %v269
    %v271 = vrot.slane %v260, %v270
    %v272 = vcombine.high %v271, %v271
    %v274 = vunpack.c.l.s4 1966171168
    %v275 = vunpack.c.0.s8 %v274
    %v276 = vlaneseq
    %v277 = vshrl.u32 %v276, 7
    %v278 = vsub.s32 %v275, %v277
    %v279 = vrot.slane %v271, %v278
    %v281 = vunpack.c.l.s4 1966171168
    %v282 = vunpack.c.0.s8 %v281
    %v283 = vlaneseq
    %v284 = vshrl.u32 %v283, 7
    %v285 = vsub.s32 %v282, %v284
    %v286 = vrot.slane %v272, %v285
    %288 = vset.pattern.permute.xlu0 0
    %289 = vperm.xlu0 %288, %v263
    %v290 = vpop.permute.xlu0 %289
    %v292 = vlaneseq
    %v293 = vshrl.u32 %v292, 7
    %v294 = vsub.s32 0, %v293
    %v295 = vrot.slane %v279, %v294
    %v296 = vlaneseq
    %v297 = vshrl.u32 %v296, 7
    %v298 = vsub.s32 0, %v297
    %v299 = vrot.slane %v286, %v298
    %v302 = vmul.f32 %v290, %v295
    %v303 = vmul.f32 %v290, %v299
    %v304 = vld [vmem:[%s3] sm:$0xff]
    %v305 = vadd.f32 %v302, %v304
    %v306 = vadd.f32 %v303, %v304
    %v307 = vmax.f32 %v305, 0.0
    %v308 = vmax.f32 %v306, 0.0
    %v309 = vld [vmem:[#allocation6] sm:$0xff]
    %v310 = vld [vmem:[#allocation6 + $0x8] sm:$0xff]
    %v311 = vld [vmem:[#allocation6 + $0x10] sm:$0xff]
    %v312 = vld [vmem:[#allocation6 + $0x18] sm:$0xff]
    %v313 = vld [vmem:[#allocation6 + $0x20] sm:$0xff]
    %v314 = vld [vmem:[#allocation6 + $0x28] sm:$0xff]
    %v315 = vld [vmem:[#allocation6 + $0x30] sm:$0xff]
    %v316 = vld [vmem:[#allocation6 + $0x38] sm:$0xff]
    %v317 = vld [vmem:[%s5] sm:$0x1]
    %v319 = vlaneseq
    %v320 = vshrl.u32 %v319, 7
    %v321 = vsub.s32 0, %v320
    %v322 = vrot.slane %v317, %v321
    %vm324 = vcmask 523264
    %v326 = vsel %vm324, %v307, 0
    %v329 = vsel %vm324, %v308, 0
    %331 = vmatprep.subr.mxu0 0.0
    %332 = vmatpush1.msra.mxu0 0.0
    %333 = vmatprep.subr.mxu0 0.0
    %334 = vmatpush1.msra.mxu0 0.0
    %335 = vmatprep.subr.mxu0 0.0
    %336 = vmatpush1.msra.mxu0 0.0
    %337 = vmatprep.subr.mxu0 0.0
    %338 = vmatpush1.msra.mxu0 0.0
    %339 = vmatprep.subr.mxu0 0.0
    %340 = vmatpush1.msra.mxu0 0.0
    %341 = vmatprep.subr.mxu0 0.0
    %342 = vmatpush1.msra.mxu0 0.0
    %343 = vmatprep.subr.mxu0 0.0
    %344 = vmatpush1.msra.mxu0 0.0
    %345 = vmatprep.subr.mxu0 0.0
    %346 = vmatpush1.msra.mxu0 0.0
    %347 = vmatprep.subr.mxu0 0.0
    %348 = vmatpush1.msra.mxu0 %v316
    %349 = vmatprep.subr.mxu0 0.0
    %350 = vmatpush1.msra.mxu0 %v315
    %351 = vmatprep.subr.mxu0 0.0
    %352 = vmatpush1.msra.mxu0 %v314
    %353 = vmatprep.subr.mxu0 0.0
    %354 = vmatpush1.msra.mxu0 %v313
    %355 = vmatprep.subr.mxu0 0.0
    %356 = vmatpush1.msra.mxu0 %v312
    %357 = vmatprep.subr.mxu0 0.0
    %358 = vmatpush1.msra.mxu0 %v311
    %359 = vmatprep.subr.mxu0 0.0
    %360 = vmatpush1.msra.mxu0 %v310
    %361 = vmatprep.subr.mxu0 0.0
    %362 = vmatpush1.msra.mxu0 %v309
    %363 = vmatprep.subr.mxu0 0.0
    %364 = vmatpush2.msra.mxu0 0.0
    %365 = vmatprep.subr.mxu0 0.0
    %366 = vmatpush2.msra.mxu0 0.0
    %367 = vmatprep.subr.mxu0 0.0
    %368 = vmatpush2.msra.mxu0 0.0
    %369 = vmatprep.subr.mxu0 0.0
    %370 = vmatpush2.msra.mxu0 0.0
    %371 = vmatprep.subr.mxu0 0.0
    %372 = vmatpush2.msra.mxu0 0.0
    %373 = vmatprep.subr.mxu0 0.0
    %374 = vmatpush2.msra.mxu0 0.0
    %375 = vmatprep.subr.mxu0 0.0
    %376 = vmatpush2.msra.mxu0 0.0
    %377 = vmatprep.subr.mxu0 0.0
    %378 = vmatpush2.msra.mxu0 0.0
    %379 = vmatprep.subr.mxu0 0.0
    %380 = vmatpush2.msra.mxu0 0.0
    %381 = vmatprep.subr.mxu0 0.0
    %382 = vmatpush2.msra.mxu0 0.0
    %383 = vmatprep.subr.mxu0 0.0
    %384 = vmatpush2.msra.mxu0 0.0
    %385 = vmatprep.subr.mxu0 0.0
    %386 = vmatpush2.msra.mxu0 0.0
    %387 = vmatprep.subr.mxu0 0.0
    %388 = vmatpush2.msra.mxu0 0.0
    %389 = vmatprep.subr.mxu0 0.0
    %390 = vmatpush2.msra.mxu0 0.0
    %391 = vmatprep.subr.mxu0 0.0
    %392 = vmatpush2.msra.mxu0 0.0
    %393 = vmatprep.subr.mxu0 0.0
    %394 = vmatpush2.msra.mxu0 0.0
    %395 = vmatprep.mubr.f32.mxu0 0.0
    %396 = vmatmul.mubr.f32.gmra.mxu0 %v326
    %v397 = vpop.f32.mrf.mxu0
    %v398 = vadd.f32 %v322, %v397
    %v399 = vpop.f32.mrf.mxu0
    %400 = vmatprep.mubr.f32.mxu0 0.0
    %401 = vmatmul.mubr.f32.gmra.mxu0 %v329
    %v402 = vpop.f32.mrf.mxu0
    %v403 = vadd.f32 %v322, %v402
    %v404 = vpop.f32.mrf.mxu0
    %405 = vdwg.mxu0
    %v406 = vld [vmem:[#allocation8] sm:$0xff]
    %v407 = vld [vmem:[#allocation8 + $0x8] sm:$0xff]
    %v408 = vld [vmem:[#allocation8 + $0x10] sm:$0xff]
    %v409 = vld [vmem:[#allocation8 + $0x18] sm:$0xff]
    %v410 = vld [vmem:[#allocation8 + $0x20] sm:$0xff]
    %v411 = vld [vmem:[#allocation8 + $0x28] sm:$0xff]
    %v412 = vld [vmem:[#allocation8 + $0x30] sm:$0xff]
    %v413 = vld [vmem:[#allocation8 + $0x38] sm:$0xff]
    %v414 = vld [vmem:[%s7] sm:$0x1]
    %v416 = vlaneseq
    %v417 = vshrl.u32 %v416, 7
    %v418 = vsub.s32 0, %v417
    %v419 = vrot.slane %v414, %v418
    %421 = vmatprep.subr.mxu0 0.0
    %422 = vmatpush1.msra.mxu0 0.0
    %423 = vmatprep.subr.mxu0 0.0
    %424 = vmatpush1.msra.mxu0 0.0
    %425 = vmatprep.subr.mxu0 0.0
    %426 = vmatpush1.msra.mxu0 0.0
    %427 = vmatprep.subr.mxu0 0.0
    %428 = vmatpush1.msra.mxu0 0.0
    %429 = vmatprep.subr.mxu0 0.0
    %430 = vmatpush1.msra.mxu0 0.0
    %431 = vmatprep.subr.mxu0 0.0
    %432 = vmatpush1.msra.mxu0 0.0
    %433 = vmatprep.subr.mxu0 0.0
    %434 = vmatpush1.msra.mxu0 0.0
    %435 = vmatprep.subr.mxu0 0.0
    %436 = vmatpush1.msra.mxu0 0.0
    %437 = vmatprep.subr.mxu0 0.0
    %438 = vmatpush1.msra.mxu0 %v413
    %439 = vmatprep.subr.mxu0 0.0
    %440 = vmatpush1.msra.mxu0 %v412
    %441 = vmatprep.subr.mxu0 0.0
    %442 = vmatpush1.msra.mxu0 %v411
    %443 = vmatprep.subr.mxu0 0.0
    %444 = vmatpush1.msra.mxu0 %v410
    %445 = vmatprep.subr.mxu0 0.0
    %446 = vmatpush1.msra.mxu0 %v409
    %447 = vmatprep.subr.mxu0 0.0
    %448 = vmatpush1.msra.mxu0 %v408
    %449 = vmatprep.subr.mxu0 0.0
    %450 = vmatpush1.msra.mxu0 %v407
    %451 = vmatprep.subr.mxu0 0.0
    %452 = vmatpush1.msra.mxu0 %v406
    %453 = vmatprep.subr.mxu0 0.0
    %454 = vmatpush2.msra.mxu0 0.0
    %455 = vmatprep.subr.mxu0 0.0
    %456 = vmatpush2.msra.mxu0 0.0
    %457 = vmatprep.subr.mxu0 0.0
    %458 = vmatpush2.msra.mxu0 0.0
    %459 = vmatprep.subr.mxu0 0.0
    %460 = vmatpush2.msra.mxu0 0.0
    %461 = vmatprep.subr.mxu0 0.0
    %462 = vmatpush2.msra.mxu0 0.0
    %463 = vmatprep.subr.mxu0 0.0
    %464 = vmatpush2.msra.mxu0 0.0
    %465 = vmatprep.subr.mxu0 0.0
    %466 = vmatpush2.msra.mxu0 0.0
    %467 = vmatprep.subr.mxu0 0.0
    %468 = vmatpush2.msra.mxu0 0.0
    %469 = vmatprep.subr.mxu0 0.0
    %470 = vmatpush2.msra.mxu0 0.0
    %471 = vmatprep.subr.mxu0 0.0
    %472 = vmatpush2.msra.mxu0 0.0
    %473 = vmatprep.subr.mxu0 0.0
    %474 = vmatpush2.msra.mxu0 0.0
    %475 = vmatprep.subr.mxu0 0.0
    %476 = vmatpush2.msra.mxu0 0.0
    %477 = vmatprep.subr.mxu0 0.0
    %478 = vmatpush2.msra.mxu0 0.0
    %479 = vmatprep.subr.mxu0 0.0
    %480 = vmatpush2.msra.mxu0 0.0
    %481 = vmatprep.subr.mxu0 0.0
    %482 = vmatpush2.msra.mxu0 0.0
    %483 = vmatprep.subr.mxu0 0.0
    %484 = vmatpush2.msra.mxu0 0.0
    %485 = vmatprep.mubr.f32.mxu0 0.0
    %486 = vmatmul.mubr.f32.gmra.mxu0 %v326
    %v487 = vpop.f32.mrf.mxu0
    %v488 = vadd.f32 %v419, %v487
    %v489 = vpop.f32.mrf.mxu0
    %490 = vmatprep.mubr.f32.mxu0 0.0
    %491 = vmatmul.mubr.f32.gmra.mxu0 %v329
    %v492 = vpop.f32.mrf.mxu0
    %v493 = vadd.f32 %v419, %v492
    %v494 = vpop.f32.mrf.mxu0
    %495 = vdwg.mxu0
    %v496 = vld [vmem:[#allocation9] sm:$0xff]
    %v497 = vld [vmem:[#allocation9 + $0x8] sm:$0xff]
    %v498 = vld [vmem:[#allocation9 + $0x10] sm:$0xff]
    %v499 = vld [vmem:[#allocation9 + $0x18] sm:$0xff]
    %v500 = vld [vmem:[#allocation9 + $0x20] sm:$0xff]
    %v501 = vld [vmem:[#allocation9 + $0x28] sm:$0xff]
    %v502 = vld [vmem:[#allocation9 + $0x30] sm:$0xff]
    %v503 = vld [vmem:[#allocation9 + $0x38] sm:$0xff]
    %v504 = vld [vmem:[%s9] sm:$0x1]
    %v506 = vlaneseq
    %v507 = vshrl.u32 %v506, 7
    %v508 = vsub.s32 0, %v507
    %v509 = vrot.slane %v504, %v508
    %511 = vmatprep.subr.mxu0 0.0
    %512 = vmatpush1.msra.mxu0 0.0
    %513 = vmatprep.subr.mxu0 0.0
    %514 = vmatpush1.msra.mxu0 0.0
    %515 = vmatprep.subr.mxu0 0.0
    %516 = vmatpush1.msra.mxu0 0.0
    %517 = vmatprep.subr.mxu0 0.0
    %518 = vmatpush1.msra.mxu0 0.0
    %519 = vmatprep.subr.mxu0 0.0
    %520 = vmatpush1.msra.mxu0 0.0
    %521 = vmatprep.subr.mxu0 0.0
    %522 = vmatpush1.msra.mxu0 0.0
    %523 = vmatprep.subr.mxu0 0.0
    %524 = vmatpush1.msra.mxu0 0.0
    %525 = vmatprep.subr.mxu0 0.0
    %526 = vmatpush1.msra.mxu0 0.0
    %527 = vmatprep.subr.mxu0 0.0
    %528 = vmatpush1.msra.mxu0 %v503
    %529 = vmatprep.subr.mxu0 0.0
    %530 = vmatpush1.msra.mxu0 %v502
    %531 = vmatprep.subr.mxu0 0.0
    %532 = vmatpush1.msra.mxu0 %v501
    %533 = vmatprep.subr.mxu0 0.0
    %534 = vmatpush1.msra.mxu0 %v500
    %535 = vmatprep.subr.mxu0 0.0
    %536 = vmatpush1.msra.mxu0 %v499
    %537 = vmatprep.subr.mxu0 0.0
    %538 = vmatpush1.msra.mxu0 %v498
    %539 = vmatprep.subr.mxu0 0.0
    %540 = vmatpush1.msra.mxu0 %v497
    %541 = vmatprep.subr.mxu0 0.0
    %542 = vmatpush1.msra.mxu0 %v496
    %543 = vmatprep.subr.mxu0 0.0
    %544 = vmatpush2.msra.mxu0 0.0
    %545 = vmatprep.subr.mxu0 0.0
    %546 = vmatpush2.msra.mxu0 0.0
    %547 = vmatprep.subr.mxu0 0.0
    %548 = vmatpush2.msra.mxu0 0.0
    %549 = vmatprep.subr.mxu0 0.0
    %550 = vmatpush2.msra.mxu0 0.0
    %551 = vmatprep.subr.mxu0 0.0
    %552 = vmatpush2.msra.mxu0 0.0
    %553 = vmatprep.subr.mxu0 0.0
    %554 = vmatpush2.msra.mxu0 0.0
    %555 = vmatprep.subr.mxu0 0.0
    %556 = vmatpush2.msra.mxu0 0.0
    %557 = vmatprep.subr.mxu0 0.0
    %558 = vmatpush2.msra.mxu0 0.0
    %559 = vmatprep.subr.mxu0 0.0
    %560 = vmatpush2.msra.mxu0 0.0
    %561 = vmatprep.subr.mxu0 0.0
    %562 = vmatpush2.msra.mxu0 0.0
    %563 = vmatprep.subr.mxu0 0.0
    %564 = vmatpush2.msra.mxu0 0.0
    %565 = vmatprep.subr.mxu0 0.0
    %566 = vmatpush2.msra.mxu0 0.0
    %567 = vmatprep.subr.mxu0 0.0
    %568 = vmatpush2.msra.mxu0 0.0
    %569 = vmatprep.subr.mxu0 0.0
    %570 = vmatpush2.msra.mxu0 0.0
    %571 = vmatprep.subr.mxu0 0.0
    %572 = vmatpush2.msra.mxu0 0.0
    %573 = vmatprep.subr.mxu0 0.0
    %574 = vmatpush2.msra.mxu0 0.0
    %575 = vmatprep.mubr.f32.mxu0 0.0
    %576 = vmatmul.mubr.f32.gmra.mxu0 %v326
    %v577 = vpop.f32.mrf.mxu0
    %v578 = vadd.f32 %v509, %v577
    %v579 = vpop.f32.mrf.mxu0
    %580 = vmatprep.mubr.f32.mxu0 0.0
    %581 = vmatmul.mubr.f32.gmra.mxu0 %v329
    %v582 = vpop.f32.mrf.mxu0
    %v583 = vadd.f32 %v509, %v582
    %v584 = vpop.f32.mrf.mxu0
    %585 = vdwg.mxu0
    %v586 = vlaneseq
    %v587 = vshrl.u32 %v586, 7
    %v588 = vlaneseq
    %v589 = vand.u32 %v588, 127
    %vm590 = vcmp.le.s32.totalorder %v589, %v587
    %v591 = vld [vmem:[#allocation11] sm:$0xff]
    %v592 = vld [vmem:[#allocation11 + $0x8] sm:$0xff]
    %v593 = vld [vmem:[#allocation11 + $0x10] sm:$0xff]
    %v594 = vld [vmem:[#allocation11 + $0x18] sm:$0xff]
    %v595 = vld [vmem:[#allocation11 + $0x20] sm:$0xff]
    %v596 = vld [vmem:[#allocation11 + $0x28] sm:$0xff]
    %v597 = vld [vmem:[#allocation11 + $0x30] sm:$0xff]
    %v598 = vld [vmem:[#allocation11 + $0x38] sm:$0xff]
    %vm599 = vcmask 64512
    %v601 = vsel %vm599, %v398, 0
    %v604 = vsel %vm599, %v488, 0
    %606 = vmatprep.subr.mxu0 0.0
    %607 = vmatpush1.xpose.msra.mxu0 0.0
    %608 = vmatprep.subr.mxu0 0.0
    %609 = vmatpush1.xpose.msra.mxu0 0.0
    %610 = vmatprep.subr.mxu0 0.0
    %611 = vmatpush1.xpose.msra.mxu0 0.0
    %612 = vmatprep.subr.mxu0 0.0
    %613 = vmatpush1.xpose.msra.mxu0 0.0
    %614 = vmatprep.subr.mxu0 0.0
    %615 = vmatpush1.xpose.msra.mxu0 0.0
    %616 = vmatprep.subr.mxu0 0.0
    %617 = vmatpush1.xpose.msra.mxu0 0.0
    %618 = vmatprep.subr.mxu0 0.0
    %619 = vmatpush1.xpose.msra.mxu0 0.0
    %620 = vmatprep.subr.mxu0 0.0
    %621 = vmatpush1.xpose.msra.mxu0 0.0
    %622 = vmatprep.subr.mxu0 0.0
    %623 = vmatpush1.xpose.msra.mxu0 0.0
    %624 = vmatprep.subr.mxu0 0.0
    %625 = vmatpush1.xpose.msra.mxu0 0.0
    %626 = vmatprep.subr.mxu0 0.0
    %627 = vmatpush1.xpose.msra.mxu0 0.0
    %628 = vmatprep.subr.mxu0 0.0
    %629 = vmatpush1.xpose.msra.mxu0 0.0
    %630 = vmatprep.subr.mxu0 0.0
    %631 = vmatpush1.xpose.msra.mxu0 0.0
    %632 = vmatprep.subr.mxu0 0.0
    %633 = vmatpush1.xpose.msra.mxu0 0.0
    %634 = vmatprep.subr.mxu0 0.0
    %635 = vmatpush1.xpose.msra.mxu0 0.0
    %636 = vmatprep.subr.mxu0 0.0
    %637 = vmatpush1.xpose.msra.mxu0 %v604
    %638 = vmatprep.subr.mxu0 0.0
    %639 = vmatpush2.xpose.msra.mxu0 0.0
    %640 = vmatprep.subr.mxu0 0.0
    %641 = vmatpush2.xpose.msra.mxu0 0.0
    %642 = vmatprep.subr.mxu0 0.0
    %643 = vmatpush2.xpose.msra.mxu0 0.0
    %644 = vmatprep.subr.mxu0 0.0
    %645 = vmatpush2.xpose.msra.mxu0 0.0
    %646 = vmatprep.subr.mxu0 0.0
    %647 = vmatpush2.xpose.msra.mxu0 0.0
    %648 = vmatprep.subr.mxu0 0.0
    %649 = vmatpush2.xpose.msra.mxu0 0.0
    %650 = vmatprep.subr.mxu0 0.0
    %651 = vmatpush2.xpose.msra.mxu0 0.0
    %652 = vmatprep.subr.mxu0 0.0
    %653 = vmatpush2.xpose.msra.mxu0 0.0
    %654 = vmatprep.subr.mxu0 0.0
    %655 = vmatpush2.xpose.msra.mxu0 0.0
    %656 = vmatprep.subr.mxu0 0.0
    %657 = vmatpush2.xpose.msra.mxu0 0.0
    %658 = vmatprep.subr.mxu0 0.0
    %659 = vmatpush2.xpose.msra.mxu0 0.0
    %660 = vmatprep.subr.mxu0 0.0
    %661 = vmatpush2.xpose.msra.mxu0 0.0
    %662 = vmatprep.subr.mxu0 0.0
    %663 = vmatpush2.xpose.msra.mxu0 0.0
    %664 = vmatprep.subr.mxu0 0.0
    %665 = vmatpush2.xpose.msra.mxu0 0.0
    %666 = vmatprep.subr.mxu0 0.0
    %667 = vmatpush2.xpose.msra.mxu0 0.0
    %668 = vmatprep.subr.mxu0 0.0
    %669 = vmatpush2.xpose.msra.mxu0 0.0
    %670 = vmatprep.mubr.f32.mxu0 0.0
    %671 = vmatmul.mubr.f32.gmra.mxu0 %v601
    %v672 = vpop.f32.mrf.mxu0
    %v673 = vadd.f32 0.0, %v672
    %v674 = vpop.f32.mrf.mxu0
    %675 = vdwg.mxu0
    %v677 = vsel %vm599, %v403, 0
    %v680 = vsel %vm599, %v493, 0
    %682 = vmatprep.subr.mxu0 0.0
    %683 = vmatpush1.xpose.msra.mxu0 0.0
    %684 = vmatprep.subr.mxu0 0.0
    %685 = vmatpush1.xpose.msra.mxu0 0.0
    %686 = vmatprep.subr.mxu0 0.0
    %687 = vmatpush1.xpose.msra.mxu0 0.0
    %688 = vmatprep.subr.mxu0 0.0
    %689 = vmatpush1.xpose.msra.mxu0 0.0
    %690 = vmatprep.subr.mxu0 0.0
    %691 = vmatpush1.xpose.msra.mxu0 0.0
    %692 = vmatprep.subr.mxu0 0.0
    %693 = vmatpush1.xpose.msra.mxu0 0.0
    %694 = vmatprep.subr.mxu0 0.0
    %695 = vmatpush1.xpose.msra.mxu0 0.0
    %696 = vmatprep.subr.mxu0 0.0
    %697 = vmatpush1.xpose.msra.mxu0 0.0
    %698 = vmatprep.subr.mxu0 0.0
    %699 = vmatpush1.xpose.msra.mxu0 0.0
    %700 = vmatprep.subr.mxu0 0.0
    %701 = vmatpush1.xpose.msra.mxu0 0.0
    %702 = vmatprep.subr.mxu0 0.0
    %703 = vmatpush1.xpose.msra.mxu0 0.0
    %704 = vmatprep.subr.mxu0 0.0
    %705 = vmatpush1.xpose.msra.mxu0 0.0
    %706 = vmatprep.subr.mxu0 0.0
    %707 = vmatpush1.xpose.msra.mxu0 0.0
    %708 = vmatprep.subr.mxu0 0.0
    %709 = vmatpush1.xpose.msra.mxu0 0.0
    %710 = vmatprep.subr.mxu0 0.0
    %711 = vmatpush1.xpose.msra.mxu0 0.0
    %712 = vmatprep.subr.mxu0 0.0
    %713 = vmatpush1.xpose.msra.mxu0 %v680
    %714 = vmatprep.subr.mxu0 0.0
    %715 = vmatpush2.xpose.msra.mxu0 0.0
    %716 = vmatprep.subr.mxu0 0.0
    %717 = vmatpush2.xpose.msra.mxu0 0.0
    %718 = vmatprep.subr.mxu0 0.0
    %719 = vmatpush2.xpose.msra.mxu0 0.0
    %720 = vmatprep.subr.mxu0 0.0
    %721 = vmatpush2.xpose.msra.mxu0 0.0
    %722 = vmatprep.subr.mxu0 0.0
    %723 = vmatpush2.xpose.msra.mxu0 0.0
    %724 = vmatprep.subr.mxu0 0.0
    %725 = vmatpush2.xpose.msra.mxu0 0.0
    %726 = vmatprep.subr.mxu0 0.0
    %727 = vmatpush2.xpose.msra.mxu0 0.0
    %728 = vmatprep.subr.mxu0 0.0
    %729 = vmatpush2.xpose.msra.mxu0 0.0
    %730 = vmatprep.subr.mxu0 0.0
    %731 = vmatpush2.xpose.msra.mxu0 0.0
    %732 = vmatprep.subr.mxu0 0.0
    %733 = vmatpush2.xpose.msra.mxu0 0.0
    %734 = vmatprep.subr.mxu0 0.0
    %735 = vmatpush2.xpose.msra.mxu0 0.0
    %736 = vmatprep.subr.mxu0 0.0
    %737 = vmatpush2.xpose.msra.mxu0 0.0
    %738 = vmatprep.subr.mxu0 0.0
    %739 = vmatpush2.xpose.msra.mxu0 0.0
    %740 = vmatprep.subr.mxu0 0.0
    %741 = vmatpush2.xpose.msra.mxu0 0.0
    %742 = vmatprep.subr.mxu0 0.0
    %743 = vmatpush2.xpose.msra.mxu0 0.0
    %744 = vmatprep.subr.mxu0 0.0
    %745 = vmatpush2.xpose.msra.mxu0 0.0
    %746 = vmatprep.mubr.f32.mxu0 0.0
    %747 = vmatmul.mubr.f32.gmra.mxu0 %v677
    %v748 = vpop.f32.mrf.mxu0
    %v749 = vadd.f32 0.0, %v748
    %v750 = vpop.f32.mrf.mxu0
    %751 = vdwg.mxu0
    %v752 = vsel %vm590, 1, 0
    %vm753 = vcmp.eq.s32.totalorder %v752, 1
    %v754 = vsel %vm753, %v673, -1e+30
    %v755 = vsel %vm753, %v749, -1e+30
    %v756 = vsel %vm599, %v754, -inf
    %757 = vmax.xlane.f32.xlu0 %v756
    %v758 = vpop.xlane.xlu0 %757
    %v759 = vsel %vm599, %v755, -inf
    %760 = vmax.xlane.f32.xlu0 %v759
    %v761 = vpop.xlane.xlu0 %760
    %v762 = vsub.f32 %v754, %v758
    %v763 = vsub.f32 %v755, %v761
    %v764 = vmul.f32 %v762, 1.442695
    %v765 = vpow.pop %v764
    %v766 = vmul.f32 %v763, 1.442695
    %v767 = vpow.pop %v766
    %v768 = vsel %vm599, %v765, 0.0
    %769 = vadd.xlane.f32.xlu0 %v768
    %v770 = vpop.xlane.xlu0 %769
    %v771 = vsel %vm599, %v767, 0.0
    %772 = vadd.xlane.f32.xlu0 %v771
    %v773 = vpop.xlane.xlu0 %772
    %v774 = vrcp.pop %v770
    %v775 = vrcp.pop %v773
    %v776 = vmul.f32 %v765, %v774
    %v777 = vmul.f32 %v767, %v775
    %v779 = vsel %vm599, %v776, 0
    %781 = vmatprep.subr.mxu0 0.0
    %782 = vmatpush1.msra.mxu0 0.0
    %783 = vmatprep.subr.mxu0 0.0
    %784 = vmatpush1.msra.mxu0 0.0
    %785 = vmatprep.subr.mxu0 0.0
    %786 = vmatpush1.msra.mxu0 0.0
    %787 = vmatprep.subr.mxu0 0.0
    %788 = vmatpush1.msra.mxu0 0.0
    %789 = vmatprep.subr.mxu0 0.0
    %790 = vmatpush1.msra.mxu0 0.0
    %791 = vmatprep.subr.mxu0 0.0
    %792 = vmatpush1.msra.mxu0 0.0
    %793 = vmatprep.subr.mxu0 0.0
    %794 = vmatpush1.msra.mxu0 0.0
    %795 = vmatprep.subr.mxu0 0.0
    %796 = vmatpush1.msra.mxu0 0.0
    %797 = vmatprep.subr.mxu0 0.0
    %798 = vmatpush1.msra.mxu0 0.0
    %799 = vmatprep.subr.mxu0 0.0
    %800 = vmatpush1.msra.mxu0 0.0
    %801 = vmatprep.subr.mxu0 0.0
    %802 = vmatpush1.msra.mxu0 0.0
    %803 = vmatprep.subr.mxu0 0.0
    %804 = vmatpush1.msra.mxu0 0.0
    %805 = vmatprep.subr.mxu0 0.0
    %806 = vmatpush1.msra.mxu0 0.0
    %807 = vmatprep.subr.mxu0 0.0
    %808 = vmatpush1.msra.mxu0 0.0
    %809 = vmatprep.subr.mxu0 0.0
    %810 = vmatpush1.msra.mxu0 0.0
    %811 = vmatprep.subr.mxu0 0.0
    %812 = vmatpush1.msra.mxu0 %v578
    %813 = vmatprep.subr.mxu0 0.0
    %814 = vmatpush2.msra.mxu0 0.0
    %815 = vmatprep.subr.mxu0 0.0
    %816 = vmatpush2.msra.mxu0 0.0
    %817 = vmatprep.subr.mxu0 0.0
    %818 = vmatpush2.msra.mxu0 0.0
    %819 = vmatprep.subr.mxu0 0.0
    %820 = vmatpush2.msra.mxu0 0.0
    %821 = vmatprep.subr.mxu0 0.0
    %822 = vmatpush2.msra.mxu0 0.0
    %823 = vmatprep.subr.mxu0 0.0
    %824 = vmatpush2.msra.mxu0 0.0
    %825 = vmatprep.subr.mxu0 0.0
    %826 = vmatpush2.msra.mxu0 0.0
    %827 = vmatprep.subr.mxu0 0.0
    %828 = vmatpush2.msra.mxu0 0.0
    %829 = vmatprep.subr.mxu0 0.0
    %830 = vmatpush2.msra.mxu0 0.0
    %831 = vmatprep.subr.mxu0 0.0
    %832 = vmatpush2.msra.mxu0 0.0
    %833 = vmatprep.subr.mxu0 0.0
    %834 = vmatpush2.msra.mxu0 0.0
    %835 = vmatprep.subr.mxu0 0.0
    %836 = vmatpush2.msra.mxu0 0.0
    %837 = vmatprep.subr.mxu0 0.0
    %838 = vmatpush2.msra.mxu0 0.0
    %839 = vmatprep.subr.mxu0 0.0
    %840 = vmatpush2.msra.mxu0 0.0
    %841 = vmatprep.subr.mxu0 0.0
    %842 = vmatpush2.msra.mxu0 0.0
    %843 = vmatprep.subr.mxu0 0.0
    %844 = vmatpush2.msra.mxu0 0.0
    %845 = vmatprep.mubr.f32.mxu0 0.0
    %846 = vmatmul.mubr.f32.gmra.mxu0 %v779
    %v847 = vpop.f32.mrf.mxu0
    %v848 = vadd.f32 0.0, %v847
    %v849 = vpop.f32.mrf.mxu0
    %850 = vdwg.mxu0
    %v852 = vsel %vm599, %v777, 0
    %854 = vmatprep.subr.mxu0 0.0
    %855 = vmatpush1.msra.mxu0 0.0
    %856 = vmatprep.subr.mxu0 0.0
    %857 = vmatpush1.msra.mxu0 0.0
    %858 = vmatprep.subr.mxu0 0.0
    %859 = vmatpush1.msra.mxu0 0.0
    %860 = vmatprep.subr.mxu0 0.0
    %861 = vmatpush1.msra.mxu0 0.0
    %862 = vmatprep.subr.mxu0 0.0
    %863 = vmatpush1.msra.mxu0 0.0
    %864 = vmatprep.subr.mxu0 0.0
    %865 = vmatpush1.msra.mxu0 0.0
    %866 = vmatprep.subr.mxu0 0.0
    %867 = vmatpush1.msra.mxu0 0.0
    %868 = vmatprep.subr.mxu0 0.0
    %869 = vmatpush1.msra.mxu0 0.0
    %870 = vmatprep.subr.mxu0 0.0
    %871 = vmatpush1.msra.mxu0 0.0
    %872 = vmatprep.subr.mxu0 0.0
    %873 = vmatpush1.msra.mxu0 0.0
    %874 = vmatprep.subr.mxu0 0.0
    %875 = vmatpush1.msra.mxu0 0.0
    %876 = vmatprep.subr.mxu0 0.0
    %877 = vmatpush1.msra.mxu0 0.0
    %878 = vmatprep.subr.mxu0 0.0
    %879 = vmatpush1.msra.mxu0 0.0
    %880 = vmatprep.subr.mxu0 0.0
    %881 = vmatpush1.msra.mxu0 0.0
    %882 = vmatprep.subr.mxu0 0.0
    %883 = vmatpush1.msra.mxu0 0.0
    %884 = vmatprep.subr.mxu0 0.0
    %885 = vmatpush1.msra.mxu0 %v583
    %886 = vmatprep.subr.mxu0 0.0
    %887 = vmatpush2.msra.mxu0 0.0
    %888 = vmatprep.subr.mxu0 0.0
    %889 = vmatpush2.msra.mxu0 0.0
    %890 = vmatprep.subr.mxu0 0.0
    %891 = vmatpush2.msra.mxu0 0.0
    %892 = vmatprep.subr.mxu0 0.0
    %893 = vmatpush2.msra.mxu0 0.0
    %894 = vmatprep.subr.mxu0 0.0
    %895 = vmatpush2.msra.mxu0 0.0
    %896 = vmatprep.subr.mxu0 0.0
    %897 = vmatpush2.msra.mxu0 0.0
    %898 = vmatprep.subr.mxu0 0.0
    %899 = vmatpush2.msra.mxu0 0.0
    %900 = vmatprep.subr.mxu0 0.0
    %901 = vmatpush2.msra.mxu0 0.0
    %902 = vmatprep.subr.mxu0 0.0
    %903 = vmatpush2.msra.mxu0 0.0
    %904 = vmatprep.subr.mxu0 0.0
    %905 = vmatpush2.msra.mxu0 0.0
    %906 = vmatprep.subr.mxu0 0.0
    %907 = vmatpush2.msra.mxu0 0.0
    %908 = vmatprep.subr.mxu0 0.0
    %909 = vmatpush2.msra.mxu0 0.0
    %910 = vmatprep.subr.mxu0 0.0
    %911 = vmatpush2.msra.mxu0 0.0
    %912 = vmatprep.subr.mxu0 0.0
    %913 = vmatpush2.msra.mxu0 0.0
    %914 = vmatprep.subr.mxu0 0.0
    %915 = vmatpush2.msra.mxu0 0.0
    %916 = vmatprep.subr.mxu0 0.0
    %917 = vmatpush2.msra.mxu0 0.0
    %918 = vmatprep.mubr.f32.mxu0 0.0
    %919 = vmatmul.mubr.f32.gmra.mxu0 %v852
    %v920 = vpop.f32.mrf.mxu0
    %v921 = vadd.f32 0.0, %v920
    %v922 = vpop.f32.mrf.mxu0
    %923 = vdwg.mxu0
    %924 = vrot.lane.b32.xlu0 %v398, 120
    %v925 = vpop.permute.xlu0 %924
    %926 = vrot.lane.b32.xlu0 %v488, 120
    %v927 = vpop.permute.xlu0 %926
    %v928 = vsel %vm599, %v925, 0
    %v930 = vsel %vm599, %v927, 0
    %932 = vmatprep.subr.mxu0 0.0
    %933 = vmatpush1.xpose.msra.mxu0 0.0
    %934 = vmatprep.subr.mxu0 0.0
    %935 = vmatpush1.xpose.msra.mxu0 0.0
    %936 = vmatprep.subr.mxu0 0.0
    %937 = vmatpush1.xpose.msra.mxu0 0.0
    %938 = vmatprep.subr.mxu0 0.0
    %939 = vmatpush1.xpose.msra.mxu0 0.0
    %940 = vmatprep.subr.mxu0 0.0
    %941 = vmatpush1.xpose.msra.mxu0 0.0
    %942 = vmatprep.subr.mxu0 0.0
    %943 = vmatpush1.xpose.msra.mxu0 0.0
    %944 = vmatprep.subr.mxu0 0.0
    %945 = vmatpush1.xpose.msra.mxu0 0.0
    %946 = vmatprep.subr.mxu0 0.0
    %947 = vmatpush1.xpose.msra.mxu0 0.0
    %948 = vmatprep.subr.mxu0 0.0
    %949 = vmatpush1.xpose.msra.mxu0 0.0
    %950 = vmatprep.subr.mxu0 0.0
    %951 = vmatpush1.xpose.msra.mxu0 0.0
    %952 = vmatprep.subr.mxu0 0.0
    %953 = vmatpush1.xpose.msra.mxu0 0.0
    %954 = vmatprep.subr.mxu0 0.0
    %955 = vmatpush1.xpose.msra.mxu0 0.0
    %956 = vmatprep.subr.mxu0 0.0
    %957 = vmatpush1.xpose.msra.mxu0 0.0
    %958 = vmatprep.subr.mxu0 0.0
    %959 = vmatpush1.xpose.msra.mxu0 0.0
    %960 = vmatprep.subr.mxu0 0.0
    %961 = vmatpush1.xpose.msra.mxu0 0.0
    %962 = vmatprep.subr.mxu0 0.0
    %963 = vmatpush1.xpose.msra.mxu0 %v930
    %964 = vmatprep.subr.mxu0 0.0
    %965 = vmatpush2.xpose.msra.mxu0 0.0
    %966 = vmatprep.subr.mxu0 0.0
    %967 = vmatpush2.xpose.msra.mxu0 0.0
    %968 = vmatprep.subr.mxu0 0.0
    %969 = vmatpush2.xpose.msra.mxu0 0.0
    %970 = vmatprep.subr.mxu0 0.0
    %971 = vmatpush2.xpose.msra.mxu0 0.0
    %972 = vmatprep.subr.mxu0 0.0
    %973 = vmatpush2.xpose.msra.mxu0 0.0
    %974 = vmatprep.subr.mxu0 0.0
    %975 = vmatpush2.xpose.msra.mxu0 0.0
    %976 = vmatprep.subr.mxu0 0.0
    %977 = vmatpush2.xpose.msra.mxu0 0.0
    %978 = vmatprep.subr.mxu0 0.0
    %979 = vmatpush2.xpose.msra.mxu0 0.0
    %980 = vmatprep.subr.mxu0 0.0
    %981 = vmatpush2.xpose.msra.mxu0 0.0
    %982 = vmatprep.subr.mxu0 0.0
    %983 = vmatpush2.xpose.msra.mxu0 0.0
    %984 = vmatprep.subr.mxu0 0.0
    %985 = vmatpush2.xpose.msra.mxu0 0.0
    %986 = vmatprep.subr.mxu0 0.0
    %987 = vmatpush2.xpose.msra.mxu0 0.0
    %988 = vmatprep.subr.mxu0 0.0
    %989 = vmatpush2.xpose.msra.mxu0 0.0
    %990 = vmatprep.subr.mxu0 0.0
    %991 = vmatpush2.xpose.msra.mxu0 0.0
    %992 = vmatprep.subr.mxu0 0.0
    %993 = vmatpush2.xpose.msra.mxu0 0.0
    %994 = vmatprep.subr.mxu0 0.0
    %995 = vmatpush2.xpose.msra.mxu0 0.0
    %996 = vmatprep.mubr.f32.mxu0 0.0
    %997 = vmatmul.mubr.f32.gmra.mxu0 %v928
    %v998 = vpop.f32.mrf.mxu0
    %v999 = vadd.f32 0.0, %v998
    %v1000 = vpop.f32.mrf.mxu0
    %1001 = vdwg.mxu0
    %1002 = vrot.lane.b32.xlu0 %v403, 120
    %v1003 = vpop.permute.xlu0 %1002
    %1004 = vrot.lane.b32.xlu0 %v493, 120
    %v1005 = vpop.permute.xlu0 %1004
    %v1006 = vsel %vm599, %v1003, 0
    %v1008 = vsel %vm599, %v1005, 0
    %1010 = vmatprep.subr.mxu0 0.0
    %1011 = vmatpush1.xpose.msra.mxu0 0.0
    %1012 = vmatprep.subr.mxu0 0.0
    %1013 = vmatpush1.xpose.msra.mxu0 0.0
    %1014 = vmatprep.subr.mxu0 0.0
    %1015 = vmatpush1.xpose.msra.mxu0 0.0
    %1016 = vmatprep.subr.mxu0 0.0
    %1017 = vmatpush1.xpose.msra.mxu0 0.0
    %1018 = vmatprep.subr.mxu0 0.0
    %1019 = vmatpush1.xpose.msra.mxu0 0.0
    %1020 = vmatprep.subr.mxu0 0.0
    %1021 = vmatpush1.xpose.msra.mxu0 0.0
    %1022 = vmatprep.subr.mxu0 0.0
    %1023 = vmatpush1.xpose.msra.mxu0 0.0
    %1024 = vmatprep.subr.mxu0 0.0
    %1025 = vmatpush1.xpose.msra.mxu0 0.0
    %1026 = vmatprep.subr.mxu0 0.0
    %1027 = vmatpush1.xpose.msra.mxu0 0.0
    %1028 = vmatprep.subr.mxu0 0.0
    %1029 = vmatpush1.xpose.msra.mxu0 0.0
    %1030 = vmatprep.subr.mxu0 0.0
    %1031 = vmatpush1.xpose.msra.mxu0 0.0
    %1032 = vmatprep.subr.mxu0 0.0
    %1033 = vmatpush1.xpose.msra.mxu0 0.0
    %1034 = vmatprep.subr.mxu0 0.0
    %1035 = vmatpush1.xpose.msra.mxu0 0.0
    %1036 = vmatprep.subr.mxu0 0.0
    %1037 = vmatpush1.xpose.msra.mxu0 0.0
    %1038 = vmatprep.subr.mxu0 0.0
    %1039 = vmatpush1.xpose.msra.mxu0 0.0
    %1040 = vmatprep.subr.mxu0 0.0
    %1041 = vmatpush1.xpose.msra.mxu0 %v1008
    %1042 = vmatprep.subr.mxu0 0.0
    %1043 = vmatpush2.xpose.msra.mxu0 0.0
    %1044 = vmatprep.subr.mxu0 0.0
    %1045 = vmatpush2.xpose.msra.mxu0 0.0
    %1046 = vmatprep.subr.mxu0 0.0
    %1047 = vmatpush2.xpose.msra.mxu0 0.0
    %1048 = vmatprep.subr.mxu0 0.0
    %1049 = vmatpush2.xpose.msra.mxu0 0.0
    %1050 = vmatprep.subr.mxu0 0.0
    %1051 = vmatpush2.xpose.msra.mxu0 0.0
    %1052 = vmatprep.subr.mxu0 0.0
    %1053 = vmatpush2.xpose.msra.mxu0 0.0
    %1054 = vmatprep.subr.mxu0 0.0
    %1055 = vmatpush2.xpose.msra.mxu0 0.0
    %1056 = vmatprep.subr.mxu0 0.0
    %1057 = vmatpush2.xpose.msra.mxu0 0.0
    %1058 = vmatprep.subr.mxu0 0.0
    %1059 = vmatpush2.xpose.msra.mxu0 0.0
    %1060 = vmatprep.subr.mxu0 0.0
    %1061 = vmatpush2.xpose.msra.mxu0 0.0
    %1062 = vmatprep.subr.mxu0 0.0
    %1063 = vmatpush2.xpose.msra.mxu0 0.0
    %1064 = vmatprep.subr.mxu0 0.0
    %1065 = vmatpush2.xpose.msra.mxu0 0.0
    %1066 = vmatprep.subr.mxu0 0.0
    %1067 = vmatpush2.xpose.msra.mxu0 0.0
    %1068 = vmatprep.subr.mxu0 0.0
    %1069 = vmatpush2.xpose.msra.mxu0 0.0
    %1070 = vmatprep.subr.mxu0 0.0
    %1071 = vmatpush2.xpose.msra.mxu0 0.0
    %1072 = vmatprep.subr.mxu0 0.0
    %1073 = vmatpush2.xpose.msra.mxu0 0.0
    %1074 = vmatprep.mubr.f32.mxu0 0.0
    %1075 = vmatmul.mubr.f32.gmra.mxu0 %v1006
    %v1076 = vpop.f32.mrf.mxu0
    %v1077 = vadd.f32 0.0, %v1076
    %v1078 = vpop.f32.mrf.mxu0
    %1079 = vdwg.mxu0
    %v1080 = vsel %vm753, %v999, -1e+30
    %v1081 = vsel %vm753, %v1077, -1e+30
    %v1082 = vsel %vm599, %v1080, -inf
    %1083 = vmax.xlane.f32.xlu0 %v1082
    %v1084 = vpop.xlane.xlu0 %1083
    %v1085 = vsel %vm599, %v1081, -inf
    %1086 = vmax.xlane.f32.xlu0 %v1085
    %v1087 = vpop.xlane.xlu0 %1086
    %v1088 = vsub.f32 %v1080, %v1084
    %v1089 = vsub.f32 %v1081, %v1087
    %v1090 = vmul.f32 %v1088, 1.442695
    %v1091 = vpow.pop %v1090
    %v1092 = vmul.f32 %v1089, 1.442695
    %v1093 = vpow.pop %v1092
    %v1094 = vsel %vm599, %v1091, 0.0
    %1095 = vadd.xlane.f32.xlu0 %v1094
    %v1096 = vpop.xlane.xlu0 %1095
    %v1097 = vsel %vm599, %v1093, 0.0
    %1098 = vadd.xlane.f32.xlu0 %v1097
    %v1099 = vpop.xlane.xlu0 %1098
    %v1100 = vrcp.pop %v1096
    %v1101 = vrcp.pop %v1099
    %v1102 = vmul.f32 %v1091, %v1100
    %v1103 = vmul.f32 %v1093, %v1101
    %1105 = vrot.lane.b32.xlu0 %v578, 120
    %v1106 = vpop.permute.xlu0 %1105
    %v1109 = vsel %vm599, %v1102, 0
    %1111 = vmatprep.subr.mxu0 0.0
    %1112 = vmatpush1.msra.mxu0 0.0
    %1113 = vmatprep.subr.mxu0 0.0
    %1114 = vmatpush1.msra.mxu0 0.0
    %1115 = vmatprep.subr.mxu0 0.0
    %1116 = vmatpush1.msra.mxu0 0.0
    %1117 = vmatprep.subr.mxu0 0.0
    %1118 = vmatpush1.msra.mxu0 0.0
    %1119 = vmatprep.subr.mxu0 0.0
    %1120 = vmatpush1.msra.mxu0 0.0
    %1121 = vmatprep.subr.mxu0 0.0
    %1122 = vmatpush1.msra.mxu0 0.0
    %1123 = vmatprep.subr.mxu0 0.0
    %1124 = vmatpush1.msra.mxu0 0.0
    %1125 = vmatprep.subr.mxu0 0.0
    %1126 = vmatpush1.msra.mxu0 0.0
    %1127 = vmatprep.subr.mxu0 0.0
    %1128 = vmatpush1.msra.mxu0 0.0
    %1129 = vmatprep.subr.mxu0 0.0
    %1130 = vmatpush1.msra.mxu0 0.0
    %1131 = vmatprep.subr.mxu0 0.0
    %1132 = vmatpush1.msra.mxu0 0.0
    %1133 = vmatprep.subr.mxu0 0.0
    %1134 = vmatpush1.msra.mxu0 0.0
    %1135 = vmatprep.subr.mxu0 0.0
    %1136 = vmatpush1.msra.mxu0 0.0
    %1137 = vmatprep.subr.mxu0 0.0
    %1138 = vmatpush1.msra.mxu0 0.0
    %1139 = vmatprep.subr.mxu0 0.0
    %1140 = vmatpush1.msra.mxu0 0.0
    %1141 = vmatprep.subr.mxu0 0.0
    %1142 = vmatpush1.msra.mxu0 %v1106
    %1143 = vmatprep.subr.mxu0 0.0
    %1144 = vmatpush2.msra.mxu0 0.0
    %1145 = vmatprep.subr.mxu0 0.0
    %1146 = vmatpush2.msra.mxu0 0.0
    %1147 = vmatprep.subr.mxu0 0.0
    %1148 = vmatpush2.msra.mxu0 0.0
    %1149 = vmatprep.subr.mxu0 0.0
    %1150 = vmatpush2.msra.mxu0 0.0
    %1151 = vmatprep.subr.mxu0 0.0
    %1152 = vmatpush2.msra.mxu0 0.0
    %1153 = vmatprep.subr.mxu0 0.0
    %1154 = vmatpush2.msra.mxu0 0.0
    %1155 = vmatprep.subr.mxu0 0.0
    %1156 = vmatpush2.msra.mxu0 0.0
    %1157 = vmatprep.subr.mxu0 0.0
    %1158 = vmatpush2.msra.mxu0 0.0
    %1159 = vmatprep.subr.mxu0 0.0
    %1160 = vmatpush2.msra.mxu0 0.0
    %1161 = vmatprep.subr.mxu0 0.0
    %1162 = vmatpush2.msra.mxu0 0.0
    %1163 = vmatprep.subr.mxu0 0.0
    %1164 = vmatpush2.msra.mxu0 0.0
    %1165 = vmatprep.subr.mxu0 0.0
    %1166 = vmatpush2.msra.mxu0 0.0
    %1167 = vmatprep.subr.mxu0 0.0
    %1168 = vmatpush2.msra.mxu0 0.0
    %1169 = vmatprep.subr.mxu0 0.0
    %1170 = vmatpush2.msra.mxu0 0.0
    %1171 = vmatprep.subr.mxu0 0.0
    %1172 = vmatpush2.msra.mxu0 0.0
    %1173 = vmatprep.subr.mxu0 0.0
    %1174 = vmatpush2.msra.mxu0 0.0
    %1175 = vmatprep.mubr.f32.mxu0 0.0
    %1176 = vmatmul.mubr.f32.gmra.mxu0 %v1109
    %v1177 = vpop.f32.mrf.mxu0
    %v1178 = vadd.f32 0.0, %v1177
    %v1179 = vpop.f32.mrf.mxu0
    %1180 = vdwg.mxu0
    %1182 = vrot.lane.b32.xlu0 %v583, 120
    %v1183 = vpop.permute.xlu0 %1182
    %v1186 = vsel %vm599, %v1103, 0
    %1188 = vmatprep.subr.mxu0 0.0
    %1189 = vmatpush1.msra.mxu0 0.0
    %1190 = vmatprep.subr.mxu0 0.0
    %1191 = vmatpush1.msra.mxu0 0.0
    %1192 = vmatprep.subr.mxu0 0.0
    %1193 = vmatpush1.msra.mxu0 0.0
    %1194 = vmatprep.subr.mxu0 0.0
    %1195 = vmatpush1.msra.mxu0 0.0
    %1196 = vmatprep.subr.mxu0 0.0
    %1197 = vmatpush1.msra.mxu0 0.0
    %1198 = vmatprep.subr.mxu0 0.0
    %1199 = vmatpush1.msra.mxu0 0.0
    %1200 = vmatprep.subr.mxu0 0.0
    %1201 = vmatpush1.msra.mxu0 0.0
    %1202 = vmatprep.subr.mxu0 0.0
    %1203 = vmatpush1.msra.mxu0 0.0
    %1204 = vmatprep.subr.mxu0 0.0
    %1205 = vmatpush1.msra.mxu0 0.0
    %1206 = vmatprep.subr.mxu0 0.0
    %1207 = vmatpush1.msra.mxu0 0.0
    %1208 = vmatprep.subr.mxu0 0.0
    %1209 = vmatpush1.msra.mxu0 0.0
    %1210 = vmatprep.subr.mxu0 0.0
    %1211 = vmatpush1.msra.mxu0 0.0
    %1212 = vmatprep.subr.mxu0 0.0
    %1213 = vmatpush1.msra.mxu0 0.0
    %1214 = vmatprep.subr.mxu0 0.0
    %1215 = vmatpush1.msra.mxu0 0.0
    %1216 = vmatprep.subr.mxu0 0.0
    %1217 = vmatpush1.msra.mxu0 0.0
    %1218 = vmatprep.subr.mxu0 0.0
    %1219 = vmatpush1.msra.mxu0 %v1183
    %1220 = vmatprep.subr.mxu0 0.0
    %1221 = vmatpush2.msra.mxu0 0.0
    %1222 = vmatprep.subr.mxu0 0.0
    %1223 = vmatpush2.msra.mxu0 0.0
    %1224 = vmatprep.subr.mxu0 0.0
    %1225 = vmatpush2.msra.mxu0 0.0
    %1226 = vmatprep.subr.mxu0 0.0
    %1227 = vmatpush2.msra.mxu0 0.0
    %1228 = vmatprep.subr.mxu0 0.0
    %1229 = vmatpush2.msra.mxu0 0.0
    %1230 = vmatprep.subr.mxu0 0.0
    %1231 = vmatpush2.msra.mxu0 0.0
    %1232 = vmatprep.subr.mxu0 0.0
    %1233 = vmatpush2.msra.mxu0 0.0
    %1234 = vmatprep.subr.mxu0 0.0
    %1235 = vmatpush2.msra.mxu0 0.0
    %1236 = vmatprep.subr.mxu0 0.0
    %1237 = vmatpush2.msra.mxu0 0.0
    %1238 = vmatprep.subr.mxu0 0.0
    %1239 = vmatpush2.msra.mxu0 0.0
    %1240 = vmatprep.subr.mxu0 0.0
    %1241 = vmatpush2.msra.mxu0 0.0
    %1242 = vmatprep.subr.mxu0 0.0
    %1243 = vmatpush2.msra.mxu0 0.0
    %1244 = vmatprep.subr.mxu0 0.0
    %1245 = vmatpush2.msra.mxu0 0.0
    %1246 = vmatprep.subr.mxu0 0.0
    %1247 = vmatpush2.msra.mxu0 0.0
    %1248 = vmatprep.subr.mxu0 0.0
    %1249 = vmatpush2.msra.mxu0 0.0
    %1250 = vmatprep.subr.mxu0 0.0
    %1251 = vmatpush2.msra.mxu0 0.0
    %1252 = vmatprep.mubr.f32.mxu0 0.0
    %1253 = vmatmul.mubr.f32.gmra.mxu0 %v1186
    %v1254 = vpop.f32.mrf.mxu0
    %v1255 = vadd.f32 0.0, %v1254
    %v1256 = vpop.f32.mrf.mxu0
    %1257 = vdwg.mxu0
    %v1259 = vsel %vm599, %v1178, 0
    %v1262 = vsel %vm599, %v1255, 0
    %1264 = vmatprep.subr.mxu0 0.0
    %1265 = vmatpush1.msra.mxu0 0.0
    %1266 = vmatprep.subr.mxu0 0.0
    %1267 = vmatpush1.msra.mxu0 0.0
    %1268 = vmatprep.subr.mxu0 0.0
    %1269 = vmatpush1.msra.mxu0 0.0
    %1270 = vmatprep.subr.mxu0 0.0
    %1271 = vmatpush1.msra.mxu0 0.0
    %1272 = vmatprep.subr.mxu0 0.0
    %1273 = vmatpush1.msra.mxu0 0.0
    %1274 = vmatprep.subr.mxu0 0.0
    %1275 = vmatpush1.msra.mxu0 0.0
    %1276 = vmatprep.subr.mxu0 0.0
    %1277 = vmatpush1.msra.mxu0 0.0
    %1278 = vmatprep.subr.mxu0 0.0
    %1279 = vmatpush1.msra.mxu0 0.0
    %1280 = vmatprep.subr.mxu0 0.0
    %1281 = vmatpush1.msra.mxu0 0.0
    %1282 = vmatprep.subr.mxu0 0.0
    %1283 = vmatpush1.msra.mxu0 0.0
    %1284 = vmatprep.subr.mxu0 0.0
    %1285 = vmatpush1.msra.mxu0 0.0
    %1286 = vmatprep.subr.mxu0 0.0
    %1287 = vmatpush1.msra.mxu0 0.0
    %1288 = vmatprep.subr.mxu0 0.0
    %1289 = vmatpush1.msra.mxu0 0.0
    %1290 = vmatprep.subr.mxu0 0.0
    %1291 = vmatpush1.msra.mxu0 0.0
    %1292 = vmatprep.subr.mxu0 0.0
    %1293 = vmatpush1.msra.mxu0 0.0
    %1294 = vmatprep.subr.mxu0 0.0
    %1295 = vmatpush1.msra.mxu0 %v592
    %1296 = vmatprep.subr.mxu0 0.0
    %1297 = vmatpush2.msra.mxu0 0.0
    %1298 = vmatprep.subr.mxu0 0.0
    %1299 = vmatpush2.msra.mxu0 0.0
    %1300 = vmatprep.subr.mxu0 0.0
    %1301 = vmatpush2.msra.mxu0 0.0
    %1302 = vmatprep.subr.mxu0 0.0
    %1303 = vmatpush2.msra.mxu0 0.0
    %1304 = vmatprep.subr.mxu0 0.0
    %1305 = vmatpush2.msra.mxu0 0.0
    %1306 = vmatprep.subr.mxu0 0.0
    %1307 = vmatpush2.msra.mxu0 0.0
    %1308 = vmatprep.subr.mxu0 0.0
    %1309 = vmatpush2.msra.mxu0 0.0
    %1310 = vmatprep.subr.mxu0 0.0
    %1311 = vmatpush2.msra.mxu0 0.0
    %1312 = vmatprep.subr.mxu0 0.0
    %1313 = vmatpush2.msra.mxu0 0.0
    %1314 = vmatprep.subr.mxu0 0.0
    %1315 = vmatpush2.msra.mxu0 0.0
    %1316 = vmatprep.subr.mxu0 0.0
    %1317 = vmatpush2.msra.mxu0 0.0
    %1318 = vmatprep.subr.mxu0 0.0
    %1319 = vmatpush2.msra.mxu0 0.0
    %1320 = vmatprep.subr.mxu0 0.0
    %1321 = vmatpush2.msra.mxu0 0.0
    %1322 = vmatprep.subr.mxu0 0.0
    %1323 = vmatpush2.msra.mxu0 0.0
    %1324 = vmatprep.subr.mxu0 0.0
    %1325 = vmatpush2.msra.mxu0 0.0
    %1326 = vmatprep.subr.mxu0 0.0
    %1327 = vmatpush2.msra.mxu0 0.0
    %1328 = vmatprep.mubr.f32.mxu0 0.0
    %1329 = vmatmul.mubr.f32.gmra.mxu0 %v1259
    %v1330 = vpop.f32.mrf.mxu0
    %v1331 = vadd.f32 0.0, %v1330
    %v1332 = vpop.f32.mrf.mxu0
    %1333 = vmatprep.mubr.f32.mxu0 0.0
    %1334 = vmatmul.mubr.f32.gmra.mxu0 %v1262
    %v1335 = vpop.f32.mrf.mxu0
    %v1336 = vadd.f32 0.0, %v1335
    %v1337 = vpop.f32.mrf.mxu0
    %1338 = vdwg.mxu0
    %v1340 = vsel %vm599, %v848, 0
    %v1343 = vsel %vm599, %v921, 0
    %1345 = vmatprep.subr.mxu0 0.0
    %1346 = vmatpush1.msra.mxu0 0.0
    %1347 = vmatprep.subr.mxu0 0.0
    %1348 = vmatpush1.msra.mxu0 0.0
    %1349 = vmatprep.subr.mxu0 0.0
    %1350 = vmatpush1.msra.mxu0 0.0
    %1351 = vmatprep.subr.mxu0 0.0
    %1352 = vmatpush1.msra.mxu0 0.0
    %1353 = vmatprep.subr.mxu0 0.0
    %1354 = vmatpush1.msra.mxu0 0.0
    %1355 = vmatprep.subr.mxu0 0.0
    %1356 = vmatpush1.msra.mxu0 0.0
    %1357 = vmatprep.subr.mxu0 0.0
    %1358 = vmatpush1.msra.mxu0 0.0
    %1359 = vmatprep.subr.mxu0 0.0
    %1360 = vmatpush1.msra.mxu0 0.0
    %1361 = vmatprep.subr.mxu0 0.0
    %1362 = vmatpush1.msra.mxu0 0.0
    %1363 = vmatprep.subr.mxu0 0.0
    %1364 = vmatpush1.msra.mxu0 0.0
    %1365 = vmatprep.subr.mxu0 0.0
    %1366 = vmatpush1.msra.mxu0 0.0
    %1367 = vmatprep.subr.mxu0 0.0
    %1368 = vmatpush1.msra.mxu0 0.0
    %1369 = vmatprep.subr.mxu0 0.0
    %1370 = vmatpush1.msra.mxu0 0.0
    %1371 = vmatprep.subr.mxu0 0.0
    %1372 = vmatpush1.msra.mxu0 0.0
    %1373 = vmatprep.subr.mxu0 0.0
    %1374 = vmatpush1.msra.mxu0 0.0
    %1375 = vmatprep.subr.mxu0 0.0
    %1376 = vmatpush1.msra.mxu0 %v591
    %1377 = vmatprep.subr.mxu0 0.0
    %1378 = vmatpush2.msra.mxu0 0.0
    %1379 = vmatprep.subr.mxu0 0.0
    %1380 = vmatpush2.msra.mxu0 0.0
    %1381 = vmatprep.subr.mxu0 0.0
    %1382 = vmatpush2.msra.mxu0 0.0
    %1383 = vmatprep.subr.mxu0 0.0
    %1384 = vmatpush2.msra.mxu0 0.0
    %1385 = vmatprep.subr.mxu0 0.0
    %1386 = vmatpush2.msra.mxu0 0.0
    %1387 = vmatprep.subr.mxu0 0.0
    %1388 = vmatpush2.msra.mxu0 0.0
    %1389 = vmatprep.subr.mxu0 0.0
    %1390 = vmatpush2.msra.mxu0 0.0
    %1391 = vmatprep.subr.mxu0 0.0
    %1392 = vmatpush2.msra.mxu0 0.0
    %1393 = vmatprep.subr.mxu0 0.0
    %1394 = vmatpush2.msra.mxu0 0.0
    %1395 = vmatprep.subr.mxu0 0.0
    %1396 = vmatpush2.msra.mxu0 0.0
    %1397 = vmatprep.subr.mxu0 0.0
    %1398 = vmatpush2.msra.mxu0 0.0
    %1399 = vmatprep.subr.mxu0 0.0
    %1400 = vmatpush2.msra.mxu0 0.0
    %1401 = vmatprep.subr.mxu0 0.0
    %1402 = vmatpush2.msra.mxu0 0.0
    %1403 = vmatprep.subr.mxu0 0.0
    %1404 = vmatpush2.msra.mxu0 0.0
    %1405 = vmatprep.subr.mxu0 0.0
    %1406 = vmatpush2.msra.mxu0 0.0
    %1407 = vmatprep.subr.mxu0 0.0
    %1408 = vmatpush2.msra.mxu0 0.0
    %1409 = vmatprep.mubr.f32.mxu0 0.0
    %1410 = vmatmul.mubr.f32.gmra.mxu0 %v1340
    %v1411 = vpop.f32.mrf.mxu0
    %v1412 = vadd.f32 %v1331, %v1411
    %v1413 = vpop.f32.mrf.mxu0
    %1414 = vmatprep.mubr.f32.mxu0 0.0
    %1415 = vmatmul.mubr.f32.gmra.mxu0 %v1343
    %v1416 = vpop.f32.mrf.mxu0
    %v1417 = vadd.f32 %v1336, %v1416
    %v1418 = vpop.f32.mrf.mxu0
    %1419 = vdwg.mxu0
    %1420 = vrot.lane.b32.xlu0 %v398, 112
    %v1421 = vpop.permute.xlu0 %1420
    %1422 = vrot.lane.b32.xlu0 %v488, 112
    %v1423 = vpop.permute.xlu0 %1422
    %v1424 = vsel %vm599, %v1421, 0
    %v1426 = vsel %vm599, %v1423, 0
    %1428 = vmatprep.subr.mxu0 0.0
    %1429 = vmatpush1.xpose.msra.mxu0 0.0
    %1430 = vmatprep.subr.mxu0 0.0
    %1431 = vmatpush1.xpose.msra.mxu0 0.0
    %1432 = vmatprep.subr.mxu0 0.0
    %1433 = vmatpush1.xpose.msra.mxu0 0.0
    %1434 = vmatprep.subr.mxu0 0.0
    %1435 = vmatpush1.xpose.msra.mxu0 0.0
    %1436 = vmatprep.subr.mxu0 0.0
    %1437 = vmatpush1.xpose.msra.mxu0 0.0
    %1438 = vmatprep.subr.mxu0 0.0
    %1439 = vmatpush1.xpose.msra.mxu0 0.0
    %1440 = vmatprep.subr.mxu0 0.0
    %1441 = vmatpush1.xpose.msra.mxu0 0.0
    %1442 = vmatprep.subr.mxu0 0.0
    %1443 = vmatpush1.xpose.msra.mxu0 0.0
    %1444 = vmatprep.subr.mxu0 0.0
    %1445 = vmatpush1.xpose.msra.mxu0 0.0
    %1446 = vmatprep.subr.mxu0 0.0
    %1447 = vmatpush1.xpose.msra.mxu0 0.0
    %1448 = vmatprep.subr.mxu0 0.0
    %1449 = vmatpush1.xpose.msra.mxu0 0.0
    %1450 = vmatprep.subr.mxu0 0.0
    %1451 = vmatpush1.xpose.msra.mxu0 0.0
    %1452 = vmatprep.subr.mxu0 0.0
    %1453 = vmatpush1.xpose.msra.mxu0 0.0
    %1454 = vmatprep.subr.mxu0 0.0
    %1455 = vmatpush1.xpose.msra.mxu0 0.0
    %1456 = vmatprep.subr.mxu0 0.0
    %1457 = vmatpush1.xpose.msra.mxu0 0.0
    %1458 = vmatprep.subr.mxu0 0.0
    %1459 = vmatpush1.xpose.msra.mxu0 %v1426
    %1460 = vmatprep.subr.mxu0 0.0
    %1461 = vmatpush2.xpose.msra.mxu0 0.0
    %1462 = vmatprep.subr.mxu0 0.0
    %1463 = vmatpush2.xpose.msra.mxu0 0.0
    %1464 = vmatprep.subr.mxu0 0.0
    %1465 = vmatpush2.xpose.msra.mxu0 0.0
    %1466 = vmatprep.subr.mxu0 0.0
    %1467 = vmatpush2.xpose.msra.mxu0 0.0
    %1468 = vmatprep.subr.mxu0 0.0
    %1469 = vmatpush2.xpose.msra.mxu0 0.0
    %1470 = vmatprep.subr.mxu0 0.0
    %1471 = vmatpush2.xpose.msra.mxu0 0.0
    %1472 = vmatprep.subr.mxu0 0.0
    %1473 = vmatpush2.xpose.msra.mxu0 0.0
    %1474 = vmatprep.subr.mxu0 0.0
    %1475 = vmatpush2.xpose.msra.mxu0 0.0
    %1476 = vmatprep.subr.mxu0 0.0
    %1477 = vmatpush2.xpose.msra.mxu0 0.0
    %1478 = vmatprep.subr.mxu0 0.0
    %1479 = vmatpush2.xpose.msra.mxu0 0.0
    %1480 = vmatprep.subr.mxu0 0.0
    %1481 = vmatpush2.xpose.msra.mxu0 0.0
    %1482 = vmatprep.subr.mxu0 0.0
    %1483 = vmatpush2.xpose.msra.mxu0 0.0
    %1484 = vmatprep.subr.mxu0 0.0
    %1485 = vmatpush2.xpose.msra.mxu0 0.0
    %1486 = vmatprep.subr.mxu0 0.0
    %1487 = vmatpush2.xpose.msra.mxu0 0.0
    %1488 = vmatprep.subr.mxu0 0.0
    %1489 = vmatpush2.xpose.msra.mxu0 0.0
    %1490 = vmatprep.subr.mxu0 0.0
    %1491 = vmatpush2.xpose.msra.mxu0 0.0
    %1492 = vmatprep.mubr.f32.mxu0 0.0
    %1493 = vmatmul.mubr.f32.gmra.mxu0 %v1424
    %v1494 = vpop.f32.mrf.mxu0
    %v1495 = vadd.f32 0.0, %v1494
    %v1496 = vpop.f32.mrf.mxu0
    %1497 = vdwg.mxu0
    %1498 = vrot.lane.b32.xlu0 %v403, 112
    %v1499 = vpop.permute.xlu0 %1498
    %1500 = vrot.lane.b32.xlu0 %v493, 112
    %v1501 = vpop.permute.xlu0 %1500
    %v1502 = vsel %vm599, %v1499, 0
    %v1504 = vsel %vm599, %v1501, 0
    %1506 = vmatprep.subr.mxu0 0.0
    %1507 = vmatpush1.xpose.msra.mxu0 0.0
    %1508 = vmatprep.subr.mxu0 0.0
    %1509 = vmatpush1.xpose.msra.mxu0 0.0
    %1510 = vmatprep.subr.mxu0 0.0
    %1511 = vmatpush1.xpose.msra.mxu0 0.0
    %1512 = vmatprep.subr.mxu0 0.0
    %1513 = vmatpush1.xpose.msra.mxu0 0.0
    %1514 = vmatprep.subr.mxu0 0.0
    %1515 = vmatpush1.xpose.msra.mxu0 0.0
    %1516 = vmatprep.subr.mxu0 0.0
    %1517 = vmatpush1.xpose.msra.mxu0 0.0
    %1518 = vmatprep.subr.mxu0 0.0
    %1519 = vmatpush1.xpose.msra.mxu0 0.0
    %1520 = vmatprep.subr.mxu0 0.0
    %1521 = vmatpush1.xpose.msra.mxu0 0.0
    %1522 = vmatprep.subr.mxu0 0.0
    %1523 = vmatpush1.xpose.msra.mxu0 0.0
    %1524 = vmatprep.subr.mxu0 0.0
    %1525 = vmatpush1.xpose.msra.mxu0 0.0
    %1526 = vmatprep.subr.mxu0 0.0
    %1527 = vmatpush1.xpose.msra.mxu0 0.0
    %1528 = vmatprep.subr.mxu0 0.0
    %1529 = vmatpush1.xpose.msra.mxu0 0.0
    %1530 = vmatprep.subr.mxu0 0.0
    %1531 = vmatpush1.xpose.msra.mxu0 0.0
    %1532 = vmatprep.subr.mxu0 0.0
    %1533 = vmatpush1.xpose.msra.mxu0 0.0
    %1534 = vmatprep.subr.mxu0 0.0
    %1535 = vmatpush1.xpose.msra.mxu0 0.0
    %1536 = vmatprep.subr.mxu0 0.0
    %1537 = vmatpush1.xpose.msra.mxu0 %v1504
    %1538 = vmatprep.subr.mxu0 0.0
    %1539 = vmatpush2.xpose.msra.mxu0 0.0
    %1540 = vmatprep.subr.mxu0 0.0
    %1541 = vmatpush2.xpose.msra.mxu0 0.0
    %1542 = vmatprep.subr.mxu0 0.0
    %1543 = vmatpush2.xpose.msra.mxu0 0.0
    %1544 = vmatprep.subr.mxu0 0.0
    %1545 = vmatpush2.xpose.msra.mxu0 0.0
    %1546 = vmatprep.subr.mxu0 0.0
    %1547 = vmatpush2.xpose.msra.mxu0 0.0
    %1548 = vmatprep.subr.mxu0 0.0
    %1549 = vmatpush2.xpose.msra.mxu0 0.0
    %1550 = vmatprep.subr.mxu0 0.0
    %1551 = vmatpush2.xpose.msra.mxu0 0.0
    %1552 = vmatprep.subr.mxu0 0.0
    %1553 = vmatpush2.xpose.msra.mxu0 0.0
    %1554 = vmatprep.subr.mxu0 0.0
    %1555 = vmatpush2.xpose.msra.mxu0 0.0
    %1556 = vmatprep.subr.mxu0 0.0
    %1557 = vmatpush2.xpose.msra.mxu0 0.0
    %1558 = vmatprep.subr.mxu0 0.0
    %1559 = vmatpush2.xpose.msra.mxu0 0.0
    %1560 = vmatprep.subr.mxu0 0.0
    %1561 = vmatpush2.xpose.msra.mxu0 0.0
    %1562 = vmatprep.subr.mxu0 0.0
    %1563 = vmatpush2.xpose.msra.mxu0 0.0
    %1564 = vmatprep.subr.mxu0 0.0
    %1565 = vmatpush2.xpose.msra.mxu0 0.0
    %1566 = vmatprep.subr.mxu0 0.0
    %1567 = vmatpush2.xpose.msra.mxu0 0.0
    %1568 = vmatprep.subr.mxu0 0.0
    %1569 = vmatpush2.xpose.msra.mxu0 0.0
    %1570 = vmatprep.mubr.f32.mxu0 0.0
    %1571 = vmatmul.mubr.f32.gmra.mxu0 %v1502
    %v1572 = vpop.f32.mrf.mxu0
    %v1573 = vadd.f32 0.0, %v1572
    %v1574 = vpop.f32.mrf.mxu0
    %1575 = vdwg.mxu0
    %v1576 = vsel %vm753, %v1495, -1e+30
    %v1577 = vsel %vm753, %v1573, -1e+30
    %v1578 = vsel %vm599, %v1576, -inf
    %1579 = vmax.xlane.f32.xlu0 %v1578
    %v1580 = vpop.xlane.xlu0 %1579
    %v1581 = vsel %vm599, %v1577, -inf
    %1582 = vmax.xlane.f32.xlu0 %v1581
    %v1583 = vpop.xlane.xlu0 %1582
    %v1584 = vsub.f32 %v1576, %v1580
    %v1585 = vsub.f32 %v1577, %v1583
    %v1586 = vmul.f32 %v1584, 1.442695
    %v1587 = vpow.pop %v1586
    %v1588 = vmul.f32 %v1585, 1.442695
    %v1589 = vpow.pop %v1588
    %v1590 = vsel %vm599, %v1587, 0.0
    %1591 = vadd.xlane.f32.xlu0 %v1590
    %v1592 = vpop.xlane.xlu0 %1591
    %v1593 = vsel %vm599, %v1589, 0.0
    %1594 = vadd.xlane.f32.xlu0 %v1593
    %v1595 = vpop.xlane.xlu0 %1594
    %v1596 = vrcp.pop %v1592
    %v1597 = vrcp.pop %v1595
    %v1598 = vmul.f32 %v1587, %v1596
    %v1599 = vmul.f32 %v1589, %v1597
    %1600 = vrot.lane.b32.xlu0 %v578, 112
    %v1601 = vpop.permute.xlu0 %1600
    %v1604 = vsel %vm599, %v1598, 0
    %1606 = vmatprep.subr.mxu0 0.0
    %1607 = vmatpush1.msra.mxu0 0.0
    %1608 = vmatprep.subr.mxu0 0.0
    %1609 = vmatpush1.msra.mxu0 0.0
    %1610 = vmatprep.subr.mxu0 0.0
    %1611 = vmatpush1.msra.mxu0 0.0
    %1612 = vmatprep.subr.mxu0 0.0
    %1613 = vmatpush1.msra.mxu0 0.0
    %1614 = vmatprep.subr.mxu0 0.0
    %1615 = vmatpush1.msra.mxu0 0.0
    %1616 = vmatprep.subr.mxu0 0.0
    %1617 = vmatpush1.msra.mxu0 0.0
    %1618 = vmatprep.subr.mxu0 0.0
    %1619 = vmatpush1.msra.mxu0 0.0
    %1620 = vmatprep.subr.mxu0 0.0
    %1621 = vmatpush1.msra.mxu0 0.0
    %1622 = vmatprep.subr.mxu0 0.0
    %1623 = vmatpush1.msra.mxu0 0.0
    %1624 = vmatprep.subr.mxu0 0.0
    %1625 = vmatpush1.msra.mxu0 0.0
    %1626 = vmatprep.subr.mxu0 0.0
    %1627 = vmatpush1.msra.mxu0 0.0
    %1628 = vmatprep.subr.mxu0 0.0
    %1629 = vmatpush1.msra.mxu0 0.0
    %1630 = vmatprep.subr.mxu0 0.0
    %1631 = vmatpush1.msra.mxu0 0.0
    %1632 = vmatprep.subr.mxu0 0.0
    %1633 = vmatpush1.msra.mxu0 0.0
    %1634 = vmatprep.subr.mxu0 0.0
    %1635 = vmatpush1.msra.mxu0 0.0
    %1636 = vmatprep.subr.mxu0 0.0
    %1637 = vmatpush1.msra.mxu0 %v1601
    %1638 = vmatprep.subr.mxu0 0.0
    %1639 = vmatpush2.msra.mxu0 0.0
    %1640 = vmatprep.subr.mxu0 0.0
    %1641 = vmatpush2.msra.mxu0 0.0
    %1642 = vmatprep.subr.mxu0 0.0
    %1643 = vmatpush2.msra.mxu0 0.0
    %1644 = vmatprep.subr.mxu0 0.0
    %1645 = vmatpush2.msra.mxu0 0.0
    %1646 = vmatprep.subr.mxu0 0.0
    %1647 = vmatpush2.msra.mxu0 0.0
    %1648 = vmatprep.subr.mxu0 0.0
    %1649 = vmatpush2.msra.mxu0 0.0
    %1650 = vmatprep.subr.mxu0 0.0
    %1651 = vmatpush2.msra.mxu0 0.0
    %1652 = vmatprep.subr.mxu0 0.0
    %1653 = vmatpush2.msra.mxu0 0.0
    %1654 = vmatprep.subr.mxu0 0.0
    %1655 = vmatpush2.msra.mxu0 0.0
    %1656 = vmatprep.subr.mxu0 0.0
    %1657 = vmatpush2.msra.mxu0 0.0
    %1658 = vmatprep.subr.mxu0 0.0
    %1659 = vmatpush2.msra.mxu0 0.0
    %1660 = vmatprep.subr.mxu0 0.0
    %1661 = vmatpush2.msra.mxu0 0.0
    %1662 = vmatprep.subr.mxu0 0.0
    %1663 = vmatpush2.msra.mxu0 0.0
    %1664 = vmatprep.subr.mxu0 0.0
    %1665 = vmatpush2.msra.mxu0 0.0
    %1666 = vmatprep.subr.mxu0 0.0
    %1667 = vmatpush2.msra.mxu0 0.0
    %1668 = vmatprep.subr.mxu0 0.0
    %1669 = vmatpush2.msra.mxu0 0.0
    %1670 = vmatprep.mubr.f32.mxu0 0.0
    %1671 = vmatmul.mubr.f32.gmra.mxu0 %v1604
    %v1672 = vpop.f32.mrf.mxu0
    %v1673 = vadd.f32 0.0, %v1672
    %v1674 = vpop.f32.mrf.mxu0
    %1675 = vdwg.mxu0
    %1676 = vrot.lane.b32.xlu0 %v583, 112
    %v1677 = vpop.permute.xlu0 %1676
    %v1680 = vsel %vm599, %v1599, 0
    %1682 = vmatprep.subr.mxu0 0.0
    %1683 = vmatpush1.msra.mxu0 0.0
    %1684 = vmatprep.subr.mxu0 0.0
    %1685 = vmatpush1.msra.mxu0 0.0
    %1686 = vmatprep.subr.mxu0 0.0
    %1687 = vmatpush1.msra.mxu0 0.0
    %1688 = vmatprep.subr.mxu0 0.0
    %1689 = vmatpush1.msra.mxu0 0.0
    %1690 = vmatprep.subr.mxu0 0.0
    %1691 = vmatpush1.msra.mxu0 0.0
    %1692 = vmatprep.subr.mxu0 0.0
    %1693 = vmatpush1.msra.mxu0 0.0
    %1694 = vmatprep.subr.mxu0 0.0
    %1695 = vmatpush1.msra.mxu0 0.0
    %1696 = vmatprep.subr.mxu0 0.0
    %1697 = vmatpush1.msra.mxu0 0.0
    %1698 = vmatprep.subr.mxu0 0.0
    %1699 = vmatpush1.msra.mxu0 0.0
    %1700 = vmatprep.subr.mxu0 0.0
    %1701 = vmatpush1.msra.mxu0 0.0
    %1702 = vmatprep.subr.mxu0 0.0
    %1703 = vmatpush1.msra.mxu0 0.0
    %1704 = vmatprep.subr.mxu0 0.0
    %1705 = vmatpush1.msra.mxu0 0.0
    %1706 = vmatprep.subr.mxu0 0.0
    %1707 = vmatpush1.msra.mxu0 0.0
    %1708 = vmatprep.subr.mxu0 0.0
    %1709 = vmatpush1.msra.mxu0 0.0
    %1710 = vmatprep.subr.mxu0 0.0
    %1711 = vmatpush1.msra.mxu0 0.0
    %1712 = vmatprep.subr.mxu0 0.0
    %1713 = vmatpush1.msra.mxu0 %v1677
    %1714 = vmatprep.subr.mxu0 0.0
    %1715 = vmatpush2.msra.mxu0 0.0
    %1716 = vmatprep.subr.mxu0 0.0
    %1717 = vmatpush2.msra.mxu0 0.0
    %1718 = vmatprep.subr.mxu0 0.0
    %1719 = vmatpush2.msra.mxu0 0.0
    %1720 = vmatprep.subr.mxu0 0.0
    %1721 = vmatpush2.msra.mxu0 0.0
    %1722 = vmatprep.subr.mxu0 0.0
    %1723 = vmatpush2.msra.mxu0 0.0
    %1724 = vmatprep.subr.mxu0 0.0
    %1725 = vmatpush2.msra.mxu0 0.0
    %1726 = vmatprep.subr.mxu0 0.0
    %1727 = vmatpush2.msra.mxu0 0.0
    %1728 = vmatprep.subr.mxu0 0.0
    %1729 = vmatpush2.msra.mxu0 0.0
    %1730 = vmatprep.subr.mxu0 0.0
    %1731 = vmatpush2.msra.mxu0 0.0
    %1732 = vmatprep.subr.mxu0 0.0
    %1733 = vmatpush2.msra.mxu0 0.0
    %1734 = vmatprep.subr.mxu0 0.0
    %1735 = vmatpush2.msra.mxu0 0.0
    %1736 = vmatprep.subr.mxu0 0.0
    %1737 = vmatpush2.msra.mxu0 0.0
    %1738 = vmatprep.subr.mxu0 0.0
    %1739 = vmatpush2.msra.mxu0 0.0
    %1740 = vmatprep.subr.mxu0 0.0
    %1741 = vmatpush2.msra.mxu0 0.0
    %1742 = vmatprep.subr.mxu0 0.0
    %1743 = vmatpush2.msra.mxu0 0.0
    %1744 = vmatprep.subr.mxu0 0.0
    %1745 = vmatpush2.msra.mxu0 0.0
    %1746 = vmatprep.mubr.f32.mxu0 0.0
    %1747 = vmatmul.mubr.f32.gmra.mxu0 %v1680
    %v1748 = vpop.f32.mrf.mxu0
    %v1749 = vadd.f32 0.0, %v1748
    %v1750 = vpop.f32.mrf.mxu0
    %1751 = vdwg.mxu0
    %v1753 = vsel %vm599, %v1673, 0
    %v1756 = vsel %vm599, %v1749, 0
    %1758 = vmatprep.subr.mxu0 0.0
    %1759 = vmatpush1.msra.mxu0 0.0
    %1760 = vmatprep.subr.mxu0 0.0
    %1761 = vmatpush1.msra.mxu0 0.0
    %1762 = vmatprep.subr.mxu0 0.0
    %1763 = vmatpush1.msra.mxu0 0.0
    %1764 = vmatprep.subr.mxu0 0.0
    %1765 = vmatpush1.msra.mxu0 0.0
    %1766 = vmatprep.subr.mxu0 0.0
    %1767 = vmatpush1.msra.mxu0 0.0
    %1768 = vmatprep.subr.mxu0 0.0
    %1769 = vmatpush1.msra.mxu0 0.0
    %1770 = vmatprep.subr.mxu0 0.0
    %1771 = vmatpush1.msra.mxu0 0.0
    %1772 = vmatprep.subr.mxu0 0.0
    %1773 = vmatpush1.msra.mxu0 0.0
    %1774 = vmatprep.subr.mxu0 0.0
    %1775 = vmatpush1.msra.mxu0 0.0
    %1776 = vmatprep.subr.mxu0 0.0
    %1777 = vmatpush1.msra.mxu0 0.0
    %1778 = vmatprep.subr.mxu0 0.0
    %1779 = vmatpush1.msra.mxu0 0.0
    %1780 = vmatprep.subr.mxu0 0.0
    %1781 = vmatpush1.msra.mxu0 0.0
    %1782 = vmatprep.subr.mxu0 0.0
    %1783 = vmatpush1.msra.mxu0 0.0
    %1784 = vmatprep.subr.mxu0 0.0
    %1785 = vmatpush1.msra.mxu0 0.0
    %1786 = vmatprep.subr.mxu0 0.0
    %1787 = vmatpush1.msra.mxu0 0.0
    %1788 = vmatprep.subr.mxu0 0.0
    %1789 = vmatpush1.msra.mxu0 %v593
    %1790 = vmatprep.subr.mxu0 0.0
    %1791 = vmatpush2.msra.mxu0 0.0
    %1792 = vmatprep.subr.mxu0 0.0
    %1793 = vmatpush2.msra.mxu0 0.0
    %1794 = vmatprep.subr.mxu0 0.0
    %1795 = vmatpush2.msra.mxu0 0.0
    %1796 = vmatprep.subr.mxu0 0.0
    %1797 = vmatpush2.msra.mxu0 0.0
    %1798 = vmatprep.subr.mxu0 0.0
    %1799 = vmatpush2.msra.mxu0 0.0
    %1800 = vmatprep.subr.mxu0 0.0
    %1801 = vmatpush2.msra.mxu0 0.0
    %1802 = vmatprep.subr.mxu0 0.0
    %1803 = vmatpush2.msra.mxu0 0.0
    %1804 = vmatprep.subr.mxu0 0.0
    %1805 = vmatpush2.msra.mxu0 0.0
    %1806 = vmatprep.subr.mxu0 0.0
    %1807 = vmatpush2.msra.mxu0 0.0
    %1808 = vmatprep.subr.mxu0 0.0
    %1809 = vmatpush2.msra.mxu0 0.0
    %1810 = vmatprep.subr.mxu0 0.0
    %1811 = vmatpush2.msra.mxu0 0.0
    %1812 = vmatprep.subr.mxu0 0.0
    %1813 = vmatpush2.msra.mxu0 0.0
    %1814 = vmatprep.subr.mxu0 0.0
    %1815 = vmatpush2.msra.mxu0 0.0
    %1816 = vmatprep.subr.mxu0 0.0
    %1817 = vmatpush2.msra.mxu0 0.0
    %1818 = vmatprep.subr.mxu0 0.0
    %1819 = vmatpush2.msra.mxu0 0.0
    %1820 = vmatprep.subr.mxu0 0.0
    %1821 = vmatpush2.msra.mxu0 0.0
    %1822 = vmatprep.mubr.f32.mxu0 0.0
    %1823 = vmatmul.mubr.f32.gmra.mxu0 %v1753
    %v1824 = vpop.f32.mrf.mxu0
    %v1825 = vadd.f32 0.0, %v1824
    %v1826 = vpop.f32.mrf.mxu0
    %1827 = vmatprep.mubr.f32.mxu0 0.0
    %1828 = vmatmul.mubr.f32.gmra.mxu0 %v1756
    %v1829 = vpop.f32.mrf.mxu0
    %v1830 = vadd.f32 0.0, %v1829
    %v1831 = vpop.f32.mrf.mxu0
    %1832 = vdwg.mxu0
    %v1833 = vadd.f32 %v1412, %v1825
    %v1834 = vadd.f32 %v1417, %v1830
    %1835 = vrot.lane.b32.xlu0 %v398, 104
    %v1836 = vpop.permute.xlu0 %1835
    %1837 = vrot.lane.b32.xlu0 %v488, 104
    %v1838 = vpop.permute.xlu0 %1837
    %v1839 = vsel %vm599, %v1836, 0
    %v1841 = vsel %vm599, %v1838, 0
    %1843 = vmatprep.subr.mxu0 0.0
    %1844 = vmatpush1.xpose.msra.mxu0 0.0
    %1845 = vmatprep.subr.mxu0 0.0
    %1846 = vmatpush1.xpose.msra.mxu0 0.0
    %1847 = vmatprep.subr.mxu0 0.0
    %1848 = vmatpush1.xpose.msra.mxu0 0.0
    %1849 = vmatprep.subr.mxu0 0.0
    %1850 = vmatpush1.xpose.msra.mxu0 0.0
    %1851 = vmatprep.subr.mxu0 0.0
    %1852 = vmatpush1.xpose.msra.mxu0 0.0
    %1853 = vmatprep.subr.mxu0 0.0
    %1854 = vmatpush1.xpose.msra.mxu0 0.0
    %1855 = vmatprep.subr.mxu0 0.0
    %1856 = vmatpush1.xpose.msra.mxu0 0.0
    %1857 = vmatprep.subr.mxu0 0.0
    %1858 = vmatpush1.xpose.msra.mxu0 0.0
    %1859 = vmatprep.subr.mxu0 0.0
    %1860 = vmatpush1.xpose.msra.mxu0 0.0
    %1861 = vmatprep.subr.mxu0 0.0
    %1862 = vmatpush1.xpose.msra.mxu0 0.0
    %1863 = vmatprep.subr.mxu0 0.0
    %1864 = vmatpush1.xpose.msra.mxu0 0.0
    %1865 = vmatprep.subr.mxu0 0.0
    %1866 = vmatpush1.xpose.msra.mxu0 0.0
    %1867 = vmatprep.subr.mxu0 0.0
    %1868 = vmatpush1.xpose.msra.mxu0 0.0
    %1869 = vmatprep.subr.mxu0 0.0
    %1870 = vmatpush1.xpose.msra.mxu0 0.0
    %1871 = vmatprep.subr.mxu0 0.0
    %1872 = vmatpush1.xpose.msra.mxu0 0.0
    %1873 = vmatprep.subr.mxu0 0.0
    %1874 = vmatpush1.xpose.msra.mxu0 %v1841
    %1875 = vmatprep.subr.mxu0 0.0
    %1876 = vmatpush2.xpose.msra.mxu0 0.0
    %1877 = vmatprep.subr.mxu0 0.0
    %1878 = vmatpush2.xpose.msra.mxu0 0.0
    %1879 = vmatprep.subr.mxu0 0.0
    %1880 = vmatpush2.xpose.msra.mxu0 0.0
    %1881 = vmatprep.subr.mxu0 0.0
    %1882 = vmatpush2.xpose.msra.mxu0 0.0
    %1883 = vmatprep.subr.mxu0 0.0
    %1884 = vmatpush2.xpose.msra.mxu0 0.0
    %1885 = vmatprep.subr.mxu0 0.0
    %1886 = vmatpush2.xpose.msra.mxu0 0.0
    %1887 = vmatprep.subr.mxu0 0.0
    %1888 = vmatpush2.xpose.msra.mxu0 0.0
    %1889 = vmatprep.subr.mxu0 0.0
    %1890 = vmatpush2.xpose.msra.mxu0 0.0
    %1891 = vmatprep.subr.mxu0 0.0
    %1892 = vmatpush2.xpose.msra.mxu0 0.0
    %1893 = vmatprep.subr.mxu0 0.0
    %1894 = vmatpush2.xpose.msra.mxu0 0.0
    %1895 = vmatprep.subr.mxu0 0.0
    %1896 = vmatpush2.xpose.msra.mxu0 0.0
    %1897 = vmatprep.subr.mxu0 0.0
    %1898 = vmatpush2.xpose.msra.mxu0 0.0
    %1899 = vmatprep.subr.mxu0 0.0
    %1900 = vmatpush2.xpose.msra.mxu0 0.0
    %1901 = vmatprep.subr.mxu0 0.0
    %1902 = vmatpush2.xpose.msra.mxu0 0.0
    %1903 = vmatprep.subr.mxu0 0.0
    %1904 = vmatpush2.xpose.msra.mxu0 0.0
    %1905 = vmatprep.subr.mxu0 0.0
    %1906 = vmatpush2.xpose.msra.mxu0 0.0
    %1907 = vmatprep.mubr.f32.mxu0 0.0
    %1908 = vmatmul.mubr.f32.gmra.mxu0 %v1839
    %v1909 = vpop.f32.mrf.mxu0
    %v1910 = vadd.f32 0.0, %v1909
    %v1911 = vpop.f32.mrf.mxu0
    %1912 = vdwg.mxu0
    %1913 = vrot.lane.b32.xlu0 %v403, 104
    %v1914 = vpop.permute.xlu0 %1913
    %1915 = vrot.lane.b32.xlu0 %v493, 104
    %v1916 = vpop.permute.xlu0 %1915
    %v1917 = vsel %vm599, %v1914, 0
    %v1919 = vsel %vm599, %v1916, 0
    %1921 = vmatprep.subr.mxu0 0.0
    %1922 = vmatpush1.xpose.msra.mxu0 0.0
    %1923 = vmatprep.subr.mxu0 0.0
    %1924 = vmatpush1.xpose.msra.mxu0 0.0
    %1925 = vmatprep.subr.mxu0 0.0
    %1926 = vmatpush1.xpose.msra.mxu0 0.0
    %1927 = vmatprep.subr.mxu0 0.0
    %1928 = vmatpush1.xpose.msra.mxu0 0.0
    %1929 = vmatprep.subr.mxu0 0.0
    %1930 = vmatpush1.xpose.msra.mxu0 0.0
    %1931 = vmatprep.subr.mxu0 0.0
    %1932 = vmatpush1.xpose.msra.mxu0 0.0
    %1933 = vmatprep.subr.mxu0 0.0
    %1934 = vmatpush1.xpose.msra.mxu0 0.0
    %1935 = vmatprep.subr.mxu0 0.0
    %1936 = vmatpush1.xpose.msra.mxu0 0.0
    %1937 = vmatprep.subr.mxu0 0.0
    %1938 = vmatpush1.xpose.msra.mxu0 0.0
    %1939 = vmatprep.subr.mxu0 0.0
    %1940 = vmatpush1.xpose.msra.mxu0 0.0
    %1941 = vmatprep.subr.mxu0 0.0
    %1942 = vmatpush1.xpose.msra.mxu0 0.0
    %1943 = vmatprep.subr.mxu0 0.0
    %1944 = vmatpush1.xpose.msra.mxu0 0.0
    %1945 = vmatprep.subr.mxu0 0.0
    %1946 = vmatpush1.xpose.msra.mxu0 0.0
    %1947 = vmatprep.subr.mxu0 0.0
    %1948 = vmatpush1.xpose.msra.mxu0 0.0
    %1949 = vmatprep.subr.mxu0 0.0
    %1950 = vmatpush1.xpose.msra.mxu0 0.0
    %1951 = vmatprep.subr.mxu0 0.0
    %1952 = vmatpush1.xpose.msra.mxu0 %v1919
    %1953 = vmatprep.subr.mxu0 0.0
    %1954 = vmatpush2.xpose.msra.mxu0 0.0
    %1955 = vmatprep.subr.mxu0 0.0
    %1956 = vmatpush2.xpose.msra.mxu0 0.0
    %1957 = vmatprep.subr.mxu0 0.0
    %1958 = vmatpush2.xpose.msra.mxu0 0.0
    %1959 = vmatprep.subr.mxu0 0.0
    %1960 = vmatpush2.xpose.msra.mxu0 0.0
    %1961 = vmatprep.subr.mxu0 0.0
    %1962 = vmatpush2.xpose.msra.mxu0 0.0
    %1963 = vmatprep.subr.mxu0 0.0
    %1964 = vmatpush2.xpose.msra.mxu0 0.0
    %1965 = vmatprep.subr.mxu0 0.0
    %1966 = vmatpush2.xpose.msra.mxu0 0.0
    %1967 = vmatprep.subr.mxu0 0.0
    %1968 = vmatpush2.xpose.msra.mxu0 0.0
    %1969 = vmatprep.subr.mxu0 0.0
    %1970 = vmatpush2.xpose.msra.mxu0 0.0
    %1971 = vmatprep.subr.mxu0 0.0
    %1972 = vmatpush2.xpose.msra.mxu0 0.0
    %1973 = vmatprep.subr.mxu0 0.0
    %1974 = vmatpush2.xpose.msra.mxu0 0.0
    %1975 = vmatprep.subr.mxu0 0.0
    %1976 = vmatpush2.xpose.msra.mxu0 0.0
    %1977 = vmatprep.subr.mxu0 0.0
    %1978 = vmatpush2.xpose.msra.mxu0 0.0
    %1979 = vmatprep.subr.mxu0 0.0
    %1980 = vmatpush2.xpose.msra.mxu0 0.0
    %1981 = vmatprep.subr.mxu0 0.0
    %1982 = vmatpush2.xpose.msra.mxu0 0.0
    %1983 = vmatprep.subr.mxu0 0.0
    %1984 = vmatpush2.xpose.msra.mxu0 0.0
    %1985 = vmatprep.mubr.f32.mxu0 0.0
    %1986 = vmatmul.mubr.f32.gmra.mxu0 %v1917
    %v1987 = vpop.f32.mrf.mxu0
    %v1988 = vadd.f32 0.0, %v1987
    %v1989 = vpop.f32.mrf.mxu0
    %1990 = vdwg.mxu0
    %v1991 = vsel %vm753, %v1910, -1e+30
    %v1992 = vsel %vm753, %v1988, -1e+30
    %v1993 = vsel %vm599, %v1991, -inf
    %1994 = vmax.xlane.f32.xlu0 %v1993
    %v1995 = vpop.xlane.xlu0 %1994
    %v1996 = vsel %vm599, %v1992, -inf
    %1997 = vmax.xlane.f32.xlu0 %v1996
    %v1998 = vpop.xlane.xlu0 %1997
    %v1999 = vsub.f32 %v1991, %v1995
    %v2000 = vsub.f32 %v1992, %v1998
    %v2001 = vmul.f32 %v1999, 1.442695
    %v2002 = vpow.pop %v2001
    %v2003 = vmul.f32 %v2000, 1.442695
    %v2004 = vpow.pop %v2003
    %v2005 = vsel %vm599, %v2002, 0.0
    %2006 = vadd.xlane.f32.xlu0 %v2005
    %v2007 = vpop.xlane.xlu0 %2006
    %v2008 = vsel %vm599, %v2004, 0.0
    %2009 = vadd.xlane.f32.xlu0 %v2008
    %v2010 = vpop.xlane.xlu0 %2009
    %v2011 = vrcp.pop %v2007
    %v2012 = vrcp.pop %v2010
    %v2013 = vmul.f32 %v2002, %v2011
    %v2014 = vmul.f32 %v2004, %v2012
    %2015 = vrot.lane.b32.xlu0 %v578, 104
    %v2016 = vpop.permute.xlu0 %2015
    %v2019 = vsel %vm599, %v2013, 0
    %2021 = vmatprep.subr.mxu0 0.0
    %2022 = vmatpush1.msra.mxu0 0.0
    %2023 = vmatprep.subr.mxu0 0.0
    %2024 = vmatpush1.msra.mxu0 0.0
    %2025 = vmatprep.subr.mxu0 0.0
    %2026 = vmatpush1.msra.mxu0 0.0
    %2027 = vmatprep.subr.mxu0 0.0
    %2028 = vmatpush1.msra.mxu0 0.0
    %2029 = vmatprep.subr.mxu0 0.0
    %2030 = vmatpush1.msra.mxu0 0.0
    %2031 = vmatprep.subr.mxu0 0.0
    %2032 = vmatpush1.msra.mxu0 0.0
    %2033 = vmatprep.subr.mxu0 0.0
    %2034 = vmatpush1.msra.mxu0 0.0
    %2035 = vmatprep.subr.mxu0 0.0
    %2036 = vmatpush1.msra.mxu0 0.0
    %2037 = vmatprep.subr.mxu0 0.0
    %2038 = vmatpush1.msra.mxu0 0.0
    %2039 = vmatprep.subr.mxu0 0.0
    %2040 = vmatpush1.msra.mxu0 0.0
    %2041 = vmatprep.subr.mxu0 0.0
    %2042 = vmatpush1.msra.mxu0 0.0
    %2043 = vmatprep.subr.mxu0 0.0
    %2044 = vmatpush1.msra.mxu0 0.0
    %2045 = vmatprep.subr.mxu0 0.0
    %2046 = vmatpush1.msra.mxu0 0.0
    %2047 = vmatprep.subr.mxu0 0.0
    %2048 = vmatpush1.msra.mxu0 0.0
    %2049 = vmatprep.subr.mxu0 0.0
    %2050 = vmatpush1.msra.mxu0 0.0
    %2051 = vmatprep.subr.mxu0 0.0
    %2052 = vmatpush1.msra.mxu0 %v2016
    %2053 = vmatprep.subr.mxu0 0.0
    %2054 = vmatpush2.msra.mxu0 0.0
    %2055 = vmatprep.subr.mxu0 0.0
    %2056 = vmatpush2.msra.mxu0 0.0
    %2057 = vmatprep.subr.mxu0 0.0
    %2058 = vmatpush2.msra.mxu0 0.0
    %2059 = vmatprep.subr.mxu0 0.0
    %2060 = vmatpush2.msra.mxu0 0.0
    %2061 = vmatprep.subr.mxu0 0.0
    %2062 = vmatpush2.msra.mxu0 0.0
    %2063 = vmatprep.subr.mxu0 0.0
    %2064 = vmatpush2.msra.mxu0 0.0
    %2065 = vmatprep.subr.mxu0 0.0
    %2066 = vmatpush2.msra.mxu0 0.0
    %2067 = vmatprep.subr.mxu0 0.0
    %2068 = vmatpush2.msra.mxu0 0.0
    %2069 = vmatprep.subr.mxu0 0.0
    %2070 = vmatpush2.msra.mxu0 0.0
    %2071 = vmatprep.subr.mxu0 0.0
    %2072 = vmatpush2.msra.mxu0 0.0
    %2073 = vmatprep.subr.mxu0 0.0
    %2074 = vmatpush2.msra.mxu0 0.0
    %2075 = vmatprep.subr.mxu0 0.0
    %2076 = vmatpush2.msra.mxu0 0.0
    %2077 = vmatprep.subr.mxu0 0.0
    %2078 = vmatpush2.msra.mxu0 0.0
    %2079 = vmatprep.subr.mxu0 0.0
    %2080 = vmatpush2.msra.mxu0 0.0
    %2081 = vmatprep.subr.mxu0 0.0
    %2082 = vmatpush2.msra.mxu0 0.0
    %2083 = vmatprep.subr.mxu0 0.0
    %2084 = vmatpush2.msra.mxu0 0.0
    %2085 = vmatprep.mubr.f32.mxu0 0.0
    %2086 = vmatmul.mubr.f32.gmra.mxu0 %v2019
    %v2087 = vpop.f32.mrf.mxu0
    %v2088 = vadd.f32 0.0, %v2087
    %v2089 = vpop.f32.mrf.mxu0
    %2090 = vdwg.mxu0
    %2091 = vrot.lane.b32.xlu0 %v583, 104
    %v2092 = vpop.permute.xlu0 %2091
    %v2095 = vsel %vm599, %v2014, 0
    %2097 = vmatprep.subr.mxu0 0.0
    %2098 = vmatpush1.msra.mxu0 0.0
    %2099 = vmatprep.subr.mxu0 0.0
    %2100 = vmatpush1.msra.mxu0 0.0
    %2101 = vmatprep.subr.mxu0 0.0
    %2102 = vmatpush1.msra.mxu0 0.0
    %2103 = vmatprep.subr.mxu0 0.0
    %2104 = vmatpush1.msra.mxu0 0.0
    %2105 = vmatprep.subr.mxu0 0.0
    %2106 = vmatpush1.msra.mxu0 0.0
    %2107 = vmatprep.subr.mxu0 0.0
    %2108 = vmatpush1.msra.mxu0 0.0
    %2109 = vmatprep.subr.mxu0 0.0
    %2110 = vmatpush1.msra.mxu0 0.0
    %2111 = vmatprep.subr.mxu0 0.0
    %2112 = vmatpush1.msra.mxu0 0.0
    %2113 = vmatprep.subr.mxu0 0.0
    %2114 = vmatpush1.msra.mxu0 0.0
    %2115 = vmatprep.subr.mxu0 0.0
    %2116 = vmatpush1.msra.mxu0 0.0
    %2117 = vmatprep.subr.mxu0 0.0
    %2118 = vmatpush1.msra.mxu0 0.0
    %2119 = vmatprep.subr.mxu0 0.0
    %2120 = vmatpush1.msra.mxu0 0.0
    %2121 = vmatprep.subr.mxu0 0.0
    %2122 = vmatpush1.msra.mxu0 0.0
    %2123 = vmatprep.subr.mxu0 0.0
    %2124 = vmatpush1.msra.mxu0 0.0
    %2125 = vmatprep.subr.mxu0 0.0
    %2126 = vmatpush1.msra.mxu0 0.0
    %2127 = vmatprep.subr.mxu0 0.0
    %2128 = vmatpush1.msra.mxu0 %v2092
    %2129 = vmatprep.subr.mxu0 0.0
    %2130 = vmatpush2.msra.mxu0 0.0
    %2131 = vmatprep.subr.mxu0 0.0
    %2132 = vmatpush2.msra.mxu0 0.0
    %2133 = vmatprep.subr.mxu0 0.0
    %2134 = vmatpush2.msra.mxu0 0.0
    %2135 = vmatprep.subr.mxu0 0.0
    %2136 = vmatpush2.msra.mxu0 0.0
    %2137 = vmatprep.subr.mxu0 0.0
    %2138 = vmatpush2.msra.mxu0 0.0
    %2139 = vmatprep.subr.mxu0 0.0
    %2140 = vmatpush2.msra.mxu0 0.0
    %2141 = vmatprep.subr.mxu0 0.0
    %2142 = vmatpush2.msra.mxu0 0.0
    %2143 = vmatprep.subr.mxu0 0.0
    %2144 = vmatpush2.msra.mxu0 0.0
    %2145 = vmatprep.subr.mxu0 0.0
    %2146 = vmatpush2.msra.mxu0 0.0
    %2147 = vmatprep.subr.mxu0 0.0
    %2148 = vmatpush2.msra.mxu0 0.0
    %2149 = vmatprep.subr.mxu0 0.0
    %2150 = vmatpush2.msra.mxu0 0.0
    %2151 = vmatprep.subr.mxu0 0.0
    %2152 = vmatpush2.msra.mxu0 0.0
    %2153 = vmatprep.subr.mxu0 0.0
    %2154 = vmatpush2.msra.mxu0 0.0
    %2155 = vmatprep.subr.mxu0 0.0
    %2156 = vmatpush2.msra.mxu0 0.0
    %2157 = vmatprep.subr.mxu0 0.0
    %2158 = vmatpush2.msra.mxu0 0.0
    %2159 = vmatprep.subr.mxu0 0.0
    %2160 = vmatpush2.msra.mxu0 0.0
    %2161 = vmatprep.mubr.f32.mxu0 0.0
    %2162 = vmatmul.mubr.f32.gmra.mxu0 %v2095
    %v2163 = vpop.f32.mrf.mxu0
    %v2164 = vadd.f32 0.0, %v2163
    %v2165 = vpop.f32.mrf.mxu0
    %2166 = vdwg.mxu0
    %v2168 = vsel %vm599, %v2088, 0
    %v2171 = vsel %vm599, %v2164, 0
    %2173 = vmatprep.subr.mxu0 0.0
    %2174 = vmatpush1.msra.mxu0 0.0
    %2175 = vmatprep.subr.mxu0 0.0
    %2176 = vmatpush1.msra.mxu0 0.0
    %2177 = vmatprep.subr.mxu0 0.0
    %2178 = vmatpush1.msra.mxu0 0.0
    %2179 = vmatprep.subr.mxu0 0.0
    %2180 = vmatpush1.msra.mxu0 0.0
    %2181 = vmatprep.subr.mxu0 0.0
    %2182 = vmatpush1.msra.mxu0 0.0
    %2183 = vmatprep.subr.mxu0 0.0
    %2184 = vmatpush1.msra.mxu0 0.0
    %2185 = vmatprep.subr.mxu0 0.0
    %2186 = vmatpush1.msra.mxu0 0.0
    %2187 = vmatprep.subr.mxu0 0.0
    %2188 = vmatpush1.msra.mxu0 0.0
    %2189 = vmatprep.subr.mxu0 0.0
    %2190 = vmatpush1.msra.mxu0 0.0
    %2191 = vmatprep.subr.mxu0 0.0
    %2192 = vmatpush1.msra.mxu0 0.0
    %2193 = vmatprep.subr.mxu0 0.0
    %2194 = vmatpush1.msra.mxu0 0.0
    %2195 = vmatprep.subr.mxu0 0.0
    %2196 = vmatpush1.msra.mxu0 0.0
    %2197 = vmatprep.subr.mxu0 0.0
    %2198 = vmatpush1.msra.mxu0 0.0
    %2199 = vmatprep.subr.mxu0 0.0
    %2200 = vmatpush1.msra.mxu0 0.0
    %2201 = vmatprep.subr.mxu0 0.0
    %2202 = vmatpush1.msra.mxu0 0.0
    %2203 = vmatprep.subr.mxu0 0.0
    %2204 = vmatpush1.msra.mxu0 %v594
    %2205 = vmatprep.subr.mxu0 0.0
    %2206 = vmatpush2.msra.mxu0 0.0
    %2207 = vmatprep.subr.mxu0 0.0
    %2208 = vmatpush2.msra.mxu0 0.0
    %2209 = vmatprep.subr.mxu0 0.0
    %2210 = vmatpush2.msra.mxu0 0.0
    %2211 = vmatprep.subr.mxu0 0.0
    %2212 = vmatpush2.msra.mxu0 0.0
    %2213 = vmatprep.subr.mxu0 0.0
    %2214 = vmatpush2.msra.mxu0 0.0
    %2215 = vmatprep.subr.mxu0 0.0
    %2216 = vmatpush2.msra.mxu0 0.0
    %2217 = vmatprep.subr.mxu0 0.0
    %2218 = vmatpush2.msra.mxu0 0.0
    %2219 = vmatprep.subr.mxu0 0.0
    %2220 = vmatpush2.msra.mxu0 0.0
    %2221 = vmatprep.subr.mxu0 0.0
    %2222 = vmatpush2.msra.mxu0 0.0
    %2223 = vmatprep.subr.mxu0 0.0
    %2224 = vmatpush2.msra.mxu0 0.0
    %2225 = vmatprep.subr.mxu0 0.0
    %2226 = vmatpush2.msra.mxu0 0.0
    %2227 = vmatprep.subr.mxu0 0.0
    %2228 = vmatpush2.msra.mxu0 0.0
    %2229 = vmatprep.subr.mxu0 0.0
    %2230 = vmatpush2.msra.mxu0 0.0
    %2231 = vmatprep.subr.mxu0 0.0
    %2232 = vmatpush2.msra.mxu0 0.0
    %2233 = vmatprep.subr.mxu0 0.0
    %2234 = vmatpush2.msra.mxu0 0.0
    %2235 = vmatprep.subr.mxu0 0.0
    %2236 = vmatpush2.msra.mxu0 0.0
    %2237 = vmatprep.mubr.f32.mxu0 0.0
    %2238 = vmatmul.mubr.f32.gmra.mxu0 %v2168
    %v2239 = vpop.f32.mrf.mxu0
    %v2240 = vadd.f32 0.0, %v2239
    %v2241 = vpop.f32.mrf.mxu0
    %2242 = vmatprep.mubr.f32.mxu0 0.0
    %2243 = vmatmul.mubr.f32.gmra.mxu0 %v2171
    %v2244 = vpop.f32.mrf.mxu0
    %v2245 = vadd.f32 0.0, %v2244
    %v2246 = vpop.f32.mrf.mxu0
    %2247 = vdwg.mxu0
    %v2248 = vadd.f32 %v1833, %v2240
    %v2249 = vadd.f32 %v1834, %v2245
    %2250 = vrot.lane.b32.xlu0 %v398, 96
    %v2251 = vpop.permute.xlu0 %2250
    %2252 = vrot.lane.b32.xlu0 %v488, 96
    %v2253 = vpop.permute.xlu0 %2252
    %v2254 = vsel %vm599, %v2251, 0
    %v2256 = vsel %vm599, %v2253, 0
    %2258 = vmatprep.subr.mxu0 0.0
    %2259 = vmatpush1.xpose.msra.mxu0 0.0
    %2260 = vmatprep.subr.mxu0 0.0
    %2261 = vmatpush1.xpose.msra.mxu0 0.0
    %2262 = vmatprep.subr.mxu0 0.0
    %2263 = vmatpush1.xpose.msra.mxu0 0.0
    %2264 = vmatprep.subr.mxu0 0.0
    %2265 = vmatpush1.xpose.msra.mxu0 0.0
    %2266 = vmatprep.subr.mxu0 0.0
    %2267 = vmatpush1.xpose.msra.mxu0 0.0
    %2268 = vmatprep.subr.mxu0 0.0
    %2269 = vmatpush1.xpose.msra.mxu0 0.0
    %2270 = vmatprep.subr.mxu0 0.0
    %2271 = vmatpush1.xpose.msra.mxu0 0.0
    %2272 = vmatprep.subr.mxu0 0.0
    %2273 = vmatpush1.xpose.msra.mxu0 0.0
    %2274 = vmatprep.subr.mxu0 0.0
    %2275 = vmatpush1.xpose.msra.mxu0 0.0
    %2276 = vmatprep.subr.mxu0 0.0
    %2277 = vmatpush1.xpose.msra.mxu0 0.0
    %2278 = vmatprep.subr.mxu0 0.0
    %2279 = vmatpush1.xpose.msra.mxu0 0.0
    %2280 = vmatprep.subr.mxu0 0.0
    %2281 = vmatpush1.xpose.msra.mxu0 0.0
    %2282 = vmatprep.subr.mxu0 0.0
    %2283 = vmatpush1.xpose.msra.mxu0 0.0
    %2284 = vmatprep.subr.mxu0 0.0
    %2285 = vmatpush1.xpose.msra.mxu0 0.0
    %2286 = vmatprep.subr.mxu0 0.0
    %2287 = vmatpush1.xpose.msra.mxu0 0.0
    %2288 = vmatprep.subr.mxu0 0.0
    %2289 = vmatpush1.xpose.msra.mxu0 %v2256
    %2290 = vmatprep.subr.mxu0 0.0
    %2291 = vmatpush2.xpose.msra.mxu0 0.0
    %2292 = vmatprep.subr.mxu0 0.0
    %2293 = vmatpush2.xpose.msra.mxu0 0.0
    %2294 = vmatprep.subr.mxu0 0.0
    %2295 = vmatpush2.xpose.msra.mxu0 0.0
    %2296 = vmatprep.subr.mxu0 0.0
    %2297 = vmatpush2.xpose.msra.mxu0 0.0
    %2298 = vmatprep.subr.mxu0 0.0
    %2299 = vmatpush2.xpose.msra.mxu0 0.0
    %2300 = vmatprep.subr.mxu0 0.0
    %2301 = vmatpush2.xpose.msra.mxu0 0.0
    %2302 = vmatprep.subr.mxu0 0.0
    %2303 = vmatpush2.xpose.msra.mxu0 0.0
    %2304 = vmatprep.subr.mxu0 0.0
    %2305 = vmatpush2.xpose.msra.mxu0 0.0
    %2306 = vmatprep.subr.mxu0 0.0
    %2307 = vmatpush2.xpose.msra.mxu0 0.0
    %2308 = vmatprep.subr.mxu0 0.0
    %2309 = vmatpush2.xpose.msra.mxu0 0.0
    %2310 = vmatprep.subr.mxu0 0.0
    %2311 = vmatpush2.xpose.msra.mxu0 0.0
    %2312 = vmatprep.subr.mxu0 0.0
    %2313 = vmatpush2.xpose.msra.mxu0 0.0
    %2314 = vmatprep.subr.mxu0 0.0
    %2315 = vmatpush2.xpose.msra.mxu0 0.0
    %2316 = vmatprep.subr.mxu0 0.0
    %2317 = vmatpush2.xpose.msra.mxu0 0.0
    %2318 = vmatprep.subr.mxu0 0.0
    %2319 = vmatpush2.xpose.msra.mxu0 0.0
    %2320 = vmatprep.subr.mxu0 0.0
    %2321 = vmatpush2.xpose.msra.mxu0 0.0
    %2322 = vmatprep.mubr.f32.mxu0 0.0
    %2323 = vmatmul.mubr.f32.gmra.mxu0 %v2254
    %v2324 = vpop.f32.mrf.mxu0
    %v2325 = vadd.f32 0.0, %v2324
    %v2326 = vpop.f32.mrf.mxu0
    %2327 = vdwg.mxu0
    %2328 = vrot.lane.b32.xlu0 %v403, 96
    %v2329 = vpop.permute.xlu0 %2328
    %2330 = vrot.lane.b32.xlu0 %v493, 96
    %v2331 = vpop.permute.xlu0 %2330
    %v2332 = vsel %vm599, %v2329, 0
    %v2334 = vsel %vm599, %v2331, 0
    %2336 = vmatprep.subr.mxu0 0.0
    %2337 = vmatpush1.xpose.msra.mxu0 0.0
    %2338 = vmatprep.subr.mxu0 0.0
    %2339 = vmatpush1.xpose.msra.mxu0 0.0
    %2340 = vmatprep.subr.mxu0 0.0
    %2341 = vmatpush1.xpose.msra.mxu0 0.0
    %2342 = vmatprep.subr.mxu0 0.0
    %2343 = vmatpush1.xpose.msra.mxu0 0.0
    %2344 = vmatprep.subr.mxu0 0.0
    %2345 = vmatpush1.xpose.msra.mxu0 0.0
    %2346 = vmatprep.subr.mxu0 0.0
    %2347 = vmatpush1.xpose.msra.mxu0 0.0
    %2348 = vmatprep.subr.mxu0 0.0
    %2349 = vmatpush1.xpose.msra.mxu0 0.0
    %2350 = vmatprep.subr.mxu0 0.0
    %2351 = vmatpush1.xpose.msra.mxu0 0.0
    %2352 = vmatprep.subr.mxu0 0.0
    %2353 = vmatpush1.xpose.msra.mxu0 0.0
    %2354 = vmatprep.subr.mxu0 0.0
    %2355 = vmatpush1.xpose.msra.mxu0 0.0
    %2356 = vmatprep.subr.mxu0 0.0
    %2357 = vmatpush1.xpose.msra.mxu0 0.0
    %2358 = vmatprep.subr.mxu0 0.0
    %2359 = vmatpush1.xpose.msra.mxu0 0.0
    %2360 = vmatprep.subr.mxu0 0.0
    %2361 = vmatpush1.xpose.msra.mxu0 0.0
    %2362 = vmatprep.subr.mxu0 0.0
    %2363 = vmatpush1.xpose.msra.mxu0 0.0
    %2364 = vmatprep.subr.mxu0 0.0
    %2365 = vmatpush1.xpose.msra.mxu0 0.0
    %2366 = vmatprep.subr.mxu0 0.0
    %2367 = vmatpush1.xpose.msra.mxu0 %v2334
    %2368 = vmatprep.subr.mxu0 0.0
    %2369 = vmatpush2.xpose.msra.mxu0 0.0
    %2370 = vmatprep.subr.mxu0 0.0
    %2371 = vmatpush2.xpose.msra.mxu0 0.0
    %2372 = vmatprep.subr.mxu0 0.0
    %2373 = vmatpush2.xpose.msra.mxu0 0.0
    %2374 = vmatprep.subr.mxu0 0.0
    %2375 = vmatpush2.xpose.msra.mxu0 0.0
    %2376 = vmatprep.subr.mxu0 0.0
    %2377 = vmatpush2.xpose.msra.mxu0 0.0
    %2378 = vmatprep.subr.mxu0 0.0
    %2379 = vmatpush2.xpose.msra.mxu0 0.0
    %2380 = vmatprep.subr.mxu0 0.0
    %2381 = vmatpush2.xpose.msra.mxu0 0.0
    %2382 = vmatprep.subr.mxu0 0.0
    %2383 = vmatpush2.xpose.msra.mxu0 0.0
    %2384 = vmatprep.subr.mxu0 0.0
    %2385 = vmatpush2.xpose.msra.mxu0 0.0
    %2386 = vmatprep.subr.mxu0 0.0
    %2387 = vmatpush2.xpose.msra.mxu0 0.0
    %2388 = vmatprep.subr.mxu0 0.0
    %2389 = vmatpush2.xpose.msra.mxu0 0.0
    %2390 = vmatprep.subr.mxu0 0.0
    %2391 = vmatpush2.xpose.msra.mxu0 0.0
    %2392 = vmatprep.subr.mxu0 0.0
    %2393 = vmatpush2.xpose.msra.mxu0 0.0
    %2394 = vmatprep.subr.mxu0 0.0
    %2395 = vmatpush2.xpose.msra.mxu0 0.0
    %2396 = vmatprep.subr.mxu0 0.0
    %2397 = vmatpush2.xpose.msra.mxu0 0.0
    %2398 = vmatprep.subr.mxu0 0.0
    %2399 = vmatpush2.xpose.msra.mxu0 0.0
    %2400 = vmatprep.mubr.f32.mxu0 0.0
    %2401 = vmatmul.mubr.f32.gmra.mxu0 %v2332
    %v2402 = vpop.f32.mrf.mxu0
    %v2403 = vadd.f32 0.0, %v2402
    %v2404 = vpop.f32.mrf.mxu0
    %2405 = vdwg.mxu0
    %v2406 = vsel %vm753, %v2325, -1e+30
    %v2407 = vsel %vm753, %v2403, -1e+30
    %v2408 = vsel %vm599, %v2406, -inf
    %2409 = vmax.xlane.f32.xlu0 %v2408
    %v2410 = vpop.xlane.xlu0 %2409
    %v2411 = vsel %vm599, %v2407, -inf
    %2412 = vmax.xlane.f32.xlu0 %v2411
    %v2413 = vpop.xlane.xlu0 %2412
    %v2414 = vsub.f32 %v2406, %v2410
    %v2415 = vsub.f32 %v2407, %v2413
    %v2416 = vmul.f32 %v2414, 1.442695
    %v2417 = vpow.pop %v2416
    %v2418 = vmul.f32 %v2415, 1.442695
    %v2419 = vpow.pop %v2418
    %v2420 = vsel %vm599, %v2417, 0.0
    %2421 = vadd.xlane.f32.xlu0 %v2420
    %v2422 = vpop.xlane.xlu0 %2421
    %v2423 = vsel %vm599, %v2419, 0.0
    %2424 = vadd.xlane.f32.xlu0 %v2423
    %v2425 = vpop.xlane.xlu0 %2424
    %v2426 = vrcp.pop %v2422
    %v2427 = vrcp.pop %v2425
    %v2428 = vmul.f32 %v2417, %v2426
    %v2429 = vmul.f32 %v2419, %v2427
    %2430 = vrot.lane.b32.xlu0 %v578, 96
    %v2431 = vpop.permute.xlu0 %2430
    %v2434 = vsel %vm599, %v2428, 0
    %2436 = vmatprep.subr.mxu0 0.0
    %2437 = vmatpush1.msra.mxu0 0.0
    %2438 = vmatprep.subr.mxu0 0.0
    %2439 = vmatpush1.msra.mxu0 0.0
    %2440 = vmatprep.subr.mxu0 0.0
    %2441 = vmatpush1.msra.mxu0 0.0
    %2442 = vmatprep.subr.mxu0 0.0
    %2443 = vmatpush1.msra.mxu0 0.0
    %2444 = vmatprep.subr.mxu0 0.0
    %2445 = vmatpush1.msra.mxu0 0.0
    %2446 = vmatprep.subr.mxu0 0.0
    %2447 = vmatpush1.msra.mxu0 0.0
    %2448 = vmatprep.subr.mxu0 0.0
    %2449 = vmatpush1.msra.mxu0 0.0
    %2450 = vmatprep.subr.mxu0 0.0
    %2451 = vmatpush1.msra.mxu0 0.0
    %2452 = vmatprep.subr.mxu0 0.0
    %2453 = vmatpush1.msra.mxu0 0.0
    %2454 = vmatprep.subr.mxu0 0.0
    %2455 = vmatpush1.msra.mxu0 0.0
    %2456 = vmatprep.subr.mxu0 0.0
    %2457 = vmatpush1.msra.mxu0 0.0
    %2458 = vmatprep.subr.mxu0 0.0
    %2459 = vmatpush1.msra.mxu0 0.0
    %2460 = vmatprep.subr.mxu0 0.0
    %2461 = vmatpush1.msra.mxu0 0.0
    %2462 = vmatprep.subr.mxu0 0.0
    %2463 = vmatpush1.msra.mxu0 0.0
    %2464 = vmatprep.subr.mxu0 0.0
    %2465 = vmatpush1.msra.mxu0 0.0
    %2466 = vmatprep.subr.mxu0 0.0
    %2467 = vmatpush1.msra.mxu0 %v2431
    %2468 = vmatprep.subr.mxu0 0.0
    %2469 = vmatpush2.msra.mxu0 0.0
    %2470 = vmatprep.subr.mxu0 0.0
    %2471 = vmatpush2.msra.mxu0 0.0
    %2472 = vmatprep.subr.mxu0 0.0
    %2473 = vmatpush2.msra.mxu0 0.0
    %2474 = vmatprep.subr.mxu0 0.0
    %2475 = vmatpush2.msra.mxu0 0.0
    %2476 = vmatprep.subr.mxu0 0.0
    %2477 = vmatpush2.msra.mxu0 0.0
    %2478 = vmatprep.subr.mxu0 0.0
    %2479 = vmatpush2.msra.mxu0 0.0
    %2480 = vmatprep.subr.mxu0 0.0
    %2481 = vmatpush2.msra.mxu0 0.0
    %2482 = vmatprep.subr.mxu0 0.0
    %2483 = vmatpush2.msra.mxu0 0.0
    %2484 = vmatprep.subr.mxu0 0.0
    %2485 = vmatpush2.msra.mxu0 0.0
    %2486 = vmatprep.subr.mxu0 0.0
    %2487 = vmatpush2.msra.mxu0 0.0
    %2488 = vmatprep.subr.mxu0 0.0
    %2489 = vmatpush2.msra.mxu0 0.0
    %2490 = vmatprep.subr.mxu0 0.0
    %2491 = vmatpush2.msra.mxu0 0.0
    %2492 = vmatprep.subr.mxu0 0.0
    %2493 = vmatpush2.msra.mxu0 0.0
    %2494 = vmatprep.subr.mxu0 0.0
    %2495 = vmatpush2.msra.mxu0 0.0
    %2496 = vmatprep.subr.mxu0 0.0
    %2497 = vmatpush2.msra.mxu0 0.0
    %2498 = vmatprep.subr.mxu0 0.0
    %2499 = vmatpush2.msra.mxu0 0.0
    %2500 = vmatprep.mubr.f32.mxu0 0.0
    %2501 = vmatmul.mubr.f32.gmra.mxu0 %v2434
    %v2502 = vpop.f32.mrf.mxu0
    %v2503 = vadd.f32 0.0, %v2502
    %v2504 = vpop.f32.mrf.mxu0
    %2505 = vdwg.mxu0
    %2506 = vrot.lane.b32.xlu0 %v583, 96
    %v2507 = vpop.permute.xlu0 %2506
    %v2510 = vsel %vm599, %v2429, 0
    %2512 = vmatprep.subr.mxu0 0.0
    %2513 = vmatpush1.msra.mxu0 0.0
    %2514 = vmatprep.subr.mxu0 0.0
    %2515 = vmatpush1.msra.mxu0 0.0
    %2516 = vmatprep.subr.mxu0 0.0
    %2517 = vmatpush1.msra.mxu0 0.0
    %2518 = vmatprep.subr.mxu0 0.0
    %2519 = vmatpush1.msra.mxu0 0.0
    %2520 = vmatprep.subr.mxu0 0.0
    %2521 = vmatpush1.msra.mxu0 0.0
    %2522 = vmatprep.subr.mxu0 0.0
    %2523 = vmatpush1.msra.mxu0 0.0
    %2524 = vmatprep.subr.mxu0 0.0
    %2525 = vmatpush1.msra.mxu0 0.0
    %2526 = vmatprep.subr.mxu0 0.0
    %2527 = vmatpush1.msra.mxu0 0.0
    %2528 = vmatprep.subr.mxu0 0.0
    %2529 = vmatpush1.msra.mxu0 0.0
    %2530 = vmatprep.subr.mxu0 0.0
    %2531 = vmatpush1.msra.mxu0 0.0
    %2532 = vmatprep.subr.mxu0 0.0
    %2533 = vmatpush1.msra.mxu0 0.0
    %2534 = vmatprep.subr.mxu0 0.0
    %2535 = vmatpush1.msra.mxu0 0.0
    %2536 = vmatprep.subr.mxu0 0.0
    %2537 = vmatpush1.msra.mxu0 0.0
    %2538 = vmatprep.subr.mxu0 0.0
    %2539 = vmatpush1.msra.mxu0 0.0
    %2540 = vmatprep.subr.mxu0 0.0
    %2541 = vmatpush1.msra.mxu0 0.0
    %2542 = vmatprep.subr.mxu0 0.0
    %2543 = vmatpush1.msra.mxu0 %v2507
    %2544 = vmatprep.subr.mxu0 0.0
    %2545 = vmatpush2.msra.mxu0 0.0
    %2546 = vmatprep.subr.mxu0 0.0
    %2547 = vmatpush2.msra.mxu0 0.0
    %2548 = vmatprep.subr.mxu0 0.0
    %2549 = vmatpush2.msra.mxu0 0.0
    %2550 = vmatprep.subr.mxu0 0.0
    %2551 = vmatpush2.msra.mxu0 0.0
    %2552 = vmatprep.subr.mxu0 0.0
    %2553 = vmatpush2.msra.mxu0 0.0
    %2554 = vmatprep.subr.mxu0 0.0
    %2555 = vmatpush2.msra.mxu0 0.0
    %2556 = vmatprep.subr.mxu0 0.0
    %2557 = vmatpush2.msra.mxu0 0.0
    %2558 = vmatprep.subr.mxu0 0.0
    %2559 = vmatpush2.msra.mxu0 0.0
    %2560 = vmatprep.subr.mxu0 0.0
    %2561 = vmatpush2.msra.mxu0 0.0
    %2562 = vmatprep.subr.mxu0 0.0
    %2563 = vmatpush2.msra.mxu0 0.0
    %2564 = vmatprep.subr.mxu0 0.0
    %2565 = vmatpush2.msra.mxu0 0.0
    %2566 = vmatprep.subr.mxu0 0.0
    %2567 = vmatpush2.msra.mxu0 0.0
    %2568 = vmatprep.subr.mxu0 0.0
    %2569 = vmatpush2.msra.mxu0 0.0
    %2570 = vmatprep.subr.mxu0 0.0
    %2571 = vmatpush2.msra.mxu0 0.0
    %2572 = vmatprep.subr.mxu0 0.0
    %2573 = vmatpush2.msra.mxu0 0.0
    %2574 = vmatprep.subr.mxu0 0.0
    %2575 = vmatpush2.msra.mxu0 0.0
    %2576 = vmatprep.mubr.f32.mxu0 0.0
    %2577 = vmatmul.mubr.f32.gmra.mxu0 %v2510
    %v2578 = vpop.f32.mrf.mxu0
    %v2579 = vadd.f32 0.0, %v2578
    %v2580 = vpop.f32.mrf.mxu0
    %2581 = vdwg.mxu0
    %v2583 = vsel %vm599, %v2503, 0
    %v2586 = vsel %vm599, %v2579, 0
    %2588 = vmatprep.subr.mxu0 0.0
    %2589 = vmatpush1.msra.mxu0 0.0
    %2590 = vmatprep.subr.mxu0 0.0
    %2591 = vmatpush1.msra.mxu0 0.0
    %2592 = vmatprep.subr.mxu0 0.0
    %2593 = vmatpush1.msra.mxu0 0.0
    %2594 = vmatprep.subr.mxu0 0.0
    %2595 = vmatpush1.msra.mxu0 0.0
    %2596 = vmatprep.subr.mxu0 0.0
    %2597 = vmatpush1.msra.mxu0 0.0
    %2598 = vmatprep.subr.mxu0 0.0
    %2599 = vmatpush1.msra.mxu0 0.0
    %2600 = vmatprep.subr.mxu0 0.0
    %2601 = vmatpush1.msra.mxu0 0.0
    %2602 = vmatprep.subr.mxu0 0.0
    %2603 = vmatpush1.msra.mxu0 0.0
    %2604 = vmatprep.subr.mxu0 0.0
    %2605 = vmatpush1.msra.mxu0 0.0
    %2606 = vmatprep.subr.mxu0 0.0
    %2607 = vmatpush1.msra.mxu0 0.0
    %2608 = vmatprep.subr.mxu0 0.0
    %2609 = vmatpush1.msra.mxu0 0.0
    %2610 = vmatprep.subr.mxu0 0.0
    %2611 = vmatpush1.msra.mxu0 0.0
    %2612 = vmatprep.subr.mxu0 0.0
    %2613 = vmatpush1.msra.mxu0 0.0
    %2614 = vmatprep.subr.mxu0 0.0
    %2615 = vmatpush1.msra.mxu0 0.0
    %2616 = vmatprep.subr.mxu0 0.0
    %2617 = vmatpush1.msra.mxu0 0.0
    %2618 = vmatprep.subr.mxu0 0.0
    %2619 = vmatpush1.msra.mxu0 %v595
    %2620 = vmatprep.subr.mxu0 0.0
    %2621 = vmatpush2.msra.mxu0 0.0
    %2622 = vmatprep.subr.mxu0 0.0
    %2623 = vmatpush2.msra.mxu0 0.0
    %2624 = vmatprep.subr.mxu0 0.0
    %2625 = vmatpush2.msra.mxu0 0.0
    %2626 = vmatprep.subr.mxu0 0.0
    %2627 = vmatpush2.msra.mxu0 0.0
    %2628 = vmatprep.subr.mxu0 0.0
    %2629 = vmatpush2.msra.mxu0 0.0
    %2630 = vmatprep.subr.mxu0 0.0
    %2631 = vmatpush2.msra.mxu0 0.0
    %2632 = vmatprep.subr.mxu0 0.0
    %2633 = vmatpush2.msra.mxu0 0.0
    %2634 = vmatprep.subr.mxu0 0.0
    %2635 = vmatpush2.msra.mxu0 0.0
    %2636 = vmatprep.subr.mxu0 0.0
    %2637 = vmatpush2.msra.mxu0 0.0
    %2638 = vmatprep.subr.mxu0 0.0
    %2639 = vmatpush2.msra.mxu0 0.0
    %2640 = vmatprep.subr.mxu0 0.0
    %2641 = vmatpush2.msra.mxu0 0.0
    %2642 = vmatprep.subr.mxu0 0.0
    %2643 = vmatpush2.msra.mxu0 0.0
    %2644 = vmatprep.subr.mxu0 0.0
    %2645 = vmatpush2.msra.mxu0 0.0
    %2646 = vmatprep.subr.mxu0 0.0
    %2647 = vmatpush2.msra.mxu0 0.0
    %2648 = vmatprep.subr.mxu0 0.0
    %2649 = vmatpush2.msra.mxu0 0.0
    %2650 = vmatprep.subr.mxu0 0.0
    %2651 = vmatpush2.msra.mxu0 0.0
    %2652 = vmatprep.mubr.f32.mxu0 0.0
    %2653 = vmatmul.mubr.f32.gmra.mxu0 %v2583
    %v2654 = vpop.f32.mrf.mxu0
    %v2655 = vadd.f32 0.0, %v2654
    %v2656 = vpop.f32.mrf.mxu0
    %2657 = vmatprep.mubr.f32.mxu0 0.0
    %2658 = vmatmul.mubr.f32.gmra.mxu0 %v2586
    %v2659 = vpop.f32.mrf.mxu0
    %v2660 = vadd.f32 0.0, %v2659
    %v2661 = vpop.f32.mrf.mxu0
    %2662 = vdwg.mxu0
    %v2663 = vadd.f32 %v2248, %v2655
    %v2664 = vadd.f32 %v2249, %v2660
    %2665 = vrot.lane.b32.xlu0 %v398, 88
    %v2666 = vpop.permute.xlu0 %2665
    %2667 = vrot.lane.b32.xlu0 %v488, 88
    %v2668 = vpop.permute.xlu0 %2667
    %v2669 = vsel %vm599, %v2666, 0
    %v2671 = vsel %vm599, %v2668, 0
    %2673 = vmatprep.subr.mxu0 0.0
    %2674 = vmatpush1.xpose.msra.mxu0 0.0
    %2675 = vmatprep.subr.mxu0 0.0
    %2676 = vmatpush1.xpose.msra.mxu0 0.0
    %2677 = vmatprep.subr.mxu0 0.0
    %2678 = vmatpush1.xpose.msra.mxu0 0.0
    %2679 = vmatprep.subr.mxu0 0.0
    %2680 = vmatpush1.xpose.msra.mxu0 0.0
    %2681 = vmatprep.subr.mxu0 0.0
    %2682 = vmatpush1.xpose.msra.mxu0 0.0
    %2683 = vmatprep.subr.mxu0 0.0
    %2684 = vmatpush1.xpose.msra.mxu0 0.0
    %2685 = vmatprep.subr.mxu0 0.0
    %2686 = vmatpush1.xpose.msra.mxu0 0.0
    %2687 = vmatprep.subr.mxu0 0.0
    %2688 = vmatpush1.xpose.msra.mxu0 0.0
    %2689 = vmatprep.subr.mxu0 0.0
    %2690 = vmatpush1.xpose.msra.mxu0 0.0
    %2691 = vmatprep.subr.mxu0 0.0
    %2692 = vmatpush1.xpose.msra.mxu0 0.0
    %2693 = vmatprep.subr.mxu0 0.0
    %2694 = vmatpush1.xpose.msra.mxu0 0.0
    %2695 = vmatprep.subr.mxu0 0.0
    %2696 = vmatpush1.xpose.msra.mxu0 0.0
    %2697 = vmatprep.subr.mxu0 0.0
    %2698 = vmatpush1.xpose.msra.mxu0 0.0
    %2699 = vmatprep.subr.mxu0 0.0
    %2700 = vmatpush1.xpose.msra.mxu0 0.0
    %2701 = vmatprep.subr.mxu0 0.0
    %2702 = vmatpush1.xpose.msra.mxu0 0.0
    %2703 = vmatprep.subr.mxu0 0.0
    %2704 = vmatpush1.xpose.msra.mxu0 %v2671
    %2705 = vmatprep.subr.mxu0 0.0
    %2706 = vmatpush2.xpose.msra.mxu0 0.0
    %2707 = vmatprep.subr.mxu0 0.0
    %2708 = vmatpush2.xpose.msra.mxu0 0.0
    %2709 = vmatprep.subr.mxu0 0.0
    %2710 = vmatpush2.xpose.msra.mxu0 0.0
    %2711 = vmatprep.subr.mxu0 0.0
    %2712 = vmatpush2.xpose.msra.mxu0 0.0
    %2713 = vmatprep.subr.mxu0 0.0
    %2714 = vmatpush2.xpose.msra.mxu0 0.0
    %2715 = vmatprep.subr.mxu0 0.0
    %2716 = vmatpush2.xpose.msra.mxu0 0.0
    %2717 = vmatprep.subr.mxu0 0.0
    %2718 = vmatpush2.xpose.msra.mxu0 0.0
    %2719 = vmatprep.subr.mxu0 0.0
    %2720 = vmatpush2.xpose.msra.mxu0 0.0
    %2721 = vmatprep.subr.mxu0 0.0
    %2722 = vmatpush2.xpose.msra.mxu0 0.0
    %2723 = vmatprep.subr.mxu0 0.0
    %2724 = vmatpush2.xpose.msra.mxu0 0.0
    %2725 = vmatprep.subr.mxu0 0.0
    %2726 = vmatpush2.xpose.msra.mxu0 0.0
    %2727 = vmatprep.subr.mxu0 0.0
    %2728 = vmatpush2.xpose.msra.mxu0 0.0
    %2729 = vmatprep.subr.mxu0 0.0
    %2730 = vmatpush2.xpose.msra.mxu0 0.0
    %2731 = vmatprep.subr.mxu0 0.0
    %2732 = vmatpush2.xpose.msra.mxu0 0.0
    %2733 = vmatprep.subr.mxu0 0.0
    %2734 = vmatpush2.xpose.msra.mxu0 0.0
    %2735 = vmatprep.subr.mxu0 0.0
    %2736 = vmatpush2.xpose.msra.mxu0 0.0
    %2737 = vmatprep.mubr.f32.mxu0 0.0
    %2738 = vmatmul.mubr.f32.gmra.mxu0 %v2669
    %v2739 = vpop.f32.mrf.mxu0
    %v2740 = vadd.f32 0.0, %v2739
    %v2741 = vpop.f32.mrf.mxu0
    %2742 = vdwg.mxu0
    %2743 = vrot.lane.b32.xlu0 %v403, 88
    %v2744 = vpop.permute.xlu0 %2743
    %2745 = vrot.lane.b32.xlu0 %v493, 88
    %v2746 = vpop.permute.xlu0 %2745
    %v2747 = vsel %vm599, %v2744, 0
    %v2749 = vsel %vm599, %v2746, 0
    %2751 = vmatprep.subr.mxu0 0.0
    %2752 = vmatpush1.xpose.msra.mxu0 0.0
    %2753 = vmatprep.subr.mxu0 0.0
    %2754 = vmatpush1.xpose.msra.mxu0 0.0
    %2755 = vmatprep.subr.mxu0 0.0
    %2756 = vmatpush1.xpose.msra.mxu0 0.0
    %2757 = vmatprep.subr.mxu0 0.0
    %2758 = vmatpush1.xpose.msra.mxu0 0.0
    %2759 = vmatprep.subr.mxu0 0.0
    %2760 = vmatpush1.xpose.msra.mxu0 0.0
    %2761 = vmatprep.subr.mxu0 0.0
    %2762 = vmatpush1.xpose.msra.mxu0 0.0
    %2763 = vmatprep.subr.mxu0 0.0
    %2764 = vmatpush1.xpose.msra.mxu0 0.0
    %2765 = vmatprep.subr.mxu0 0.0
    %2766 = vmatpush1.xpose.msra.mxu0 0.0
    %2767 = vmatprep.subr.mxu0 0.0
    %2768 = vmatpush1.xpose.msra.mxu0 0.0
    %2769 = vmatprep.subr.mxu0 0.0
    %2770 = vmatpush1.xpose.msra.mxu0 0.0
    %2771 = vmatprep.subr.mxu0 0.0
    %2772 = vmatpush1.xpose.msra.mxu0 0.0
    %2773 = vmatprep.subr.mxu0 0.0
    %2774 = vmatpush1.xpose.msra.mxu0 0.0
    %2775 = vmatprep.subr.mxu0 0.0
    %2776 = vmatpush1.xpose.msra.mxu0 0.0
    %2777 = vmatprep.subr.mxu0 0.0
    %2778 = vmatpush1.xpose.msra.mxu0 0.0
    %2779 = vmatprep.subr.mxu0 0.0
    %2780 = vmatpush1.xpose.msra.mxu0 0.0
    %2781 = vmatprep.subr.mxu0 0.0
    %2782 = vmatpush1.xpose.msra.mxu0 %v2749
    %2783 = vmatprep.subr.mxu0 0.0
    %2784 = vmatpush2.xpose.msra.mxu0 0.0
    %2785 = vmatprep.subr.mxu0 0.0
    %2786 = vmatpush2.xpose.msra.mxu0 0.0
    %2787 = vmatprep.subr.mxu0 0.0
    %2788 = vmatpush2.xpose.msra.mxu0 0.0
    %2789 = vmatprep.subr.mxu0 0.0
    %2790 = vmatpush2.xpose.msra.mxu0 0.0
    %2791 = vmatprep.subr.mxu0 0.0
    %2792 = vmatpush2.xpose.msra.mxu0 0.0
    %2793 = vmatprep.subr.mxu0 0.0
    %2794 = vmatpush2.xpose.msra.mxu0 0.0
    %2795 = vmatprep.subr.mxu0 0.0
    %2796 = vmatpush2.xpose.msra.mxu0 0.0
    %2797 = vmatprep.subr.mxu0 0.0
    %2798 = vmatpush2.xpose.msra.mxu0 0.0
    %2799 = vmatprep.subr.mxu0 0.0
    %2800 = vmatpush2.xpose.msra.mxu0 0.0
    %2801 = vmatprep.subr.mxu0 0.0
    %2802 = vmatpush2.xpose.msra.mxu0 0.0
    %2803 = vmatprep.subr.mxu0 0.0
    %2804 = vmatpush2.xpose.msra.mxu0 0.0
    %2805 = vmatprep.subr.mxu0 0.0
    %2806 = vmatpush2.xpose.msra.mxu0 0.0
    %2807 = vmatprep.subr.mxu0 0.0
    %2808 = vmatpush2.xpose.msra.mxu0 0.0
    %2809 = vmatprep.subr.mxu0 0.0
    %2810 = vmatpush2.xpose.msra.mxu0 0.0
    %2811 = vmatprep.subr.mxu0 0.0
    %2812 = vmatpush2.xpose.msra.mxu0 0.0
    %2813 = vmatprep.subr.mxu0 0.0
    %2814 = vmatpush2.xpose.msra.mxu0 0.0
    %2815 = vmatprep.mubr.f32.mxu0 0.0
    %2816 = vmatmul.mubr.f32.gmra.mxu0 %v2747
    %v2817 = vpop.f32.mrf.mxu0
    %v2818 = vadd.f32 0.0, %v2817
    %v2819 = vpop.f32.mrf.mxu0
    %2820 = vdwg.mxu0
    %v2821 = vsel %vm753, %v2740, -1e+30
    %v2822 = vsel %vm753, %v2818, -1e+30
    %v2823 = vsel %vm599, %v2821, -inf
    %2824 = vmax.xlane.f32.xlu0 %v2823
    %v2825 = vpop.xlane.xlu0 %2824
    %v2826 = vsel %vm599, %v2822, -inf
    %2827 = vmax.xlane.f32.xlu0 %v2826
    %v2828 = vpop.xlane.xlu0 %2827
    %v2829 = vsub.f32 %v2821, %v2825
    %v2830 = vsub.f32 %v2822, %v2828
    %v2831 = vmul.f32 %v2829, 1.442695
    %v2832 = vpow.pop %v2831
    %v2833 = vmul.f32 %v2830, 1.442695
    %v2834 = vpow.pop %v2833
    %v2835 = vsel %vm599, %v2832, 0.0
    %2836 = vadd.xlane.f32.xlu0 %v2835
    %v2837 = vpop.xlane.xlu0 %2836
    %v2838 = vsel %vm599, %v2834, 0.0
    %2839 = vadd.xlane.f32.xlu0 %v2838
    %v2840 = vpop.xlane.xlu0 %2839
    %v2841 = vrcp.pop %v2837
    %v2842 = vrcp.pop %v2840
    %v2843 = vmul.f32 %v2832, %v2841
    %v2844 = vmul.f32 %v2834, %v2842
    %2845 = vrot.lane.b32.xlu0 %v578, 88
    %v2846 = vpop.permute.xlu0 %2845
    %v2849 = vsel %vm599, %v2843, 0
    %2851 = vmatprep.subr.mxu0 0.0
    %2852 = vmatpush1.msra.mxu0 0.0
    %2853 = vmatprep.subr.mxu0 0.0
    %2854 = vmatpush1.msra.mxu0 0.0
    %2855 = vmatprep.subr.mxu0 0.0
    %2856 = vmatpush1.msra.mxu0 0.0
    %2857 = vmatprep.subr.mxu0 0.0
    %2858 = vmatpush1.msra.mxu0 0.0
    %2859 = vmatprep.subr.mxu0 0.0
    %2860 = vmatpush1.msra.mxu0 0.0
    %2861 = vmatprep.subr.mxu0 0.0
    %2862 = vmatpush1.msra.mxu0 0.0
    %2863 = vmatprep.subr.mxu0 0.0
    %2864 = vmatpush1.msra.mxu0 0.0
    %2865 = vmatprep.subr.mxu0 0.0
    %2866 = vmatpush1.msra.mxu0 0.0
    %2867 = vmatprep.subr.mxu0 0.0
    %2868 = vmatpush1.msra.mxu0 0.0
    %2869 = vmatprep.subr.mxu0 0.0
    %2870 = vmatpush1.msra.mxu0 0.0
    %2871 = vmatprep.subr.mxu0 0.0
    %2872 = vmatpush1.msra.mxu0 0.0
    %2873 = vmatprep.subr.mxu0 0.0
    %2874 = vmatpush1.msra.mxu0 0.0
    %2875 = vmatprep.subr.mxu0 0.0
    %2876 = vmatpush1.msra.mxu0 0.0
    %2877 = vmatprep.subr.mxu0 0.0
    %2878 = vmatpush1.msra.mxu0 0.0
    %2879 = vmatprep.subr.mxu0 0.0
    %2880 = vmatpush1.msra.mxu0 0.0
    %2881 = vmatprep.subr.mxu0 0.0
    %2882 = vmatpush1.msra.mxu0 %v2846
    %2883 = vmatprep.subr.mxu0 0.0
    %2884 = vmatpush2.msra.mxu0 0.0
    %2885 = vmatprep.subr.mxu0 0.0
    %2886 = vmatpush2.msra.mxu0 0.0
    %2887 = vmatprep.subr.mxu0 0.0
    %2888 = vmatpush2.msra.mxu0 0.0
    %2889 = vmatprep.subr.mxu0 0.0
    %2890 = vmatpush2.msra.mxu0 0.0
    %2891 = vmatprep.subr.mxu0 0.0
    %2892 = vmatpush2.msra.mxu0 0.0
    %2893 = vmatprep.subr.mxu0 0.0
    %2894 = vmatpush2.msra.mxu0 0.0
    %2895 = vmatprep.subr.mxu0 0.0
    %2896 = vmatpush2.msra.mxu0 0.0
    %2897 = vmatprep.subr.mxu0 0.0
    %2898 = vmatpush2.msra.mxu0 0.0
    %2899 = vmatprep.subr.mxu0 0.0
    %2900 = vmatpush2.msra.mxu0 0.0
    %2901 = vmatprep.subr.mxu0 0.0
    %2902 = vmatpush2.msra.mxu0 0.0
    %2903 = vmatprep.subr.mxu0 0.0
    %2904 = vmatpush2.msra.mxu0 0.0
    %2905 = vmatprep.subr.mxu0 0.0
    %2906 = vmatpush2.msra.mxu0 0.0
    %2907 = vmatprep.subr.mxu0 0.0
    %2908 = vmatpush2.msra.mxu0 0.0
    %2909 = vmatprep.subr.mxu0 0.0
    %2910 = vmatpush2.msra.mxu0 0.0
    %2911 = vmatprep.subr.mxu0 0.0
    %2912 = vmatpush2.msra.mxu0 0.0
    %2913 = vmatprep.subr.mxu0 0.0
    %2914 = vmatpush2.msra.mxu0 0.0
    %2915 = vmatprep.mubr.f32.mxu0 0.0
    %2916 = vmatmul.mubr.f32.gmra.mxu0 %v2849
    %v2917 = vpop.f32.mrf.mxu0
    %v2918 = vadd.f32 0.0, %v2917
    %v2919 = vpop.f32.mrf.mxu0
    %2920 = vdwg.mxu0
    %2921 = vrot.lane.b32.xlu0 %v583, 88
    %v2922 = vpop.permute.xlu0 %2921
    %v2925 = vsel %vm599, %v2844, 0
    %2927 = vmatprep.subr.mxu0 0.0
    %2928 = vmatpush1.msra.mxu0 0.0
    %2929 = vmatprep.subr.mxu0 0.0
    %2930 = vmatpush1.msra.mxu0 0.0
    %2931 = vmatprep.subr.mxu0 0.0
    %2932 = vmatpush1.msra.mxu0 0.0
    %2933 = vmatprep.subr.mxu0 0.0
    %2934 = vmatpush1.msra.mxu0 0.0
    %2935 = vmatprep.subr.mxu0 0.0
    %2936 = vmatpush1.msra.mxu0 0.0
    %2937 = vmatprep.subr.mxu0 0.0
    %2938 = vmatpush1.msra.mxu0 0.0
    %2939 = vmatprep.subr.mxu0 0.0
    %2940 = vmatpush1.msra.mxu0 0.0
    %2941 = vmatprep.subr.mxu0 0.0
    %2942 = vmatpush1.msra.mxu0 0.0
    %2943 = vmatprep.subr.mxu0 0.0
    %2944 = vmatpush1.msra.mxu0 0.0
    %2945 = vmatprep.subr.mxu0 0.0
    %2946 = vmatpush1.msra.mxu0 0.0
    %2947 = vmatprep.subr.mxu0 0.0
    %2948 = vmatpush1.msra.mxu0 0.0
    %2949 = vmatprep.subr.mxu0 0.0
    %2950 = vmatpush1.msra.mxu0 0.0
    %2951 = vmatprep.subr.mxu0 0.0
    %2952 = vmatpush1.msra.mxu0 0.0
    %2953 = vmatprep.subr.mxu0 0.0
    %2954 = vmatpush1.msra.mxu0 0.0
    %2955 = vmatprep.subr.mxu0 0.0
    %2956 = vmatpush1.msra.mxu0 0.0
    %2957 = vmatprep.subr.mxu0 0.0
    %2958 = vmatpush1.msra.mxu0 %v2922
    %2959 = vmatprep.subr.mxu0 0.0
    %2960 = vmatpush2.msra.mxu0 0.0
    %2961 = vmatprep.subr.mxu0 0.0
    %2962 = vmatpush2.msra.mxu0 0.0
    %2963 = vmatprep.subr.mxu0 0.0
    %2964 = vmatpush2.msra.mxu0 0.0
    %2965 = vmatprep.subr.mxu0 0.0
    %2966 = vmatpush2.msra.mxu0 0.0
    %2967 = vmatprep.subr.mxu0 0.0
    %2968 = vmatpush2.msra.mxu0 0.0
    %2969 = vmatprep.subr.mxu0 0.0
    %2970 = vmatpush2.msra.mxu0 0.0
    %2971 = vmatprep.subr.mxu0 0.0
    %2972 = vmatpush2.msra.mxu0 0.0
    %2973 = vmatprep.subr.mxu0 0.0
    %2974 = vmatpush2.msra.mxu0 0.0
    %2975 = vmatprep.subr.mxu0 0.0
    %2976 = vmatpush2.msra.mxu0 0.0
    %2977 = vmatprep.subr.mxu0 0.0
    %2978 = vmatpush2.msra.mxu0 0.0
    %2979 = vmatprep.subr.mxu0 0.0
    %2980 = vmatpush2.msra.mxu0 0.0
    %2981 = vmatprep.subr.mxu0 0.0
    %2982 = vmatpush2.msra.mxu0 0.0
    %2983 = vmatprep.subr.mxu0 0.0
    %2984 = vmatpush2.msra.mxu0 0.0
    %2985 = vmatprep.subr.mxu0 0.0
    %2986 = vmatpush2.msra.mxu0 0.0
    %2987 = vmatprep.subr.mxu0 0.0
    %2988 = vmatpush2.msra.mxu0 0.0
    %2989 = vmatprep.subr.mxu0 0.0
    %2990 = vmatpush2.msra.mxu0 0.0
    %2991 = vmatprep.mubr.f32.mxu0 0.0
    %2992 = vmatmul.mubr.f32.gmra.mxu0 %v2925
    %v2993 = vpop.f32.mrf.mxu0
    %v2994 = vadd.f32 0.0, %v2993
    %v2995 = vpop.f32.mrf.mxu0
    %2996 = vdwg.mxu0
    %v2998 = vsel %vm599, %v2918, 0
    %v3001 = vsel %vm599, %v2994, 0
    %3003 = vmatprep.subr.mxu0 0.0
    %3004 = vmatpush1.msra.mxu0 0.0
    %3005 = vmatprep.subr.mxu0 0.0
    %3006 = vmatpush1.msra.mxu0 0.0
    %3007 = vmatprep.subr.mxu0 0.0
    %3008 = vmatpush1.msra.mxu0 0.0
    %3009 = vmatprep.subr.mxu0 0.0
    %3010 = vmatpush1.msra.mxu0 0.0
    %3011 = vmatprep.subr.mxu0 0.0
    %3012 = vmatpush1.msra.mxu0 0.0
    %3013 = vmatprep.subr.mxu0 0.0
    %3014 = vmatpush1.msra.mxu0 0.0
    %3015 = vmatprep.subr.mxu0 0.0
    %3016 = vmatpush1.msra.mxu0 0.0
    %3017 = vmatprep.subr.mxu0 0.0
    %3018 = vmatpush1.msra.mxu0 0.0
    %3019 = vmatprep.subr.mxu0 0.0
    %3020 = vmatpush1.msra.mxu0 0.0
    %3021 = vmatprep.subr.mxu0 0.0
    %3022 = vmatpush1.msra.mxu0 0.0
    %3023 = vmatprep.subr.mxu0 0.0
    %3024 = vmatpush1.msra.mxu0 0.0
    %3025 = vmatprep.subr.mxu0 0.0
    %3026 = vmatpush1.msra.mxu0 0.0
    %3027 = vmatprep.subr.mxu0 0.0
    %3028 = vmatpush1.msra.mxu0 0.0
    %3029 = vmatprep.subr.mxu0 0.0
    %3030 = vmatpush1.msra.mxu0 0.0
    %3031 = vmatprep.subr.mxu0 0.0
    %3032 = vmatpush1.msra.mxu0 0.0
    %3033 = vmatprep.subr.mxu0 0.0
    %3034 = vmatpush1.msra.mxu0 %v596
    %3035 = vmatprep.subr.mxu0 0.0
    %3036 = vmatpush2.msra.mxu0 0.0
    %3037 = vmatprep.subr.mxu0 0.0
    %3038 = vmatpush2.msra.mxu0 0.0
    %3039 = vmatprep.subr.mxu0 0.0
    %3040 = vmatpush2.msra.mxu0 0.0
    %3041 = vmatprep.subr.mxu0 0.0
    %3042 = vmatpush2.msra.mxu0 0.0
    %3043 = vmatprep.subr.mxu0 0.0
    %3044 = vmatpush2.msra.mxu0 0.0
    %3045 = vmatprep.subr.mxu0 0.0
    %3046 = vmatpush2.msra.mxu0 0.0
    %3047 = vmatprep.subr.mxu0 0.0
    %3048 = vmatpush2.msra.mxu0 0.0
    %3049 = vmatprep.subr.mxu0 0.0
    %3050 = vmatpush2.msra.mxu0 0.0
    %3051 = vmatprep.subr.mxu0 0.0
    %3052 = vmatpush2.msra.mxu0 0.0
    %3053 = vmatprep.subr.mxu0 0.0
    %3054 = vmatpush2.msra.mxu0 0.0
    %3055 = vmatprep.subr.mxu0 0.0
    %3056 = vmatpush2.msra.mxu0 0.0
    %3057 = vmatprep.subr.mxu0 0.0
    %3058 = vmatpush2.msra.mxu0 0.0
    %3059 = vmatprep.subr.mxu0 0.0
    %3060 = vmatpush2.msra.mxu0 0.0
    %3061 = vmatprep.subr.mxu0 0.0
    %3062 = vmatpush2.msra.mxu0 0.0
    %3063 = vmatprep.subr.mxu0 0.0
    %3064 = vmatpush2.msra.mxu0 0.0
    %3065 = vmatprep.subr.mxu0 0.0
    %3066 = vmatpush2.msra.mxu0 0.0
    %3067 = vmatprep.mubr.f32.mxu0 0.0
    %3068 = vmatmul.mubr.f32.gmra.mxu0 %v2998
    %v3069 = vpop.f32.mrf.mxu0
    %v3070 = vadd.f32 0.0, %v3069
    %v3071 = vpop.f32.mrf.mxu0
    %3072 = vmatprep.mubr.f32.mxu0 0.0
    %3073 = vmatmul.mubr.f32.gmra.mxu0 %v3001
    %v3074 = vpop.f32.mrf.mxu0
    %v3075 = vadd.f32 0.0, %v3074
    %v3076 = vpop.f32.mrf.mxu0
    %3077 = vdwg.mxu0
    %v3078 = vadd.f32 %v2663, %v3070
    %v3079 = vadd.f32 %v2664, %v3075
    %3080 = vrot.lane.b32.xlu0 %v398, 80
    %v3081 = vpop.permute.xlu0 %3080
    %3082 = vrot.lane.b32.xlu0 %v488, 80
    %v3083 = vpop.permute.xlu0 %3082
    %v3084 = vsel %vm599, %v3081, 0
    %v3086 = vsel %vm599, %v3083, 0
    %3088 = vmatprep.subr.mxu0 0.0
    %3089 = vmatpush1.xpose.msra.mxu0 0.0
    %3090 = vmatprep.subr.mxu0 0.0
    %3091 = vmatpush1.xpose.msra.mxu0 0.0
    %3092 = vmatprep.subr.mxu0 0.0
    %3093 = vmatpush1.xpose.msra.mxu0 0.0
    %3094 = vmatprep.subr.mxu0 0.0
    %3095 = vmatpush1.xpose.msra.mxu0 0.0
    %3096 = vmatprep.subr.mxu0 0.0
    %3097 = vmatpush1.xpose.msra.mxu0 0.0
    %3098 = vmatprep.subr.mxu0 0.0
    %3099 = vmatpush1.xpose.msra.mxu0 0.0
    %3100 = vmatprep.subr.mxu0 0.0
    %3101 = vmatpush1.xpose.msra.mxu0 0.0
    %3102 = vmatprep.subr.mxu0 0.0
    %3103 = vmatpush1.xpose.msra.mxu0 0.0
    %3104 = vmatprep.subr.mxu0 0.0
    %3105 = vmatpush1.xpose.msra.mxu0 0.0
    %3106 = vmatprep.subr.mxu0 0.0
    %3107 = vmatpush1.xpose.msra.mxu0 0.0
    %3108 = vmatprep.subr.mxu0 0.0
    %3109 = vmatpush1.xpose.msra.mxu0 0.0
    %3110 = vmatprep.subr.mxu0 0.0
    %3111 = vmatpush1.xpose.msra.mxu0 0.0
    %3112 = vmatprep.subr.mxu0 0.0
    %3113 = vmatpush1.xpose.msra.mxu0 0.0
    %3114 = vmatprep.subr.mxu0 0.0
    %3115 = vmatpush1.xpose.msra.mxu0 0.0
    %3116 = vmatprep.subr.mxu0 0.0
    %3117 = vmatpush1.xpose.msra.mxu0 0.0
    %3118 = vmatprep.subr.mxu0 0.0
    %3119 = vmatpush1.xpose.msra.mxu0 %v3086
    %3120 = vmatprep.subr.mxu0 0.0
    %3121 = vmatpush2.xpose.msra.mxu0 0.0
    %3122 = vmatprep.subr.mxu0 0.0
    %3123 = vmatpush2.xpose.msra.mxu0 0.0
    %3124 = vmatprep.subr.mxu0 0.0
    %3125 = vmatpush2.xpose.msra.mxu0 0.0
    %3126 = vmatprep.subr.mxu0 0.0
    %3127 = vmatpush2.xpose.msra.mxu0 0.0
    %3128 = vmatprep.subr.mxu0 0.0
    %3129 = vmatpush2.xpose.msra.mxu0 0.0
    %3130 = vmatprep.subr.mxu0 0.0
    %3131 = vmatpush2.xpose.msra.mxu0 0.0
    %3132 = vmatprep.subr.mxu0 0.0
    %3133 = vmatpush2.xpose.msra.mxu0 0.0
    %3134 = vmatprep.subr.mxu0 0.0
    %3135 = vmatpush2.xpose.msra.mxu0 0.0
    %3136 = vmatprep.subr.mxu0 0.0
    %3137 = vmatpush2.xpose.msra.mxu0 0.0
    %3138 = vmatprep.subr.mxu0 0.0
    %3139 = vmatpush2.xpose.msra.mxu0 0.0
    %3140 = vmatprep.subr.mxu0 0.0
    %3141 = vmatpush2.xpose.msra.mxu0 0.0
    %3142 = vmatprep.subr.mxu0 0.0
    %3143 = vmatpush2.xpose.msra.mxu0 0.0
    %3144 = vmatprep.subr.mxu0 0.0
    %3145 = vmatpush2.xpose.msra.mxu0 0.0
    %3146 = vmatprep.subr.mxu0 0.0
    %3147 = vmatpush2.xpose.msra.mxu0 0.0
    %3148 = vmatprep.subr.mxu0 0.0
    %3149 = vmatpush2.xpose.msra.mxu0 0.0
    %3150 = vmatprep.subr.mxu0 0.0
    %3151 = vmatpush2.xpose.msra.mxu0 0.0
    %3152 = vmatprep.mubr.f32.mxu0 0.0
    %3153 = vmatmul.mubr.f32.gmra.mxu0 %v3084
    %v3154 = vpop.f32.mrf.mxu0
    %v3155 = vadd.f32 0.0, %v3154
    %v3156 = vpop.f32.mrf.mxu0
    %3157 = vdwg.mxu0
    %3158 = vrot.lane.b32.xlu0 %v403, 80
    %v3159 = vpop.permute.xlu0 %3158
    %3160 = vrot.lane.b32.xlu0 %v493, 80
    %v3161 = vpop.permute.xlu0 %3160
    %v3162 = vsel %vm599, %v3159, 0
    %v3164 = vsel %vm599, %v3161, 0
    %3166 = vmatprep.subr.mxu0 0.0
    %3167 = vmatpush1.xpose.msra.mxu0 0.0
    %3168 = vmatprep.subr.mxu0 0.0
    %3169 = vmatpush1.xpose.msra.mxu0 0.0
    %3170 = vmatprep.subr.mxu0 0.0
    %3171 = vmatpush1.xpose.msra.mxu0 0.0
    %3172 = vmatprep.subr.mxu0 0.0
    %3173 = vmatpush1.xpose.msra.mxu0 0.0
    %3174 = vmatprep.subr.mxu0 0.0
    %3175 = vmatpush1.xpose.msra.mxu0 0.0
    %3176 = vmatprep.subr.mxu0 0.0
    %3177 = vmatpush1.xpose.msra.mxu0 0.0
    %3178 = vmatprep.subr.mxu0 0.0
    %3179 = vmatpush1.xpose.msra.mxu0 0.0
    %3180 = vmatprep.subr.mxu0 0.0
    %3181 = vmatpush1.xpose.msra.mxu0 0.0
    %3182 = vmatprep.subr.mxu0 0.0
    %3183 = vmatpush1.xpose.msra.mxu0 0.0
    %3184 = vmatprep.subr.mxu0 0.0
    %3185 = vmatpush1.xpose.msra.mxu0 0.0
    %3186 = vmatprep.subr.mxu0 0.0
    %3187 = vmatpush1.xpose.msra.mxu0 0.0
    %3188 = vmatprep.subr.mxu0 0.0
    %3189 = vmatpush1.xpose.msra.mxu0 0.0
    %3190 = vmatprep.subr.mxu0 0.0
    %3191 = vmatpush1.xpose.msra.mxu0 0.0
    %3192 = vmatprep.subr.mxu0 0.0
    %3193 = vmatpush1.xpose.msra.mxu0 0.0
    %3194 = vmatprep.subr.mxu0 0.0
    %3195 = vmatpush1.xpose.msra.mxu0 0.0
    %3196 = vmatprep.subr.mxu0 0.0
    %3197 = vmatpush1.xpose.msra.mxu0 %v3164
    %3198 = vmatprep.subr.mxu0 0.0
    %3199 = vmatpush2.xpose.msra.mxu0 0.0
    %3200 = vmatprep.subr.mxu0 0.0
    %3201 = vmatpush2.xpose.msra.mxu0 0.0
    %3202 = vmatprep.subr.mxu0 0.0
    %3203 = vmatpush2.xpose.msra.mxu0 0.0
    %3204 = vmatprep.subr.mxu0 0.0
    %3205 = vmatpush2.xpose.msra.mxu0 0.0
    %3206 = vmatprep.subr.mxu0 0.0
    %3207 = vmatpush2.xpose.msra.mxu0 0.0
    %3208 = vmatprep.subr.mxu0 0.0
    %3209 = vmatpush2.xpose.msra.mxu0 0.0
    %3210 = vmatprep.subr.mxu0 0.0
    %3211 = vmatpush2.xpose.msra.mxu0 0.0
    %3212 = vmatprep.subr.mxu0 0.0
    %3213 = vmatpush2.xpose.msra.mxu0 0.0
    %3214 = vmatprep.subr.mxu0 0.0
    %3215 = vmatpush2.xpose.msra.mxu0 0.0
    %3216 = vmatprep.subr.mxu0 0.0
    %3217 = vmatpush2.xpose.msra.mxu0 0.0
    %3218 = vmatprep.subr.mxu0 0.0
    %3219 = vmatpush2.xpose.msra.mxu0 0.0
    %3220 = vmatprep.subr.mxu0 0.0
    %3221 = vmatpush2.xpose.msra.mxu0 0.0
    %3222 = vmatprep.subr.mxu0 0.0
    %3223 = vmatpush2.xpose.msra.mxu0 0.0
    %3224 = vmatprep.subr.mxu0 0.0
    %3225 = vmatpush2.xpose.msra.mxu0 0.0
    %3226 = vmatprep.subr.mxu0 0.0
    %3227 = vmatpush2.xpose.msra.mxu0 0.0
    %3228 = vmatprep.subr.mxu0 0.0
    %3229 = vmatpush2.xpose.msra.mxu0 0.0
    %3230 = vmatprep.mubr.f32.mxu0 0.0
    %3231 = vmatmul.mubr.f32.gmra.mxu0 %v3162
    %v3232 = vpop.f32.mrf.mxu0
    %v3233 = vadd.f32 0.0, %v3232
    %v3234 = vpop.f32.mrf.mxu0
    %3235 = vdwg.mxu0
    %v3236 = vsel %vm753, %v3155, -1e+30
    %v3237 = vsel %vm753, %v3233, -1e+30
    %v3238 = vsel %vm599, %v3236, -inf
    %3239 = vmax.xlane.f32.xlu0 %v3238
    %v3240 = vpop.xlane.xlu0 %3239
    %v3241 = vsel %vm599, %v3237, -inf
    %3242 = vmax.xlane.f32.xlu0 %v3241
    %v3243 = vpop.xlane.xlu0 %3242
    %v3244 = vsub.f32 %v3236, %v3240
    %v3245 = vsub.f32 %v3237, %v3243
    %v3246 = vmul.f32 %v3244, 1.442695
    %v3247 = vpow.pop %v3246
    %v3248 = vmul.f32 %v3245, 1.442695
    %v3249 = vpow.pop %v3248
    %v3250 = vsel %vm599, %v3247, 0.0
    %3251 = vadd.xlane.f32.xlu0 %v3250
    %v3252 = vpop.xlane.xlu0 %3251
    %v3253 = vsel %vm599, %v3249, 0.0
    %3254 = vadd.xlane.f32.xlu0 %v3253
    %v3255 = vpop.xlane.xlu0 %3254
    %v3256 = vrcp.pop %v3252
    %v3257 = vrcp.pop %v3255
    %v3258 = vmul.f32 %v3247, %v3256
    %v3259 = vmul.f32 %v3249, %v3257
    %3260 = vrot.lane.b32.xlu0 %v578, 80
    %v3261 = vpop.permute.xlu0 %3260
    %v3264 = vsel %vm599, %v3258, 0
    %3266 = vmatprep.subr.mxu0 0.0
    %3267 = vmatpush1.msra.mxu0 0.0
    %3268 = vmatprep.subr.mxu0 0.0
    %3269 = vmatpush1.msra.mxu0 0.0
    %3270 = vmatprep.subr.mxu0 0.0
    %3271 = vmatpush1.msra.mxu0 0.0
    %3272 = vmatprep.subr.mxu0 0.0
    %3273 = vmatpush1.msra.mxu0 0.0
    %3274 = vmatprep.subr.mxu0 0.0
    %3275 = vmatpush1.msra.mxu0 0.0
    %3276 = vmatprep.subr.mxu0 0.0
    %3277 = vmatpush1.msra.mxu0 0.0
    %3278 = vmatprep.subr.mxu0 0.0
    %3279 = vmatpush1.msra.mxu0 0.0
    %3280 = vmatprep.subr.mxu0 0.0
    %3281 = vmatpush1.msra.mxu0 0.0
    %3282 = vmatprep.subr.mxu0 0.0
    %3283 = vmatpush1.msra.mxu0 0.0
    %3284 = vmatprep.subr.mxu0 0.0
    %3285 = vmatpush1.msra.mxu0 0.0
    %3286 = vmatprep.subr.mxu0 0.0
    %3287 = vmatpush1.msra.mxu0 0.0
    %3288 = vmatprep.subr.mxu0 0.0
    %3289 = vmatpush1.msra.mxu0 0.0
    %3290 = vmatprep.subr.mxu0 0.0
    %3291 = vmatpush1.msra.mxu0 0.0
    %3292 = vmatprep.subr.mxu0 0.0
    %3293 = vmatpush1.msra.mxu0 0.0
    %3294 = vmatprep.subr.mxu0 0.0
    %3295 = vmatpush1.msra.mxu0 0.0
    %3296 = vmatprep.subr.mxu0 0.0
    %3297 = vmatpush1.msra.mxu0 %v3261
    %3298 = vmatprep.subr.mxu0 0.0
    %3299 = vmatpush2.msra.mxu0 0.0
    %3300 = vmatprep.subr.mxu0 0.0
    %3301 = vmatpush2.msra.mxu0 0.0
    %3302 = vmatprep.subr.mxu0 0.0
    %3303 = vmatpush2.msra.mxu0 0.0
    %3304 = vmatprep.subr.mxu0 0.0
    %3305 = vmatpush2.msra.mxu0 0.0
    %3306 = vmatprep.subr.mxu0 0.0
    %3307 = vmatpush2.msra.mxu0 0.0
    %3308 = vmatprep.subr.mxu0 0.0
    %3309 = vmatpush2.msra.mxu0 0.0
    %3310 = vmatprep.subr.mxu0 0.0
    %3311 = vmatpush2.msra.mxu0 0.0
    %3312 = vmatprep.subr.mxu0 0.0
    %3313 = vmatpush2.msra.mxu0 0.0
    %3314 = vmatprep.subr.mxu0 0.0
    %3315 = vmatpush2.msra.mxu0 0.0
    %3316 = vmatprep.subr.mxu0 0.0
    %3317 = vmatpush2.msra.mxu0 0.0
    %3318 = vmatprep.subr.mxu0 0.0
    %3319 = vmatpush2.msra.mxu0 0.0
    %3320 = vmatprep.subr.mxu0 0.0
    %3321 = vmatpush2.msra.mxu0 0.0
    %3322 = vmatprep.subr.mxu0 0.0
    %3323 = vmatpush2.msra.mxu0 0.0
    %3324 = vmatprep.subr.mxu0 0.0
    %3325 = vmatpush2.msra.mxu0 0.0
    %3326 = vmatprep.subr.mxu0 0.0
    %3327 = vmatpush2.msra.mxu0 0.0
    %3328 = vmatprep.subr.mxu0 0.0
    %3329 = vmatpush2.msra.mxu0 0.0
    %3330 = vmatprep.mubr.f32.mxu0 0.0
    %3331 = vmatmul.mubr.f32.gmra.mxu0 %v3264
    %v3332 = vpop.f32.mrf.mxu0
    %v3333 = vadd.f32 0.0, %v3332
    %v3334 = vpop.f32.mrf.mxu0
    %3335 = vdwg.mxu0
    %3336 = vrot.lane.b32.xlu0 %v583, 80
    %v3337 = vpop.permute.xlu0 %3336
    %v3340 = vsel %vm599, %v3259, 0
    %3342 = vmatprep.subr.mxu0 0.0
    %3343 = vmatpush1.msra.mxu0 0.0
    %3344 = vmatprep.subr.mxu0 0.0
    %3345 = vmatpush1.msra.mxu0 0.0
    %3346 = vmatprep.subr.mxu0 0.0
    %3347 = vmatpush1.msra.mxu0 0.0
    %3348 = vmatprep.subr.mxu0 0.0
    %3349 = vmatpush1.msra.mxu0 0.0
    %3350 = vmatprep.subr.mxu0 0.0
    %3351 = vmatpush1.msra.mxu0 0.0
    %3352 = vmatprep.subr.mxu0 0.0
    %3353 = vmatpush1.msra.mxu0 0.0
    %3354 = vmatprep.subr.mxu0 0.0
    %3355 = vmatpush1.msra.mxu0 0.0
    %3356 = vmatprep.subr.mxu0 0.0
    %3357 = vmatpush1.msra.mxu0 0.0
    %3358 = vmatprep.subr.mxu0 0.0
    %3359 = vmatpush1.msra.mxu0 0.0
    %3360 = vmatprep.subr.mxu0 0.0
    %3361 = vmatpush1.msra.mxu0 0.0
    %3362 = vmatprep.subr.mxu0 0.0
    %3363 = vmatpush1.msra.mxu0 0.0
    %3364 = vmatprep.subr.mxu0 0.0
    %3365 = vmatpush1.msra.mxu0 0.0
    %3366 = vmatprep.subr.mxu0 0.0
    %3367 = vmatpush1.msra.mxu0 0.0
    %3368 = vmatprep.subr.mxu0 0.0
    %3369 = vmatpush1.msra.mxu0 0.0
    %3370 = vmatprep.subr.mxu0 0.0
    %3371 = vmatpush1.msra.mxu0 0.0
    %3372 = vmatprep.subr.mxu0 0.0
    %3373 = vmatpush1.msra.mxu0 %v3337
    %3374 = vmatprep.subr.mxu0 0.0
    %3375 = vmatpush2.msra.mxu0 0.0
    %3376 = vmatprep.subr.mxu0 0.0
    %3377 = vmatpush2.msra.mxu0 0.0
    %3378 = vmatprep.subr.mxu0 0.0
    %3379 = vmatpush2.msra.mxu0 0.0
    %3380 = vmatprep.subr.mxu0 0.0
    %3381 = vmatpush2.msra.mxu0 0.0
    %3382 = vmatprep.subr.mxu0 0.0
    %3383 = vmatpush2.msra.mxu0 0.0
    %3384 = vmatprep.subr.mxu0 0.0
    %3385 = vmatpush2.msra.mxu0 0.0
    %3386 = vmatprep.subr.mxu0 0.0
    %3387 = vmatpush2.msra.mxu0 0.0
    %3388 = vmatprep.subr.mxu0 0.0
    %3389 = vmatpush2.msra.mxu0 0.0
    %3390 = vmatprep.subr.mxu0 0.0
    %3391 = vmatpush2.msra.mxu0 0.0
    %3392 = vmatprep.subr.mxu0 0.0
    %3393 = vmatpush2.msra.mxu0 0.0
    %3394 = vmatprep.subr.mxu0 0.0
    %3395 = vmatpush2.msra.mxu0 0.0
    %3396 = vmatprep.subr.mxu0 0.0
    %3397 = vmatpush2.msra.mxu0 0.0
    %3398 = vmatprep.subr.mxu0 0.0
    %3399 = vmatpush2.msra.mxu0 0.0
    %3400 = vmatprep.subr.mxu0 0.0
    %3401 = vmatpush2.msra.mxu0 0.0
    %3402 = vmatprep.subr.mxu0 0.0
    %3403 = vmatpush2.msra.mxu0 0.0
    %3404 = vmatprep.subr.mxu0 0.0
    %3405 = vmatpush2.msra.mxu0 0.0
    %3406 = vmatprep.mubr.f32.mxu0 0.0
    %3407 = vmatmul.mubr.f32.gmra.mxu0 %v3340
    %v3408 = vpop.f32.mrf.mxu0
    %v3409 = vadd.f32 0.0, %v3408
    %v3410 = vpop.f32.mrf.mxu0
    %3411 = vdwg.mxu0
    %v3413 = vsel %vm599, %v3333, 0
    %v3416 = vsel %vm599, %v3409, 0
    %3418 = vmatprep.subr.mxu0 0.0
    %3419 = vmatpush1.msra.mxu0 0.0
    %3420 = vmatprep.subr.mxu0 0.0
    %3421 = vmatpush1.msra.mxu0 0.0
    %3422 = vmatprep.subr.mxu0 0.0
    %3423 = vmatpush1.msra.mxu0 0.0
    %3424 = vmatprep.subr.mxu0 0.0
    %3425 = vmatpush1.msra.mxu0 0.0
    %3426 = vmatprep.subr.mxu0 0.0
    %3427 = vmatpush1.msra.mxu0 0.0
    %3428 = vmatprep.subr.mxu0 0.0
    %3429 = vmatpush1.msra.mxu0 0.0
    %3430 = vmatprep.subr.mxu0 0.0
    %3431 = vmatpush1.msra.mxu0 0.0
    %3432 = vmatprep.subr.mxu0 0.0
    %3433 = vmatpush1.msra.mxu0 0.0
    %3434 = vmatprep.subr.mxu0 0.0
    %3435 = vmatpush1.msra.mxu0 0.0
    %3436 = vmatprep.subr.mxu0 0.0
    %3437 = vmatpush1.msra.mxu0 0.0
    %3438 = vmatprep.subr.mxu0 0.0
    %3439 = vmatpush1.msra.mxu0 0.0
    %3440 = vmatprep.subr.mxu0 0.0
    %3441 = vmatpush1.msra.mxu0 0.0
    %3442 = vmatprep.subr.mxu0 0.0
    %3443 = vmatpush1.msra.mxu0 0.0
    %3444 = vmatprep.subr.mxu0 0.0
    %3445 = vmatpush1.msra.mxu0 0.0
    %3446 = vmatprep.subr.mxu0 0.0
    %3447 = vmatpush1.msra.mxu0 0.0
    %3448 = vmatprep.subr.mxu0 0.0
    %3449 = vmatpush1.msra.mxu0 %v597
    %3450 = vmatprep.subr.mxu0 0.0
    %3451 = vmatpush2.msra.mxu0 0.0
    %3452 = vmatprep.subr.mxu0 0.0
    %3453 = vmatpush2.msra.mxu0 0.0
    %3454 = vmatprep.subr.mxu0 0.0
    %3455 = vmatpush2.msra.mxu0 0.0
    %3456 = vmatprep.subr.mxu0 0.0
    %3457 = vmatpush2.msra.mxu0 0.0
    %3458 = vmatprep.subr.mxu0 0.0
    %3459 = vmatpush2.msra.mxu0 0.0
    %3460 = vmatprep.subr.mxu0 0.0
    %3461 = vmatpush2.msra.mxu0 0.0
    %3462 = vmatprep.subr.mxu0 0.0
    %3463 = vmatpush2.msra.mxu0 0.0
    %3464 = vmatprep.subr.mxu0 0.0
    %3465 = vmatpush2.msra.mxu0 0.0
    %3466 = vmatprep.subr.mxu0 0.0
    %3467 = vmatpush2.msra.mxu0 0.0
    %3468 = vmatprep.subr.mxu0 0.0
    %3469 = vmatpush2.msra.mxu0 0.0
    %3470 = vmatprep.subr.mxu0 0.0
    %3471 = vmatpush2.msra.mxu0 0.0
    %3472 = vmatprep.subr.mxu0 0.0
    %3473 = vmatpush2.msra.mxu0 0.0
    %3474 = vmatprep.subr.mxu0 0.0
    %3475 = vmatpush2.msra.mxu0 0.0
    %3476 = vmatprep.subr.mxu0 0.0
    %3477 = vmatpush2.msra.mxu0 0.0
    %3478 = vmatprep.subr.mxu0 0.0
    %3479 = vmatpush2.msra.mxu0 0.0
    %3480 = vmatprep.subr.mxu0 0.0
    %3481 = vmatpush2.msra.mxu0 0.0
    %3482 = vmatprep.mubr.f32.mxu0 0.0
    %3483 = vmatmul.mubr.f32.gmra.mxu0 %v3413
    %v3484 = vpop.f32.mrf.mxu0
    %v3485 = vadd.f32 0.0, %v3484
    %v3486 = vpop.f32.mrf.mxu0
    %3487 = vmatprep.mubr.f32.mxu0 0.0
    %3488 = vmatmul.mubr.f32.gmra.mxu0 %v3416
    %v3489 = vpop.f32.mrf.mxu0
    %v3490 = vadd.f32 0.0, %v3489
    %v3491 = vpop.f32.mrf.mxu0
    %3492 = vdwg.mxu0
    %v3493 = vadd.f32 %v3078, %v3485
    %v3494 = vadd.f32 %v3079, %v3490
    %3495 = vrot.lane.b32.xlu0 %v398, 72
    %v3496 = vpop.permute.xlu0 %3495
    %3497 = vrot.lane.b32.xlu0 %v488, 72
    %v3498 = vpop.permute.xlu0 %3497
    %v3499 = vsel %vm599, %v3496, 0
    %v3501 = vsel %vm599, %v3498, 0
    %3503 = vmatprep.subr.mxu0 0.0
    %3504 = vmatpush1.xpose.msra.mxu0 0.0
    %3505 = vmatprep.subr.mxu0 0.0
    %3506 = vmatpush1.xpose.msra.mxu0 0.0
    %3507 = vmatprep.subr.mxu0 0.0
    %3508 = vmatpush1.xpose.msra.mxu0 0.0
    %3509 = vmatprep.subr.mxu0 0.0
    %3510 = vmatpush1.xpose.msra.mxu0 0.0
    %3511 = vmatprep.subr.mxu0 0.0
    %3512 = vmatpush1.xpose.msra.mxu0 0.0
    %3513 = vmatprep.subr.mxu0 0.0
    %3514 = vmatpush1.xpose.msra.mxu0 0.0
    %3515 = vmatprep.subr.mxu0 0.0
    %3516 = vmatpush1.xpose.msra.mxu0 0.0
    %3517 = vmatprep.subr.mxu0 0.0
    %3518 = vmatpush1.xpose.msra.mxu0 0.0
    %3519 = vmatprep.subr.mxu0 0.0
    %3520 = vmatpush1.xpose.msra.mxu0 0.0
    %3521 = vmatprep.subr.mxu0 0.0
    %3522 = vmatpush1.xpose.msra.mxu0 0.0
    %3523 = vmatprep.subr.mxu0 0.0
    %3524 = vmatpush1.xpose.msra.mxu0 0.0
    %3525 = vmatprep.subr.mxu0 0.0
    %3526 = vmatpush1.xpose.msra.mxu0 0.0
    %3527 = vmatprep.subr.mxu0 0.0
    %3528 = vmatpush1.xpose.msra.mxu0 0.0
    %3529 = vmatprep.subr.mxu0 0.0
    %3530 = vmatpush1.xpose.msra.mxu0 0.0
    %3531 = vmatprep.subr.mxu0 0.0
    %3532 = vmatpush1.xpose.msra.mxu0 0.0
    %3533 = vmatprep.subr.mxu0 0.0
    %3534 = vmatpush1.xpose.msra.mxu0 %v3501
    %3535 = vmatprep.subr.mxu0 0.0
    %3536 = vmatpush2.xpose.msra.mxu0 0.0
    %3537 = vmatprep.subr.mxu0 0.0
    %3538 = vmatpush2.xpose.msra.mxu0 0.0
    %3539 = vmatprep.subr.mxu0 0.0
    %3540 = vmatpush2.xpose.msra.mxu0 0.0
    %3541 = vmatprep.subr.mxu0 0.0
    %3542 = vmatpush2.xpose.msra.mxu0 0.0
    %3543 = vmatprep.subr.mxu0 0.0
    %3544 = vmatpush2.xpose.msra.mxu0 0.0
    %3545 = vmatprep.subr.mxu0 0.0
    %3546 = vmatpush2.xpose.msra.mxu0 0.0
    %3547 = vmatprep.subr.mxu0 0.0
    %3548 = vmatpush2.xpose.msra.mxu0 0.0
    %3549 = vmatprep.subr.mxu0 0.0
    %3550 = vmatpush2.xpose.msra.mxu0 0.0
    %3551 = vmatprep.subr.mxu0 0.0
    %3552 = vmatpush2.xpose.msra.mxu0 0.0
    %3553 = vmatprep.subr.mxu0 0.0
    %3554 = vmatpush2.xpose.msra.mxu0 0.0
    %3555 = vmatprep.subr.mxu0 0.0
    %3556 = vmatpush2.xpose.msra.mxu0 0.0
    %3557 = vmatprep.subr.mxu0 0.0
    %3558 = vmatpush2.xpose.msra.mxu0 0.0
    %3559 = vmatprep.subr.mxu0 0.0
    %3560 = vmatpush2.xpose.msra.mxu0 0.0
    %3561 = vmatprep.subr.mxu0 0.0
    %3562 = vmatpush2.xpose.msra.mxu0 0.0
    %3563 = vmatprep.subr.mxu0 0.0
    %3564 = vmatpush2.xpose.msra.mxu0 0.0
    %3565 = vmatprep.subr.mxu0 0.0
    %3566 = vmatpush2.xpose.msra.mxu0 0.0
    %3567 = vmatprep.mubr.f32.mxu0 0.0
    %3568 = vmatmul.mubr.f32.gmra.mxu0 %v3499
    %v3569 = vpop.f32.mrf.mxu0
    %v3570 = vadd.f32 0.0, %v3569
    %v3571 = vpop.f32.mrf.mxu0
    %3572 = vdwg.mxu0
    %3573 = vrot.lane.b32.xlu0 %v403, 72
    %v3574 = vpop.permute.xlu0 %3573
    %3575 = vrot.lane.b32.xlu0 %v493, 72
    %v3576 = vpop.permute.xlu0 %3575
    %v3577 = vsel %vm599, %v3574, 0
    %v3579 = vsel %vm599, %v3576, 0
    %3581 = vmatprep.subr.mxu0 0.0
    %3582 = vmatpush1.xpose.msra.mxu0 0.0
    %3583 = vmatprep.subr.mxu0 0.0
    %3584 = vmatpush1.xpose.msra.mxu0 0.0
    %3585 = vmatprep.subr.mxu0 0.0
    %3586 = vmatpush1.xpose.msra.mxu0 0.0
    %3587 = vmatprep.subr.mxu0 0.0
    %3588 = vmatpush1.xpose.msra.mxu0 0.0
    %3589 = vmatprep.subr.mxu0 0.0
    %3590 = vmatpush1.xpose.msra.mxu0 0.0
    %3591 = vmatprep.subr.mxu0 0.0
    %3592 = vmatpush1.xpose.msra.mxu0 0.0
    %3593 = vmatprep.subr.mxu0 0.0
    %3594 = vmatpush1.xpose.msra.mxu0 0.0
    %3595 = vmatprep.subr.mxu0 0.0
    %3596 = vmatpush1.xpose.msra.mxu0 0.0
    %3597 = vmatprep.subr.mxu0 0.0
    %3598 = vmatpush1.xpose.msra.mxu0 0.0
    %3599 = vmatprep.subr.mxu0 0.0
    %3600 = vmatpush1.xpose.msra.mxu0 0.0
    %3601 = vmatprep.subr.mxu0 0.0
    %3602 = vmatpush1.xpose.msra.mxu0 0.0
    %3603 = vmatprep.subr.mxu0 0.0
    %3604 = vmatpush1.xpose.msra.mxu0 0.0
    %3605 = vmatprep.subr.mxu0 0.0
    %3606 = vmatpush1.xpose.msra.mxu0 0.0
    %3607 = vmatprep.subr.mxu0 0.0
    %3608 = vmatpush1.xpose.msra.mxu0 0.0
    %3609 = vmatprep.subr.mxu0 0.0
    %3610 = vmatpush1.xpose.msra.mxu0 0.0
    %3611 = vmatprep.subr.mxu0 0.0
    %3612 = vmatpush1.xpose.msra.mxu0 %v3579
    %3613 = vmatprep.subr.mxu0 0.0
    %3614 = vmatpush2.xpose.msra.mxu0 0.0
    %3615 = vmatprep.subr.mxu0 0.0
    %3616 = vmatpush2.xpose.msra.mxu0 0.0
    %3617 = vmatprep.subr.mxu0 0.0
    %3618 = vmatpush2.xpose.msra.mxu0 0.0
    %3619 = vmatprep.subr.mxu0 0.0
    %3620 = vmatpush2.xpose.msra.mxu0 0.0
    %3621 = vmatprep.subr.mxu0 0.0
    %3622 = vmatpush2.xpose.msra.mxu0 0.0
    %3623 = vmatprep.subr.mxu0 0.0
    %3624 = vmatpush2.xpose.msra.mxu0 0.0
    %3625 = vmatprep.subr.mxu0 0.0
    %3626 = vmatpush2.xpose.msra.mxu0 0.0
    %3627 = vmatprep.subr.mxu0 0.0
    %3628 = vmatpush2.xpose.msra.mxu0 0.0
    %3629 = vmatprep.subr.mxu0 0.0
    %3630 = vmatpush2.xpose.msra.mxu0 0.0
    %3631 = vmatprep.subr.mxu0 0.0
    %3632 = vmatpush2.xpose.msra.mxu0 0.0
    %3633 = vmatprep.subr.mxu0 0.0
    %3634 = vmatpush2.xpose.msra.mxu0 0.0
    %3635 = vmatprep.subr.mxu0 0.0
    %3636 = vmatpush2.xpose.msra.mxu0 0.0
    %3637 = vmatprep.subr.mxu0 0.0
    %3638 = vmatpush2.xpose.msra.mxu0 0.0
    %3639 = vmatprep.subr.mxu0 0.0
    %3640 = vmatpush2.xpose.msra.mxu0 0.0
    %3641 = vmatprep.subr.mxu0 0.0
    %3642 = vmatpush2.xpose.msra.mxu0 0.0
    %3643 = vmatprep.subr.mxu0 0.0
    %3644 = vmatpush2.xpose.msra.mxu0 0.0
    %3645 = vmatprep.mubr.f32.mxu0 0.0
    %3646 = vmatmul.mubr.f32.gmra.mxu0 %v3577
    %v3647 = vpop.f32.mrf.mxu0
    %v3648 = vadd.f32 0.0, %v3647
    %v3649 = vpop.f32.mrf.mxu0
    %3650 = vdwg.mxu0
    %v3651 = vsel %vm753, %v3570, -1e+30
    %v3652 = vsel %vm753, %v3648, -1e+30
    %v3653 = vsel %vm599, %v3651, -inf
    %3654 = vmax.xlane.f32.xlu0 %v3653
    %v3655 = vpop.xlane.xlu0 %3654
    %v3656 = vsel %vm599, %v3652, -inf
    %3657 = vmax.xlane.f32.xlu0 %v3656
    %v3658 = vpop.xlane.xlu0 %3657
    %v3659 = vsub.f32 %v3651, %v3655
    %v3660 = vsub.f32 %v3652, %v3658
    %v3661 = vmul.f32 %v3659, 1.442695
    %v3662 = vpow.pop %v3661
    %v3663 = vmul.f32 %v3660, 1.442695
    %v3664 = vpow.pop %v3663
    %v3665 = vsel %vm599, %v3662, 0.0
    %3666 = vadd.xlane.f32.xlu0 %v3665
    %v3667 = vpop.xlane.xlu0 %3666
    %v3668 = vsel %vm599, %v3664, 0.0
    %3669 = vadd.xlane.f32.xlu0 %v3668
    %v3670 = vpop.xlane.xlu0 %3669
    %v3671 = vrcp.pop %v3667
    %v3672 = vrcp.pop %v3670
    %v3673 = vmul.f32 %v3662, %v3671
    %v3674 = vmul.f32 %v3664, %v3672
    %3675 = vrot.lane.b32.xlu0 %v578, 72
    %v3676 = vpop.permute.xlu0 %3675
    %v3679 = vsel %vm599, %v3673, 0
    %3681 = vmatprep.subr.mxu0 0.0
    %3682 = vmatpush1.msra.mxu0 0.0
    %3683 = vmatprep.subr.mxu0 0.0
    %3684 = vmatpush1.msra.mxu0 0.0
    %3685 = vmatprep.subr.mxu0 0.0
    %3686 = vmatpush1.msra.mxu0 0.0
    %3687 = vmatprep.subr.mxu0 0.0
    %3688 = vmatpush1.msra.mxu0 0.0
    %3689 = vmatprep.subr.mxu0 0.0
    %3690 = vmatpush1.msra.mxu0 0.0
    %3691 = vmatprep.subr.mxu0 0.0
    %3692 = vmatpush1.msra.mxu0 0.0
    %3693 = vmatprep.subr.mxu0 0.0
    %3694 = vmatpush1.msra.mxu0 0.0
    %3695 = vmatprep.subr.mxu0 0.0
    %3696 = vmatpush1.msra.mxu0 0.0
    %3697 = vmatprep.subr.mxu0 0.0
    %3698 = vmatpush1.msra.mxu0 0.0
    %3699 = vmatprep.subr.mxu0 0.0
    %3700 = vmatpush1.msra.mxu0 0.0
    %3701 = vmatprep.subr.mxu0 0.0
    %3702 = vmatpush1.msra.mxu0 0.0
    %3703 = vmatprep.subr.mxu0 0.0
    %3704 = vmatpush1.msra.mxu0 0.0
    %3705 = vmatprep.subr.mxu0 0.0
    %3706 = vmatpush1.msra.mxu0 0.0
    %3707 = vmatprep.subr.mxu0 0.0
    %3708 = vmatpush1.msra.mxu0 0.0
    %3709 = vmatprep.subr.mxu0 0.0
    %3710 = vmatpush1.msra.mxu0 0.0
    %3711 = vmatprep.subr.mxu0 0.0
    %3712 = vmatpush1.msra.mxu0 %v3676
    %3713 = vmatprep.subr.mxu0 0.0
    %3714 = vmatpush2.msra.mxu0 0.0
    %3715 = vmatprep.subr.mxu0 0.0
    %3716 = vmatpush2.msra.mxu0 0.0
    %3717 = vmatprep.subr.mxu0 0.0
    %3718 = vmatpush2.msra.mxu0 0.0
    %3719 = vmatprep.subr.mxu0 0.0
    %3720 = vmatpush2.msra.mxu0 0.0
    %3721 = vmatprep.subr.mxu0 0.0
    %3722 = vmatpush2.msra.mxu0 0.0
    %3723 = vmatprep.subr.mxu0 0.0
    %3724 = vmatpush2.msra.mxu0 0.0
    %3725 = vmatprep.subr.mxu0 0.0
    %3726 = vmatpush2.msra.mxu0 0.0
    %3727 = vmatprep.subr.mxu0 0.0
    %3728 = vmatpush2.msra.mxu0 0.0
    %3729 = vmatprep.subr.mxu0 0.0
    %3730 = vmatpush2.msra.mxu0 0.0
    %3731 = vmatprep.subr.mxu0 0.0
    %3732 = vmatpush2.msra.mxu0 0.0
    %3733 = vmatprep.subr.mxu0 0.0
    %3734 = vmatpush2.msra.mxu0 0.0
    %3735 = vmatprep.subr.mxu0 0.0
    %3736 = vmatpush2.msra.mxu0 0.0
    %3737 = vmatprep.subr.mxu0 0.0
    %3738 = vmatpush2.msra.mxu0 0.0
    %3739 = vmatprep.subr.mxu0 0.0
    %3740 = vmatpush2.msra.mxu0 0.0
    %3741 = vmatprep.subr.mxu0 0.0
    %3742 = vmatpush2.msra.mxu0 0.0
    %3743 = vmatprep.subr.mxu0 0.0
    %3744 = vmatpush2.msra.mxu0 0.0
    %3745 = vmatprep.mubr.f32.mxu0 0.0
    %3746 = vmatmul.mubr.f32.gmra.mxu0 %v3679
    %v3747 = vpop.f32.mrf.mxu0
    %v3748 = vadd.f32 0.0, %v3747
    %v3749 = vpop.f32.mrf.mxu0
    %3750 = vdwg.mxu0
    %3751 = vrot.lane.b32.xlu0 %v583, 72
    %v3752 = vpop.permute.xlu0 %3751
    %v3755 = vsel %vm599, %v3674, 0
    %3757 = vmatprep.subr.mxu0 0.0
    %3758 = vmatpush1.msra.mxu0 0.0
    %3759 = vmatprep.subr.mxu0 0.0
    %3760 = vmatpush1.msra.mxu0 0.0
    %3761 = vmatprep.subr.mxu0 0.0
    %3762 = vmatpush1.msra.mxu0 0.0
    %3763 = vmatprep.subr.mxu0 0.0
    %3764 = vmatpush1.msra.mxu0 0.0
    %3765 = vmatprep.subr.mxu0 0.0
    %3766 = vmatpush1.msra.mxu0 0.0
    %3767 = vmatprep.subr.mxu0 0.0
    %3768 = vmatpush1.msra.mxu0 0.0
    %3769 = vmatprep.subr.mxu0 0.0
    %3770 = vmatpush1.msra.mxu0 0.0
    %3771 = vmatprep.subr.mxu0 0.0
    %3772 = vmatpush1.msra.mxu0 0.0
    %3773 = vmatprep.subr.mxu0 0.0
    %3774 = vmatpush1.msra.mxu0 0.0
    %3775 = vmatprep.subr.mxu0 0.0
    %3776 = vmatpush1.msra.mxu0 0.0
    %3777 = vmatprep.subr.mxu0 0.0
    %3778 = vmatpush1.msra.mxu0 0.0
    %3779 = vmatprep.subr.mxu0 0.0
    %3780 = vmatpush1.msra.mxu0 0.0
    %3781 = vmatprep.subr.mxu0 0.0
    %3782 = vmatpush1.msra.mxu0 0.0
    %3783 = vmatprep.subr.mxu0 0.0
    %3784 = vmatpush1.msra.mxu0 0.0
    %3785 = vmatprep.subr.mxu0 0.0
    %3786 = vmatpush1.msra.mxu0 0.0
    %3787 = vmatprep.subr.mxu0 0.0
    %3788 = vmatpush1.msra.mxu0 %v3752
    %3789 = vmatprep.subr.mxu0 0.0
    %3790 = vmatpush2.msra.mxu0 0.0
    %3791 = vmatprep.subr.mxu0 0.0
    %3792 = vmatpush2.msra.mxu0 0.0
    %3793 = vmatprep.subr.mxu0 0.0
    %3794 = vmatpush2.msra.mxu0 0.0
    %3795 = vmatprep.subr.mxu0 0.0
    %3796 = vmatpush2.msra.mxu0 0.0
    %3797 = vmatprep.subr.mxu0 0.0
    %3798 = vmatpush2.msra.mxu0 0.0
    %3799 = vmatprep.subr.mxu0 0.0
    %3800 = vmatpush2.msra.mxu0 0.0
    %3801 = vmatprep.subr.mxu0 0.0
    %3802 = vmatpush2.msra.mxu0 0.0
    %3803 = vmatprep.subr.mxu0 0.0
    %3804 = vmatpush2.msra.mxu0 0.0
    %3805 = vmatprep.subr.mxu0 0.0
    %3806 = vmatpush2.msra.mxu0 0.0
    %3807 = vmatprep.subr.mxu0 0.0
    %3808 = vmatpush2.msra.mxu0 0.0
    %3809 = vmatprep.subr.mxu0 0.0
    %3810 = vmatpush2.msra.mxu0 0.0
    %3811 = vmatprep.subr.mxu0 0.0
    %3812 = vmatpush2.msra.mxu0 0.0
    %3813 = vmatprep.subr.mxu0 0.0
    %3814 = vmatpush2.msra.mxu0 0.0
    %3815 = vmatprep.subr.mxu0 0.0
    %3816 = vmatpush2.msra.mxu0 0.0
    %3817 = vmatprep.subr.mxu0 0.0
    %3818 = vmatpush2.msra.mxu0 0.0
    %3819 = vmatprep.subr.mxu0 0.0
    %3820 = vmatpush2.msra.mxu0 0.0
    %3821 = vmatprep.mubr.f32.mxu0 0.0
    %3822 = vmatmul.mubr.f32.gmra.mxu0 %v3755
    %v3823 = vpop.f32.mrf.mxu0
    %v3824 = vadd.f32 0.0, %v3823
    %v3825 = vpop.f32.mrf.mxu0
    %3826 = vdwg.mxu0
    %v3828 = vsel %vm599, %v3748, 0
    %v3831 = vsel %vm599, %v3824, 0
    %3833 = vmatprep.subr.mxu0 0.0
    %3834 = vmatpush1.msra.mxu0 0.0
    %3835 = vmatprep.subr.mxu0 0.0
    %3836 = vmatpush1.msra.mxu0 0.0
    %3837 = vmatprep.subr.mxu0 0.0
    %3838 = vmatpush1.msra.mxu0 0.0
    %3839 = vmatprep.subr.mxu0 0.0
    %3840 = vmatpush1.msra.mxu0 0.0
    %3841 = vmatprep.subr.mxu0 0.0
    %3842 = vmatpush1.msra.mxu0 0.0
    %3843 = vmatprep.subr.mxu0 0.0
    %3844 = vmatpush1.msra.mxu0 0.0
    %3845 = vmatprep.subr.mxu0 0.0
    %3846 = vmatpush1.msra.mxu0 0.0
    %3847 = vmatprep.subr.mxu0 0.0
    %3848 = vmatpush1.msra.mxu0 0.0
    %3849 = vmatprep.subr.mxu0 0.0
    %3850 = vmatpush1.msra.mxu0 0.0
    %3851 = vmatprep.subr.mxu0 0.0
    %3852 = vmatpush1.msra.mxu0 0.0
    %3853 = vmatprep.subr.mxu0 0.0
    %3854 = vmatpush1.msra.mxu0 0.0
    %3855 = vmatprep.subr.mxu0 0.0
    %3856 = vmatpush1.msra.mxu0 0.0
    %3857 = vmatprep.subr.mxu0 0.0
    %3858 = vmatpush1.msra.mxu0 0.0
    %3859 = vmatprep.subr.mxu0 0.0
    %3860 = vmatpush1.msra.mxu0 0.0
    %3861 = vmatprep.subr.mxu0 0.0
    %3862 = vmatpush1.msra.mxu0 0.0
    %3863 = vmatprep.subr.mxu0 0.0
    %3864 = vmatpush1.msra.mxu0 %v598
    %3865 = vmatprep.subr.mxu0 0.0
    %3866 = vmatpush2.msra.mxu0 0.0
    %3867 = vmatprep.subr.mxu0 0.0
    %3868 = vmatpush2.msra.mxu0 0.0
    %3869 = vmatprep.subr.mxu0 0.0
    %3870 = vmatpush2.msra.mxu0 0.0
    %3871 = vmatprep.subr.mxu0 0.0
    %3872 = vmatpush2.msra.mxu0 0.0
    %3873 = vmatprep.subr.mxu0 0.0
    %3874 = vmatpush2.msra.mxu0 0.0
    %3875 = vmatprep.subr.mxu0 0.0
    %3876 = vmatpush2.msra.mxu0 0.0
    %3877 = vmatprep.subr.mxu0 0.0
    %3878 = vmatpush2.msra.mxu0 0.0
    %3879 = vmatprep.subr.mxu0 0.0
    %3880 = vmatpush2.msra.mxu0 0.0
    %3881 = vmatprep.subr.mxu0 0.0
    %3882 = vmatpush2.msra.mxu0 0.0
    %3883 = vmatprep.subr.mxu0 0.0
    %3884 = vmatpush2.msra.mxu0 0.0
    %3885 = vmatprep.subr.mxu0 0.0
    %3886 = vmatpush2.msra.mxu0 0.0
    %3887 = vmatprep.subr.mxu0 0.0
    %3888 = vmatpush2.msra.mxu0 0.0
    %3889 = vmatprep.subr.mxu0 0.0
    %3890 = vmatpush2.msra.mxu0 0.0
    %3891 = vmatprep.subr.mxu0 0.0
    %3892 = vmatpush2.msra.mxu0 0.0
    %3893 = vmatprep.subr.mxu0 0.0
    %3894 = vmatpush2.msra.mxu0 0.0
    %3895 = vmatprep.subr.mxu0 0.0
    %3896 = vmatpush2.msra.mxu0 0.0
    %3897 = vmatprep.mubr.f32.mxu0 0.0
    %3898 = vmatmul.mubr.f32.gmra.mxu0 %v3828
    %v3899 = vpop.f32.mrf.mxu0
    %v3900 = vadd.f32 0.0, %v3899
    %v3901 = vpop.f32.mrf.mxu0
    %3902 = vmatprep.mubr.f32.mxu0 0.0
    %3903 = vmatmul.mubr.f32.gmra.mxu0 %v3831
    %v3904 = vpop.f32.mrf.mxu0
    %v3905 = vadd.f32 0.0, %v3904
    %v3906 = vpop.f32.mrf.mxu0
    %3907 = vdwg.mxu0
    %v3908 = vadd.f32 %v3493, %v3900
    %v3909 = vadd.f32 %v3494, %v3905
    %v3910 = vld [vmem:[%s11] sm:$0x1]
    %v3912 = vlaneseq
    %v3913 = vshrl.u32 %v3912, 7
    %v3914 = vsub.s32 0, %v3913
    %v3915 = vrot.slane %v3910, %v3914
    %v3917 = vadd.f32 %v3908, %v3915
    %v3918 = vadd.f32 %v3909, %v3915
    %v3919 = vadd.f32 %v307, %v3917
    %v3920 = vadd.f32 %v308, %v3918
    %v3921 = vld [vmem:[%s16] sm:$0x1]
    %v3922 = vld [vmem:[%s17] sm:$0x1]
    %v3923 = vsel %vm324, %v3919, 0.0
    %3924 = vadd.xlane.f32.xlu0 %v3923
    %v3925 = vpop.xlane.xlu0 %3924
    %v3926 = vsel %vm324, %v3920, 0.0
    %3927 = vadd.xlane.f32.xlu0 %v3926
    %v3928 = vpop.xlane.xlu0 %3927
    %v3929 = vrcp.pop 64.0
    %v3930 = vmul.f32 %v3925, %v3929
    %v3931 = vmul.f32 %v3928, %v3929
    %v3932 = vsub.f32 %v3919, %v3930
    %v3933 = vsub.f32 %v3920, %v3931
    %v3934 = vmul.f32 %v3932, %v3932
    %v3935 = vmul.f32 %v3933, %v3933
    %v3936 = vsel %vm324, %v3934, 0.0
    %3937 = vadd.xlane.f32.xlu0 %v3936
    %v3938 = vpop.xlane.xlu0 %3937
    %v3939 = vsel %vm324, %v3935, 0.0
    %3940 = vadd.xlane.f32.xlu0 %v3939
    %v3941 = vpop.xlane.xlu0 %3940
    %v3942 = vmul.f32 %v3938, %v3929
    %v3943 = vmul.f32 %v3941, %v3929
    %v3944 = vadd.f32 %v3942, 1e-05
    %v3945 = vadd.f32 %v3943, 1e-05
    %v3946 = vrsqrt.pop %v3944
    %v3947 = vrsqrt.pop %v3945
    %v3948 = vmul.f32 %v3932, %v3946
    %v3949 = vmul.f32 %v3933, %v3947
    %v3951 = vlaneseq
    %v3952 = vshrl.u32 %v3951, 7
    %v3953 = vsub.s32 0, %v3952
    %v3954 = vrot.slane %v3921, %v3953
    %v3956 = vmul.f32 %v3948, %v3954
    %v3957 = vmul.f32 %v3949, %v3954
    %v3959 = vlaneseq
    %v3960 = vshrl.u32 %v3959, 7
    %v3961 = vsub.s32 0, %v3960
    %v3962 = vrot.slane %v3922, %v3961
    %v3964 = vadd.f32 %v3956, %v3962
    %v3965 = vadd.f32 %v3957, %v3962
    %v3966 = vld [vmem:[#allocation12] sm:$0xff]
    %v3967 = vld [vmem:[#allocation12 + $0x8] sm:$0xff]
    %v3968 = vld [vmem:[#allocation12 + $0x10] sm:$0xff]
    %v3969 = vld [vmem:[#allocation12 + $0x18] sm:$0xff]
    %v3970 = vld [vmem:[#allocation12 + $0x20] sm:$0xff]
    %v3971 = vld [vmem:[#allocation12 + $0x28] sm:$0xff]
    %v3972 = vld [vmem:[#allocation12 + $0x30] sm:$0xff]
    %v3973 = vld [vmem:[#allocation12 + $0x38] sm:$0xff]
    %v3974 = vld [vmem:[%s13] sm:$0x1]
    %v3976 = vlaneseq
    %v3977 = vshrl.u32 %v3976, 7
    %v3978 = vsub.s32 0, %v3977
    %v3979 = vrot.slane %v3974, %v3978
    %v3982 = vsel %vm324, %v3964, 0
    %v3985 = vsel %vm324, %v3965, 0
    %3987 = vmatprep.subr.mxu0 0.0
    %3988 = vmatpush1.msra.mxu0 0.0
    %3989 = vmatprep.subr.mxu0 0.0
    %3990 = vmatpush1.msra.mxu0 0.0
    %3991 = vmatprep.subr.mxu0 0.0
    %3992 = vmatpush1.msra.mxu0 0.0
    %3993 = vmatprep.subr.mxu0 0.0
    %3994 = vmatpush1.msra.mxu0 0.0
    %3995 = vmatprep.subr.mxu0 0.0
    %3996 = vmatpush1.msra.mxu0 0.0
    %3997 = vmatprep.subr.mxu0 0.0
    %3998 = vmatpush1.msra.mxu0 0.0
    %3999 = vmatprep.subr.mxu0 0.0
    %4000 = vmatpush1.msra.mxu0 0.0
    %4001 = vmatprep.subr.mxu0 0.0
    %4002 = vmatpush1.msra.mxu0 0.0
    %4003 = vmatprep.subr.mxu0 0.0
    %4004 = vmatpush1.msra.mxu0 %v3973
    %4005 = vmatprep.subr.mxu0 0.0
    %4006 = vmatpush1.msra.mxu0 %v3972
    %4007 = vmatprep.subr.mxu0 0.0
    %4008 = vmatpush1.msra.mxu0 %v3971
    %4009 = vmatprep.subr.mxu0 0.0
    %4010 = vmatpush1.msra.mxu0 %v3970
    %4011 = vmatprep.subr.mxu0 0.0
    %4012 = vmatpush1.msra.mxu0 %v3969
    %4013 = vmatprep.subr.mxu0 0.0
    %4014 = vmatpush1.msra.mxu0 %v3968
    %4015 = vmatprep.subr.mxu0 0.0
    %4016 = vmatpush1.msra.mxu0 %v3967
    %4017 = vmatprep.subr.mxu0 0.0
    %4018 = vmatpush1.msra.mxu0 %v3966
    %4019 = vmatprep.subr.mxu0 0.0
    %4020 = vmatpush2.msra.mxu0 0.0
    %4021 = vmatprep.subr.mxu0 0.0
    %4022 = vmatpush2.msra.mxu0 0.0
    %4023 = vmatprep.subr.mxu0 0.0
    %4024 = vmatpush2.msra.mxu0 0.0
    %4025 = vmatprep.subr.mxu0 0.0
    %4026 = vmatpush2.msra.mxu0 0.0
    %4027 = vmatprep.subr.mxu0 0.0
    %4028 = vmatpush2.msra.mxu0 0.0
    %4029 = vmatprep.subr.mxu0 0.0
    %4030 = vmatpush2.msra.mxu0 0.0
    %4031 = vmatprep.subr.mxu0 0.0
    %4032 = vmatpush2.msra.mxu0 0.0
    %4033 = vmatprep.subr.mxu0 0.0
    %4034 = vmatpush2.msra.mxu0 0.0
    %4035 = vmatprep.subr.mxu0 0.0
    %4036 = vmatpush2.msra.mxu0 0.0
    %4037 = vmatprep.subr.mxu0 0.0
    %4038 = vmatpush2.msra.mxu0 0.0
    %4039 = vmatprep.subr.mxu0 0.0
    %4040 = vmatpush2.msra.mxu0 0.0
    %4041 = vmatprep.subr.mxu0 0.0
    %4042 = vmatpush2.msra.mxu0 0.0
    %4043 = vmatprep.subr.mxu0 0.0
    %4044 = vmatpush2.msra.mxu0 0.0
    %4045 = vmatprep.subr.mxu0 0.0
    %4046 = vmatpush2.msra.mxu0 0.0
    %4047 = vmatprep.subr.mxu0 0.0
    %4048 = vmatpush2.msra.mxu0 0.0
    %4049 = vmatprep.subr.mxu0 0.0
    %4050 = vmatpush2.msra.mxu0 0.0
    %4051 = vmatprep.mubr.f32.mxu0 0.0
    %4052 = vmatmul.mubr.f32.gmra.mxu0 %v3982
    %v4053 = vpop.f32.mrf.mxu0
    %v4054 = vadd.f32 %v3979, %v4053
    %v4055 = vpop.f32.mrf.mxu0
    %4056 = vmatprep.mubr.f32.mxu0 0.0
    %4057 = vmatmul.mubr.f32.gmra.mxu0 %v3985
    %v4058 = vpop.f32.mrf.mxu0
    %v4059 = vadd.f32 %v3979, %v4058
    %v4060 = vpop.f32.mrf.mxu0
    %4061 = vdwg.mxu0
    %v4062 = vmul.f32 %v4054, 0.5
    %v4063 = vmul.f32 %v4059, 0.5
    %v4064 = vmul.f32 %v4054, 0.044715
    %v4065 = vmul.f32 %v4059, 0.044715
    %v4066 = vmul.f32 %v4064, %v4054
    %v4067 = vmul.f32 %v4065, %v4059
    %v4068 = vmul.f32 %v4066, %v4054
    %v4069 = vmul.f32 %v4067, %v4059
    %v4070 = vadd.f32 %v4054, %v4068
    %v4071 = vadd.f32 %v4059, %v4069
    %v4072 = vmul.f32 %v4070, 0.7978846
    %v4073 = vmul.f32 %v4071, 0.7978846
    %v4074 = vtanh.pop %v4072
    %v4075 = vtanh.pop %v4073
    %v4076 = vadd.f32 %v4074, 1.0
    %v4077 = vadd.f32 %v4075, 1.0
    %v4078 = vmul.f32 %v4062, %v4076
    %v4079 = vmul.f32 %v4063, %v4077
    %v4080 = vld [vmem:[#allocation14] sm:$0xff]
    %v4081 = vld [vmem:[#allocation14 + $0x8] sm:$0xff]
    %v4082 = vld [vmem:[#allocation14 + $0x10] sm:$0xff]
    %v4083 = vld [vmem:[#allocation14 + $0x18] sm:$0xff]
    %v4084 = vld [vmem:[#allocation14 + $0x20] sm:$0xff]
    %v4085 = vld [vmem:[#allocation14 + $0x28] sm:$0xff]
    %v4086 = vld [vmem:[#allocation14 + $0x30] sm:$0xff]
    %v4087 = vld [vmem:[#allocation14 + $0x38] sm:$0xff]
    %v4088 = vld [vmem:[%s15] sm:$0x1]
    %v4090 = vlaneseq
    %v4091 = vshrl.u32 %v4090, 7
    %v4092 = vsub.s32 0, %v4091
    %v4093 = vrot.slane %v4088, %v4092
    %v4096 = vsel %vm324, %v4078, 0
    %v4099 = vsel %vm324, %v4079, 0
    %4101 = vmatprep.subr.mxu0 0.0
    %4102 = vmatpush1.msra.mxu0 0.0
    %4103 = vmatprep.subr.mxu0 0.0
    %4104 = vmatpush1.msra.mxu0 0.0
    %4105 = vmatprep.subr.mxu0 0.0
    %4106 = vmatpush1.msra.mxu0 0.0
    %4107 = vmatprep.subr.mxu0 0.0
    %4108 = vmatpush1.msra.mxu0 0.0
    %4109 = vmatprep.subr.mxu0 0.0
    %4110 = vmatpush1.msra.mxu0 0.0
    %4111 = vmatprep.subr.mxu0 0.0
    %4112 = vmatpush1.msra.mxu0 0.0
    %4113 = vmatprep.subr.mxu0 0.0
    %4114 = vmatpush1.msra.mxu0 0.0
    %4115 = vmatprep.subr.mxu0 0.0
    %4116 = vmatpush1.msra.mxu0 0.0
    %4117 = vmatprep.subr.mxu0 0.0
    %4118 = vmatpush1.msra.mxu0 %v4087
    %4119 = vmatprep.subr.mxu0 0.0
    %4120 = vmatpush1.msra.mxu0 %v4086
    %4121 = vmatprep.subr.mxu0 0.0
    %4122 = vmatpush1.msra.mxu0 %v4085
    %4123 = vmatprep.subr.mxu0 0.0
    %4124 = vmatpush1.msra.mxu0 %v4084
    %4125 = vmatprep.subr.mxu0 0.0
    %4126 = vmatpush1.msra.mxu0 %v4083
    %4127 = vmatprep.subr.mxu0 0.0
    %4128 = vmatpush1.msra.mxu0 %v4082
    %4129 = vmatprep.subr.mxu0 0.0
    %4130 = vmatpush1.msra.mxu0 %v4081
    %4131 = vmatprep.subr.mxu0 0.0
    %4132 = vmatpush1.msra.mxu0 %v4080
    %4133 = vmatprep.subr.mxu0 0.0
    %4134 = vmatpush2.msra.mxu0 0.0
    %4135 = vmatprep.subr.mxu0 0.0
    %4136 = vmatpush2.msra.mxu0 0.0
    %4137 = vmatprep.subr.mxu0 0.0
    %4138 = vmatpush2.msra.mxu0 0.0
    %4139 = vmatprep.subr.mxu0 0.0
    %4140 = vmatpush2.msra.mxu0 0.0
    %4141 = vmatprep.subr.mxu0 0.0
    %4142 = vmatpush2.msra.mxu0 0.0
    %4143 = vmatprep.subr.mxu0 0.0
    %4144 = vmatpush2.msra.mxu0 0.0
    %4145 = vmatprep.subr.mxu0 0.0
    %4146 = vmatpush2.msra.mxu0 0.0
    %4147 = vmatprep.subr.mxu0 0.0
    %4148 = vmatpush2.msra.mxu0 0.0
    %4149 = vmatprep.subr.mxu0 0.0
    %4150 = vmatpush2.msra.mxu0 0.0
    %4151 = vmatprep.subr.mxu0 0.0
    %4152 = vmatpush2.msra.mxu0 0.0
    %4153 = vmatprep.subr.mxu0 0.0
    %4154 = vmatpush2.msra.mxu0 0.0
    %4155 = vmatprep.subr.mxu0 0.0
    %4156 = vmatpush2.msra.mxu0 0.0
    %4157 = vmatprep.subr.mxu0 0.0
    %4158 = vmatpush2.msra.mxu0 0.0
    %4159 = vmatprep.subr.mxu0 0.0
    %4160 = vmatpush2.msra.mxu0 0.0
    %4161 = vmatprep.subr.mxu0 0.0
    %4162 = vmatpush2.msra.mxu0 0.0
    %4163 = vmatprep.subr.mxu0 0.0
    %4164 = vmatpush2.msra.mxu0 0.0
    %4165 = vmatprep.mubr.f32.mxu0 0.0
    %4166 = vmatmul.mubr.f32.gmra.mxu0 %v4096
    %v4167 = vpop.f32.mrf.mxu0
    %v4168 = vadd.f32 %v4093, %v4167
    %v4169 = vpop.f32.mrf.mxu0
    %4170 = vmatprep.mubr.f32.mxu0 0.0
    %4171 = vmatmul.mubr.f32.gmra.mxu0 %v4099
    %v4172 = vpop.f32.mrf.mxu0
    %v4173 = vadd.f32 %v4093, %v4172
    %v4174 = vpop.f32.mrf.mxu0
    %4175 = vdwg.mxu0
    %v4176 = vadd.f32 %v3964, %v4168
    %v4177 = vadd.f32 %v3965, %v4173
    %v4178 = vld [vmem:[%s18] sm:$0x1]
    %v4179 = vld [vmem:[%s19] sm:$0x1]
    %v4180 = vsel %vm324, %v4176, 0.0
    %4181 = vadd.xlane.f32.xlu0 %v4180
    %v4182 = vpop.xlane.xlu0 %4181
    %v4183 = vsel %vm324, %v4177, 0.0
    %4184 = vadd.xlane.f32.xlu0 %v4183
    %v4185 = vpop.xlane.xlu0 %4184
    %v4186 = vmul.f32 %v4182, %v3929
    %v4187 = vmul.f32 %v4185, %v3929
    %v4188 = vsub.f32 %v4176, %v4186
    %v4189 = vsub.f32 %v4177, %v4187
    %v4190 = vmul.f32 %v4188, %v4188
    %v4191 = vmul.f32 %v4189, %v4189
    %v4192 = vsel %vm324, %v4190, 0.0
    %4193 = vadd.xlane.f32.xlu0 %v4192
    %v4194 = vpop.xlane.xlu0 %4193
    %v4195 = vsel %vm324, %v4191, 0.0
    %4196 = vadd.xlane.f32.xlu0 %v4195
    %v4197 = vpop.xlane.xlu0 %4196
    %v4198 = vmul.f32 %v4194, %v3929
    %v4199 = vmul.f32 %v4197, %v3929
    %v4200 = vadd.f32 %v4198, 1e-05
    %v4201 = vadd.f32 %v4199, 1e-05
    %v4202 = vrsqrt.pop %v4200
    %v4203 = vrsqrt.pop %v4201
    %v4204 = vmul.f32 %v4188, %v4202
    %v4205 = vmul.f32 %v4189, %v4203
    %v4207 = vlaneseq
    %v4208 = vshrl.u32 %v4207, 7
    %v4209 = vsub.s32 0, %v4208
    %v4210 = vrot.slane %v4178, %v4209
    %v4212 = vmul.f32 %v4204, %v4210
    %v4213 = vmul.f32 %v4205, %v4210
    %v4215 = vlaneseq
    %v4216 = vshrl.u32 %v4215, 7
    %v4217 = vsub.s32 0, %v4216
    %v4218 = vrot.slane %v4179, %v4217
    %v4220 = vadd.f32 %v4212, %v4218
    %v4221 = vadd.f32 %v4213, %v4218
    %v4222 = vsel %vm324, %v4220, 0.0
    %4223 = vadd.xlane.f32.xlu0 %v4222
    %v4224 = vpop.xlane.xlu0 %4223
    %v4225 = vsel %vm324, %v4221, 0.0
    %4226 = vadd.xlane.f32.xlu0 %v4225
    %v4227 = vpop.xlane.xlu0 %4226
    %v4228 = vmul.f32 %v4224, %v3929
    %v4229 = vmul.f32 %v4227, %v3929
    %v4230 = vsub.f32 %v4220, %v4228
    %v4231 = vsub.f32 %v4221, %v4229
    %v4232 = vmul.f32 %v4230, %v4230
    %v4233 = vmul.f32 %v4231, %v4231
    %v4234 = vsel %vm324, %v4232, 0.0
    %4235 = vadd.xlane.f32.xlu0 %v4234
    %v4236 = vpop.xlane.xlu0 %4235
    %v4237 = vsel %vm324, %v4233, 0.0
    %4238 = vadd.xlane.f32.xlu0 %v4237
    %v4239 = vpop.xlane.xlu0 %4238
    %v4240 = vmul.f32 %v4236, %v3929
    %v4241 = vmul.f32 %v4239, %v3929
    %v4242 = vadd.f32 %v4240, 1e-05
    %v4243 = vadd.f32 %v4241, 1e-05
    %v4244 = vrsqrt.pop %v4242
    %v4245 = vrsqrt.pop %v4243
    %v4246 = vmul.f32 %v4230, %v4244
    %v4247 = vmul.f32 %v4231, %v4245
    %v4248 = vld [vmem:[%s20] sm:$0x1]
    %v4250 = vlaneseq
    %v4251 = vshrl.u32 %v4250, 7
    %v4252 = vsub.s32 0, %v4251
    %v4253 = vrot.slane %v4248, %v4252
    %v4255 = vmul.f32 %v4246, %v4253
    %v4256 = vmul.f32 %v4247, %v4253
    %v4257 = vsel %vm324, %v4255, 0.0
    %4258 = vadd.xlane.f32.xlu0 %v4257
    %v4259 = vpop.xlane.xlu0 %4258
    %v4260 = vsel %vm324, %v4256, 0.0
    %4261 = vadd.xlane.f32.xlu0 %v4260
    %v4262 = vpop.xlane.xlu0 %4261
    %v4263 = vld [vmem:[#allocation2] sm:$0x1]
    %v4265 = vlaneseq
    %v4266 = vshrl.u32 %v4265, 7
    %v4267 = vsub.s32 0, %v4266
    %v4268 = vrot.slane %v4263, %v4267
    %4269 = vset.pattern.permute.xlu0 0
    %4270 = vperm.xlu0 %4269, %v4268
    %v4271 = vpop.permute.xlu0 %4270
    %v4273 = vadd.f32 %v4259, %v4271
    %v4274 = vadd.f32 %v4262, %v4271
    %v4277 = vlaneseq
    %v4278 = vshrl.u32 %v4277, 7
    %v4279 = vsub.s32 %v589, %v4278
    %v4280 = vrot.slane %v4273, %v4279
    %v4281 = vlaneseq
    %v4282 = vshrl.u32 %v4281, 7
    %v4283 = vsub.s32 %v589, %v4282
    %v4284 = vrot.slane %v4274, %v4283
    %vm4285 = vcmask 1041409
    %v4286 = vsel %vm4285, %v4284, %v4280
    %vm4288 = vcmask 58368
    %4289 = vst.msk [vmem:[#allocation15] sm:$0x3] %vm4288, %v4286
    // Predicated region
    $region118: #{run_fused.1} parent=1 // pred_check
      _
    $region119: #{run_fused.1} parent=1 // pred_check_branch
      %4291 = sbr.rel (0) target = $region121
    $region120: #{run_fused.1} parent=1 // pred_region
      %s4293 = ssub.s32 32, 32
      %4294 = vsyncadd [#allocation5], %s4293
      %s4296 = sshll.u32 [#allocation15], 4
      %s4297 = int_to_ptr.vmem [resolvable:$true] %s4296
      %4299 = dma.vmem_to_hbm [thread:$0]  %s4297, 32, %s22, [#allocation5]
    $region121: #{run_fused.1} parent=1 // pred_fallthru
      _
    // Predicated region
    $region122: #{run_fused.1} parent=1 // pred_check
      _
    $region123: #{run_fused.1} parent=1 // pred_check_branch
      %4301 = sbr.rel (0) target = $region125
    $region124: #{run_fused.1} parent=1 // pred_region
      %4302 = dma.done [#allocation5], 32
    $region125: #{run_fused.1} parent=1 // pred_fallthru
      _
    %4303 = vsyncpa [#allocation4], 1
    %4304 = vsyncpa [#allocation7], 1
    %4305 = vsyncpa [#allocation10], 1
    %4306 = vsyncpa [#allocation13], 1
    %4307 = vsyncpa [#allocation5], 1

</llo_original>
